<compile_context>
chip_gen: v7x
topology: tpu7x:2x2x1
jax: 0.10.0
libtpu: 0.0.40
codegen_flags: <defaults>
</compile_context>

<pallas_src>
import numpy as np
import jax
import jax.numpy as jnp
from jax import lax
from jax.experimental import pallas as pl
from jax.experimental.pallas import tpu as pltpu

C4, C5 = 128, 256          # fixed by the module (c4, c5)
BN_EPS = 1e-5


def _bilinear_matrix(lin, lout):
    """Row-interpolation matrix matching F.interpolate(mode='bilinear',
    align_corners=False) along one axis."""
    R = np.zeros((lout, lin), np.float32)
    scale = lin / lout
    for o in range(lout):
        src = max((o + 0.5) * scale - 0.5, 0.0)
        i0 = min(int(np.floor(src)), lin - 1)
        i1 = min(i0 + 1, lin - 1)
        f = src - i0
        R[o, i0] += 1.0 - f
        R[o, i1] += f
    return R


def _head_kernel(xc_ref, w3_ref, shift_ref, w1_ref, b1_ref, krw_ref, out_ref):
    """Fused semHead for one image, fully channel-major.

    xc_ref   : (1, 9*Cin, HW)   bf16   im2col'd padded input (tap-major, ci-minor)
    w3_ref   : (C5, 9*Cin)      bf16   3x3 conv weights with BN scale folded in
    shift_ref: (C5, 1)          f32    conv bias + BN shift (per output channel)
    w1_ref   : (ncls, C5)       bf16   1x1 conv weights (transposed)
    b1_ref   : (ncls, 1)        f32    1x1 conv bias
    krw_ref  : (HW, Ho*Wo)      bf16   kron(Rh, Rw)^T  (separable bilinear resize)
    out_ref  : (1, ncls, Ho*Wo) f32
    """
    # --- 3x3 conv as ONE K=1152 bf16 MXU matmul; result streams straight into
    # the BN-shift + ReLU epilogue (no f32 accumulator scratch, no += chain).
    acc = jnp.dot(w3_ref[...], xc_ref[0],
                  preferred_element_type=jnp.float32)                   # (C5, HW) f32
    act = jnp.maximum(acc + shift_ref[...], 0.0).astype(jnp.bfloat16)   # (C5, HW) bf16
    # --- 1x1 conv -> class logits (classes on sublanes, HW on lanes).
    logits = jnp.dot(w1_ref[...], act,
                     preferred_element_type=jnp.float32) + b1_ref[...]  # (ncls, HW) f32
    # --- bilinear resize (align_corners=False) as ONE bf16 matmul against the
    # precomputed kron(Rh, Rw)^T.  Output is already channel-major and
    # lane-dense (Ho*Wo = 1024 lanes) -> unmasked stores, no wrapper transpose.
    out_ref[0] = jnp.dot(logits.astype(jnp.bfloat16), krw_ref[...],
                         preferred_element_type=jnp.float32)            # (ncls, Ho*Wo) f32


def sem_head_forward(x4_nchw, params, x_hw):
    """x4_nchw: (N, 128, H, W) f32;  returns ((N, n_classes, Ho, Wo) f32, (Rh, Rw))."""
    N, Cin, H, W = x4_nchw.shape
    Ho, Wo = x_hw
    HW = H * W
    n_classes = params["w1"].shape[1]

    # ---- fold conv bias + BatchNorm(eval, running stats) into weights/shift.
    # TODO(synk): training-mode BN (batch statistics) is not implemented;
    # eval-mode running-stats semantics are used.
    scale = params["gamma"] / jnp.sqrt(params["var"] + BN_EPS)            # (C5,)
    shift = ((params["b3"] - params["mean"]) * scale + params["beta"])    # (C5,)
    shift = shift.reshape(C5, 1).astype(jnp.float32)
    # w3 is stored (9, Cin, C5), tap index = ky*3+kx.  Fold the BN scale into
    # the output channels, reshape to (9*Cin, C5) (row = tap*Cin + ci), then
    # transpose to channel-major (C5, 9*Cin) matching the im2col column order.
    w3t = (params["w3"] * scale[None, None, :]).reshape(9 * Cin, C5).T
    w3t = w3t.astype(jnp.bfloat16)                                        # (C5, 9*Cin)
    w1t = params["w1"].T.astype(jnp.bfloat16)                             # (ncls, C5)
    b1t = params["b1"].reshape(n_classes, 1).astype(jnp.float32)          # (ncls, 1)

    # ---- bilinear interpolation: separable matrices and their (small) kron.
    Rh = _bilinear_matrix(H, Ho)                                          # (Ho, H)
    Rw = _bilinear_matrix(W, Wo)                                          # (Wo, W)
    # kron(Rh, Rw)[(ho*Wo+wo), (h*W+w)] = Rh[ho,h]*Rw[wo,w]; transpose so the
    # kernel contracts HW on the standard lhs-dim1/rhs-dim0 path.
    krwT = jnp.asarray(np.kron(Rh, Rw).T).astype(jnp.bfloat16)            # (HW, Ho*Wo)

    # ---- im2col directly in native NCHW (no NHWC transpose), bf16 first so
    # the pad/slice/concat passes touch half the bytes.  Column order of the
    # concat = tap-major (ky*3+kx), ci-minor -> matches w3t above.
    xb = x4_nchw.astype(jnp.bfloat16)
    xp = jnp.pad(xb, ((0, 0), (0, 0), (1, 1), (1, 1)))                    # (N, Cin, H+2, W+2)
    taps = [xp[:, :, ky:ky + H, kx:kx + W].reshape(N, Cin, HW)
            for ky in range(3) for kx in range(3)]
    xcim = jnp.concatenate(taps, axis=1)                                  # (N, 9*Cin, HW) bf16

    cparams = pltpu.CompilerParams(
        dimension_semantics=("parallel",),       # batch elems independent (v7x: 2 TCs)
        vmem_limit_bytes=32 * 1024 * 1024)

    # NOTE: w3t/shift/w1t/b1t/krwT are grid-invariant; Pallas does not re-DMA
    # them across grid steps and their double-buffers total ~2.5 MiB, so
    # pipeline_mode=pl.Buffered(1) is deliberately not needed at these sizes.
    out = pl.pallas_call(
        _head_kernel,
        out_shape=jax.ShapeDtypeStruct((N, n_classes, Ho * Wo), jnp.float32),
        grid_spec=pltpu.PrefetchScalarGridSpec(
            num_scalar_prefetch=0,
            grid=(N,),
            in_specs=[
                pl.BlockSpec((1, 9 * Cin, HW), lambda n: (n, 0, 0)),
                pl.BlockSpec((C5, 9 * Cin), lambda n: (0, 0)),
                pl.BlockSpec((C5, 1), lambda n: (0, 0)),
                pl.BlockSpec((n_classes, C5), lambda n: (0, 0)),
                pl.BlockSpec((n_classes, 1), lambda n: (0, 0)),
                pl.BlockSpec((HW, Ho * Wo), lambda n: (0, 0)),
            ],
            out_specs=pl.BlockSpec((1, n_classes, Ho * Wo), lambda n: (n, 0, 0)),
        ),
        compiler_params=cparams,
    )(xcim, w3t, shift, w1t, b1t, krwT)

    # (N, ncls, Ho*Wo) -> (N, ncls, Ho, Wo): free row-major reshape, no transpose.
    out = out.reshape(N, n_classes, Ho, Wo)
    return out, (Rh, Rw)


def _reference(x4_nchw, params, Rh, Rw):
    """Pure-JAX f32 reference (NCHW) for correctness checking."""
    w3_oihw = params["w3"].reshape(3, 3, C4, C5).transpose(3, 2, 0, 1)
    y = lax.conv_general_dilated(
        x4_nchw.astype(jnp.float32), w3_oihw, (1, 1), "SAME",
        dimension_numbers=("NCHW", "OIHW", "NCHW"))
    y = y + params["b3"][None, :, None, None]
    y = (y - params["mean"][None, :, None, None]) / jnp.sqrt(
        params["var"][None, :, None, None] + BN_EPS)
    y = y * params["gamma"][None, :, None, None] + params["beta"][None, :, None, None]
    y = jnp.maximum(y, 0.0)
    y = jnp.einsum("nchw,co->nohw", y, params["w1"]) + params["b1"][None, :, None, None]
    y = jnp.einsum("ph,qw,nohw->nopq", jnp.asarray(Rh), jnp.asarray(Rw), y)
    return y


def init_params(key, n_classes):
    k = jax.random.split(key, 6)
    return {
        # 3x3 conv weights stored as (9, Cin, C5), tap index = ky*3 + kx
        "w3": (jax.random.normal(k[0], (9, C4, C5), jnp.float32) * 0.05),
        "b3": (jax.random.normal(k[1], (C5,), jnp.float32) * 0.05),
        # BatchNorm2d(C5) params + running stats (eval semantics)
        "gamma": jnp.ones((C5,), jnp.float32) + 0.1 * jax.random.normal(k[2], (C5,)),
        "beta": 0.1 * jax.random.normal(k[3], (C5,), jnp.float32),
        "mean": 0.1 * jax.random.normal(k[4], (C5,), jnp.float32),
        "var": jnp.ones((C5,), jnp.float32),
        # 1x1 conv: (C5, n_classes)
        "w1": (jax.random.normal(k[5], (C5, n_classes), jnp.float32) * 0.05),
        "b1": jnp.zeros((n_classes,), jnp.float32),
    }


if __name__ == "__main__":
    key = jax.random.PRNGKey(0)
    kx, kp = jax.random.split(key)

    N, H, W = 2, 16, 16
    n_classes = 133
    x_hw = (32, 32)

    x4 = jax.random.normal(kx, (N, C4, H, W), jnp.float32)
    params = init_params(kp, n_classes)

    out, (Rh, Rw) = sem_head_forward(x4, params, x_hw)
    out = jax.block_until_ready(out)
    assert out.shape == (N, n_classes, x_hw[0], x_hw[1])

    # Non-circular check of the bilinear matrices: for upscaling,
    # jax.image.resize('bilinear') uses the same half-pixel convention as
    # torch.nn.functional.interpolate(align_corners=False).
    timg = jax.random.normal(jax.random.PRNGKey(1), (H, W), jnp.float32)
    sep = jnp.asarray(Rh) @ timg @ jnp.asarray(Rw).T
    jref = jax.image.resize(timg, x_hw, method="bilinear")
    np.testing.assert_allclose(np.asarray(sep), np.asarray(jref), rtol=1e-5, atol=1e-5)

    # Full forward vs. the pure-JAX f32 reference.  Tolerance is deliberately
    # bf16-level: all three matmuls (3x3 conv, 1x1 conv, bilinear resize) use
    # bf16 MXU inputs with f32 accumulation.
    ref = jax.block_until_ready(_reference(x4, params, Rh, Rw))
    np.testing.assert_allclose(np.asarray(out), np.asarray(ref), rtol=2e-2, atol=5e-2)

    print("KERNEL_OK")
</pallas_src>

<mosaic_0001>
module attributes {stable_mosaic.version = 11 : i64} {
  func.func @_head_kernel(%arg0: i32, %arg1: memref<1x1152x256xbf16, #tpu.memory_space<vmem>>, %arg2: memref<256x1152xbf16, #tpu.memory_space<vmem>>, %arg3: memref<256x1xf32, #tpu.memory_space<vmem>>, %arg4: memref<133x256xbf16, #tpu.memory_space<vmem>>, %arg5: memref<133x1xf32, #tpu.memory_space<vmem>>, %arg6: memref<256x1024xbf16, #tpu.memory_space<vmem>>, %arg7: memref<1x133x1024xf32, #tpu.memory_space<vmem>>) attributes {dimension_semantics = [#tpu.dimension_semantics<parallel>], iteration_bounds = array<i64: 2>, scalar_prefetch = 0 : i64, scratch_operands = 0 : i64, tpu.core_type = #tpu.core_type<tc>, window_params = [{transform_indices = @transform_0, window_bounds = array<i64: 1, 1152, 256>}, {pipeline_mode = #tpu.pipeline_mode<synchronous>, transform_indices = @transform_1, window_bounds = array<i64: 256, 1152>}, {pipeline_mode = #tpu.pipeline_mode<synchronous>, transform_indices = @transform_2, window_bounds = array<i64: 256, 1>}, {pipeline_mode = #tpu.pipeline_mode<synchronous>, transform_indices = @transform_3, window_bounds = array<i64: 133, 256>}, {pipeline_mode = #tpu.pipeline_mode<synchronous>, transform_indices = @transform_4, window_bounds = array<i64: 133, 1>}, {pipeline_mode = #tpu.pipeline_mode<synchronous>, transform_indices = @transform_5, window_bounds = array<i64: 256, 1024>}, {transform_indices = @transform_6, window_bounds = array<i64: 1, 133, 1024>}]} {
    %c0 = arith.constant 0 : index
    %c0_0 = arith.constant 0 : index
    %0 = vector.load %arg2[%c0, %c0_0] : memref<256x1152xbf16, #tpu.memory_space<vmem>>, vector<256x1152xbf16>
    %c0_1 = arith.constant 0 : index
    %c0_2 = arith.constant 0 : index
    %c0_3 = arith.constant 0 : index
    %1 = vector.load %arg1[%c0_1, %c0_2, %c0_3] : memref<1x1152x256xbf16, #tpu.memory_space<vmem>>, vector<1x1152x256xbf16>
    %2 = vector.shape_cast %1 : vector<1x1152x256xbf16> to vector<1152x256xbf16>
    %cst = arith.constant dense<0.000000e+00> : vector<256x256xf32>
    %3 = tpu.matmul %0, %2, %cst {dimension_numbers = #tpu.dot_dimension_numbers<[1], [0], [0], [1], [0, 0, 1, 1], [], []>} : vector<256x1152xbf16>, vector<1152x256xbf16>, vector<256x256xf32> -> vector<256x256xf32>
    %c0_4 = arith.constant 0 : index
    %c0_5 = arith.constant 0 : index
    %4 = vector.load %arg3[%c0_4, %c0_5] : memref<256x1xf32, #tpu.memory_space<vmem>>, vector<256x1xf32>
    %5 = vector.broadcast %4 : vector<256x1xf32> to vector<256x256xf32>
    %6 = arith.addf %3, %5 : vector<256x256xf32>
    %cst_6 = arith.constant 0.000000e+00 : f32
    %7 = vector.broadcast %cst_6 : f32 to vector<256x256xf32>
    %8 = arith.maximumf %6, %7 : vector<256x256xf32>
    %9 = arith.truncf %8 : vector<256x256xf32> to vector<256x256xbf16>
    %c0_7 = arith.constant 0 : index
    %c0_8 = arith.constant 0 : index
    %10 = vector.load %arg4[%c0_7, %c0_8] : memref<133x256xbf16, #tpu.memory_space<vmem>>, vector<133x256xbf16>
    %cst_9 = arith.constant dense<0.000000e+00> : vector<133x256xf32>
    %11 = tpu.matmul %10, %9, %cst_9 {dimension_numbers = #tpu.dot_dimension_numbers<[1], [0], [0], [1], [0, 0, 1, 1], [], []>} : vector<133x256xbf16>, vector<256x256xbf16>, vector<133x256xf32> -> vector<133x256xf32>
    %c0_10 = arith.constant 0 : index
    %c0_11 = arith.constant 0 : index
    %12 = vector.load %arg5[%c0_10, %c0_11] : memref<133x1xf32, #tpu.memory_space<vmem>>, vector<133x1xf32>
    %13 = vector.broadcast %12 : vector<133x1xf32> to vector<133x256xf32>
    %14 = arith.addf %11, %13 : vector<133x256xf32>
    %15 = arith.truncf %14 : vector<133x256xf32> to vector<133x256xbf16>
    %c0_12 = arith.constant 0 : index
    %c0_13 = arith.constant 0 : index
    %16 = vector.load %arg6[%c0_12, %c0_13] : memref<256x1024xbf16, #tpu.memory_space<vmem>>, vector<256x1024xbf16>
    %cst_14 = arith.constant dense<0.000000e+00> : vector<133x1024xf32>
    %17 = tpu.matmul %15, %16, %cst_14 {dimension_numbers = #tpu.dot_dimension_numbers<[1], [0], [0], [1], [0, 0, 1, 1], [], []>} : vector<133x256xbf16>, vector<256x1024xbf16>, vector<133x1024xf32> -> vector<133x1024xf32>
    %c0_15 = arith.constant 0 : index
    %c0_16 = arith.constant 0 : index
    %c0_17 = arith.constant 0 : index
    %18 = vector.load %arg7[%c0_15, %c0_16, %c0_17] : memref<1x133x1024xf32, #tpu.memory_space<vmem>>, vector<1x133x1024xf32>
    %19 = vector.shape_cast %18 : vector<1x133x1024xf32> to vector<133x1024xf32>
    %20 = vector.shape_cast %17 : vector<133x1024xf32> to vector<1x133x1024xf32>
    tpu.vector_store %arg7[%c0_15, %c0_16, %c0_17], %20 {strides = array<i32>} : memref<1x133x1024xf32, #tpu.memory_space<vmem>>, vector<1x133x1024xf32>,
    return
  }
  func.func @transform_0(%arg0: i32) -> (i32, i32, i32) {
    %c0_i32 = arith.constant 0 : i32
    %c0_i32_0 = arith.constant 0 : i32
    %c0_i32_1 = arith.constant 0 : i32
    return %arg0, %c0_i32, %c0_i32_0 : i32, i32, i32
  }
  func.func @transform_1(%arg0: i32) -> (i32, i32) {
    %c0_i32 = arith.constant 0 : i32
    %c0_i32_0 = arith.constant 0 : i32
    %c0_i32_1 = arith.constant 0 : i32
    return %c0_i32, %c0_i32_0 : i32, i32
  }
  func.func @transform_2(%arg0: i32) -> (i32, i32) {
    %c0_i32 = arith.constant 0 : i32
    %c0_i32_0 = arith.constant 0 : i32
    %c0_i32_1 = arith.constant 0 : i32
    return %c0_i32, %c0_i32_0 : i32, i32
  }
  func.func @transform_3(%arg0: i32) -> (i32, i32) {
    %c0_i32 = arith.constant 0 : i32
    %c0_i32_0 = arith.constant 0 : i32
    %c0_i32_1 = arith.constant 0 : i32
    return %c0_i32, %c0_i32_0 : i32, i32
  }
  func.func @transform_4(%arg0: i32) -> (i32, i32) {
    %c0_i32 = arith.constant 0 : i32
    %c0_i32_0 = arith.constant 0 : i32
    %c0_i32_1 = arith.constant 0 : i32
    return %c0_i32, %c0_i32_0 : i32, i32
  }
  func.func @transform_5(%arg0: i32) -> (i32, i32) {
    %c0_i32 = arith.constant 0 : i32
    %c0_i32_0 = arith.constant 0 : i32
    %c0_i32_1 = arith.constant 0 : i32
    return %c0_i32, %c0_i32_0 : i32, i32
  }
  func.func @transform_6(%arg0: i32) -> (i32, i32, i32) {
    %c0_i32 = arith.constant 0 : i32
    %c0_i32_0 = arith.constant 0 : i32
    %c0_i32_1 = arith.constant 0 : i32
    return %arg0, %c0_i32, %c0_i32_0 : i32, i32, i32
  }
}

</mosaic_0001>

<llo_original>
// kernel: tpu_custom_call.1
$region0: #{tpu_custom_call.1}
  #allocation0 [shape = 'u32[]', space=smem, size = 0x4, offset = 0x4, fixed_abs, tag = 'smem constant byte address 0x4 - core index']
  #allocation1 [shape = 'u32[144,128]{1,0:T(1,128)}', space=vmem, size = 0x12000, scoped, tag = 'internal scratch']
  %s0 = inlined_call_operand.hbm [shape: bf16[2,1152,256], index: 0, kind: input, shape index: {}]
  %s1 = inlined_call_operand.hbm [shape: bf16[256,1152], index: 1, kind: input, shape index: {}]
  %s2 = inlined_call_operand.vmem [shape: f32[256,1], index: 2, kind: input, shape index: {}]
  %s3 = inlined_call_operand.hbm [shape: bf16[133,256], index: 3, kind: input, shape index: {}]
  %s4 = inlined_call_operand.vmem [shape: f32[133,1], index: 4, kind: input, shape index: {}]
  %s5 = inlined_call_operand.hbm [shape: bf16[256,1024], index: 5, kind: input, shape index: {}]
  %s6 = inlined_call_operand.vmem [shape: f32[2,133,1024], index: 6, kind: output, shape index: {}]
  %s7 = sld [smem:[#allocation0]]
  $region73: #{tpu_custom_call.1} parent=0
    _
  %s9 = ssub.s32 1, %s7
  %s10 = scalar_select 0, %s9, %s7
  $region1: #{tpu_custom_call.1} parent=0
    #allocation2 [shape = 'u8[1179648]{0}', space=vmem, size = 0x120000, scoped, tag = 'input window, operand 0']
    #allocation3 [shape = 's32[2]{0}', space=sflag, size = 0x8, scoped, tag = 'scoped memory for tpu_custom_call.1']
    #allocation4 [shape = 'u8[589824]{0}', space=vmem, size = 0x90000, scoped, tag = 'input window, operand 1, single buffered']
    #allocation5 [shape = 's32[1]{0}', space=sflag, size = 0x4, scoped, tag = 'scoped memory for tpu_custom_call.1']
    #allocation6 [shape = 'u8[69632]{0}', space=vmem, size = 0x11000, scoped, tag = 'input window, operand 3, single buffered']
    #allocation7 [shape = 'u8[524288]{0}', space=vmem, size = 0x80000, scoped, tag = 'input window, operand 5, single buffered']
    #allocation8 [shape = 's32[1]{0}', space=sflag, size = 0x4, scoped, tag = 'scoped memory for tpu_custom_call.1']
    %11 = vsyncpa [#allocation3], 0
    %s12 = scalar_lea.sflag [#allocation3], 1
    %13 = vsyncpa %s12, 0
    %14 = vsyncpa [#allocation5], 0
    %15 = vsyncpa [#allocation8], 0
    loop: start=0, step=1, limit=4
    $region2: #{tpu_custom_call.1} parent=1 // loop_pre_header
      _
    $region3: #{tpu_custom_call.1} parent=1 // loop_header
      %s17 = sphi 0, %s21
      %p18 = scmp.ge.s32.totalorder %s17, 4
      %s27 = sphi 0, %s29
      %s30 = sphi 0, %s27
      %s31 = sphi 0, %s30
      %s47 = sphi 0, %s31
      %s51 = sphi 0, %s51
      %s53 = sphi 0, %s51
      %s54 = sphi 0, %s53
      %s68 = sphi 0, %s54
      %s72 = sphi 0, %s72
      %s74 = sphi 0, %s72
      %s75 = sphi 0, %s74
      %s89 = sphi 0, %s75
      %s93 = sphi 0, %s93
      %s95 = sphi 0, %s93
      %s96 = sphi 0, %s95
      %s110 = sphi 0, %s96
      %s114 = sphi 0, %s114
      %s116 = sphi 0, %s114
      %s117 = sphi 0, %s116
      %s131 = sphi 0, %s117
      %s135 = sphi 0, %s135
      %s137 = sphi 0, %s135
      %s138 = sphi 0, %s137
      %s152 = sphi 0, %s138
      %s158 = sphi 0, %s160
      %s161 = sphi 0, %s158
      %s162 = sphi 0, %s161
      %s178 = sphi 0, %s162
    $region4: #{tpu_custom_call.1} parent=1 // loop_header_branch
      %20 = sbr.rel (%p18) target = $region8
    $region5: #{tpu_custom_call.1} parent=1 // loop_body
      %s22 = ssub.s32 %s17, 1
      %s23 = ssub.s32 %s17, 2
      %s24 = sadd.s32 %s17, 1
      %s25 = ssub.s32 %s17, %s24
      %p26 = scmp.eq.s32.totalorder %s25, 0
      %s28 = sadd.s32 %s27, 1
      %s29 = scalar_select %p26, %s27, %s28
      %p32 = pneg %p26
      %p33 = scmp.eq.s32.totalorder %s17, 1
      %p34 = por %p32, %p33
      %p35 = scmp.ne.s32.totalorder %s27, %s30
      %p36 = scmp.eq.s32.totalorder %s17, 0
      %p37 = por %p35, %p36
      %p38 = scmp.ne.s32.totalorder %s27, %s30
      %p39 = scmp.eq.s32.totalorder %s22, 1
      %p40 = por %p38, %p39
      %p41 = scmp.ne.s32.totalorder %s30, %s31
      %p42 = scmp.eq.s32.totalorder %s22, 0
      %p43 = por %p41, %p42
      %p44 = scmp.ne.s32.totalorder %s30, %s31
      %p45 = scmp.eq.s32.totalorder %s23, 1
      %p46 = por %p44, %p45
      %p48 = scmp.ne.s32.totalorder %s31, %s47
      %p49 = scmp.eq.s32.totalorder %s23, 0
      %p50 = por %p48, %p49
      %s52 = sadd.s32 %s51, 1
      %p55 = scmp.eq.s32.totalorder %s17, 1
      %p56 = scmp.ne.s32.totalorder %s51, %s53
      %p57 = scmp.eq.s32.totalorder %s17, 0
      %p58 = por %p56, %p57
      %p59 = scmp.ne.s32.totalorder %s51, %s53
      %p60 = scmp.eq.s32.totalorder %s22, 1
      %p61 = por %p59, %p60
      %p62 = scmp.ne.s32.totalorder %s53, %s54
      %p63 = scmp.eq.s32.totalorder %s22, 0
      %p64 = por %p62, %p63
      %p65 = scmp.ne.s32.totalorder %s53, %s54
      %p66 = scmp.eq.s32.totalorder %s23, 1
      %p67 = por %p65, %p66
      %p69 = scmp.ne.s32.totalorder %s54, %s68
      %p70 = scmp.eq.s32.totalorder %s23, 0
      %p71 = por %p69, %p70
      %s73 = sadd.s32 %s72, 1
      %p76 = scmp.eq.s32.totalorder %s17, 1
      %p77 = scmp.ne.s32.totalorder %s72, %s74
      %p78 = scmp.eq.s32.totalorder %s17, 0
      %p79 = por %p77, %p78
      %p80 = scmp.ne.s32.totalorder %s72, %s74
      %p81 = scmp.eq.s32.totalorder %s22, 1
      %p82 = por %p80, %p81
      %p83 = scmp.ne.s32.totalorder %s74, %s75
      %p84 = scmp.eq.s32.totalorder %s22, 0
      %p85 = por %p83, %p84
      %p86 = scmp.ne.s32.totalorder %s74, %s75
      %p87 = scmp.eq.s32.totalorder %s23, 1
      %p88 = por %p86, %p87
      %p90 = scmp.ne.s32.totalorder %s75, %s89
      %p91 = scmp.eq.s32.totalorder %s23, 0
      %p92 = por %p90, %p91
      %s94 = sadd.s32 %s93, 1
      %p97 = scmp.eq.s32.totalorder %s17, 1
      %p98 = scmp.ne.s32.totalorder %s93, %s95
      %p99 = scmp.eq.s32.totalorder %s17, 0
      %p100 = por %p98, %p99
      %p101 = scmp.ne.s32.totalorder %s93, %s95
      %p102 = scmp.eq.s32.totalorder %s22, 1
      %p103 = por %p101, %p102
      %p104 = scmp.ne.s32.totalorder %s95, %s96
      %p105 = scmp.eq.s32.totalorder %s22, 0
      %p106 = por %p104, %p105
      %p107 = scmp.ne.s32.totalorder %s95, %s96
      %p108 = scmp.eq.s32.totalorder %s23, 1
      %p109 = por %p107, %p108
      %p111 = scmp.ne.s32.totalorder %s96, %s110
      %p112 = scmp.eq.s32.totalorder %s23, 0
      %p113 = por %p111, %p112
      %s115 = sadd.s32 %s114, 1
      %p118 = scmp.eq.s32.totalorder %s17, 1
      %p119 = scmp.ne.s32.totalorder %s114, %s116
      %p120 = scmp.eq.s32.totalorder %s17, 0
      %p121 = por %p119, %p120
      %p122 = scmp.ne.s32.totalorder %s114, %s116
      %p123 = scmp.eq.s32.totalorder %s22, 1
      %p124 = por %p122, %p123
      %p125 = scmp.ne.s32.totalorder %s116, %s117
      %p126 = scmp.eq.s32.totalorder %s22, 0
      %p127 = por %p125, %p126
      %p128 = scmp.ne.s32.totalorder %s116, %s117
      %p129 = scmp.eq.s32.totalorder %s23, 1
      %p130 = por %p128, %p129
      %p132 = scmp.ne.s32.totalorder %s117, %s131
      %p133 = scmp.eq.s32.totalorder %s23, 0
      %p134 = por %p132, %p133
      %s136 = sadd.s32 %s135, 1
      %p139 = scmp.eq.s32.totalorder %s17, 1
      %p140 = scmp.ne.s32.totalorder %s135, %s137
      %p141 = scmp.eq.s32.totalorder %s17, 0
      %p142 = por %p140, %p141
      %p143 = scmp.ne.s32.totalorder %s135, %s137
      %p144 = scmp.eq.s32.totalorder %s22, 1
      %p145 = por %p143, %p144
      %p146 = scmp.ne.s32.totalorder %s137, %s138
      %p147 = scmp.eq.s32.totalorder %s22, 0
      %p148 = por %p146, %p147
      %p149 = scmp.ne.s32.totalorder %s137, %s138
      %p150 = scmp.eq.s32.totalorder %s23, 1
      %p151 = por %p149, %p150
      %p153 = scmp.ne.s32.totalorder %s138, %s152
      %p154 = scmp.eq.s32.totalorder %s23, 0
      %p155 = por %p153, %p154
      %s156 = ssub.s32 %s17, %s24
      %p157 = scmp.eq.s32.totalorder %s156, 0
      %s159 = sadd.s32 %s158, 1
      %s160 = scalar_select %p157, %s158, %s159
      %p163 = pneg %p157
      %p164 = scmp.eq.s32.totalorder %s17, 1
      %p165 = por %p163, %p164
      %p166 = scmp.ne.s32.totalorder %s158, %s161
      %p167 = scmp.eq.s32.totalorder %s17, 0
      %p168 = por %p166, %p167
      %p169 = scmp.ne.s32.totalorder %s158, %s161
      %p170 = scmp.eq.s32.totalorder %s22, 1
      %p171 = por %p169, %p170
      %p172 = scmp.ne.s32.totalorder %s161, %s162
      %p173 = scmp.eq.s32.totalorder %s22, 0
      %p174 = por %p172, %p173
      %p175 = scmp.ne.s32.totalorder %s161, %s162
      %p176 = scmp.eq.s32.totalorder %s23, 1
      %p177 = por %p175, %p176
      %p179 = scmp.ne.s32.totalorder %s162, %s178
      %p180 = scmp.eq.s32.totalorder %s23, 0
      %p181 = por %p179, %p180
      %p182 = scmp.le.s32.totalorder 1, %s17
      %p183 = scmp.lt.s32.totalorder %s17, 3
      %p184 = pnand %p182, %p183
      %p185 = pneg %p184
      // Predicated region
      $region9: #{tpu_custom_call.1} parent=5 // pred_check
        _
      $region10: #{tpu_custom_call.1} parent=5 // pred_check_branch
        %187 = sbr.rel (%p184) target = $region12
      $region11: #{tpu_custom_call.1} parent=5 // pred_region
        %s188 = ssub.s32 %s17, 1
        // Predicated region
        $region13: #{tpu_custom_call.1} parent=11 // pred_check
          %p189 = pneg %p64
        $region14: #{tpu_custom_call.1} parent=11 // pred_check_branch
          %191 = sbr.rel (%p189) target = $region16
        $region15: #{tpu_custom_call.1} parent=11 // pred_region
          %s193 = ssub.s32 18432, 18432
          %194 = vsyncadd [#allocation5], %s193
          %s195 = sshll.u32 [#allocation4], 4
          %s196 = int_to_ptr.vmem [resolvable:$true] %s195
          %201 = dma.hbm_to_vmem [thread:$0]  %s1, 18432, %s196, [#allocation5], 576, 576, 36
        $region16: #{tpu_custom_call.1} parent=11 // pred_fallthru
          _
        // Predicated region
        $region17: #{tpu_custom_call.1} parent=11 // pred_check
          %p202 = pneg %p85
        $region18: #{tpu_custom_call.1} parent=11 // pred_check_branch
          %204 = sbr.rel (%p202) target = $region20
        $region19: #{tpu_custom_call.1} parent=11 // pred_region
          _
        $region20: #{tpu_custom_call.1} parent=11 // pred_fallthru
          _
        // Predicated region
        $region21: #{tpu_custom_call.1} parent=11 // pred_check
          %p205 = pneg %p106
        $region22: #{tpu_custom_call.1} parent=11 // pred_check_branch
          %207 = sbr.rel (%p205) target = $region24
        $region23: #{tpu_custom_call.1} parent=11 // pred_region
          %s209 = ssub.s32 2176, 2176
          %210 = vsyncadd [#allocation5], %s209
          %s211 = sshll.u32 [#allocation6], 4
          %s212 = int_to_ptr.vmem [resolvable:$true] %s211
          %217 = dma.hbm_to_vmem [thread:$0]  %s3, 2176, %s212, [#allocation5], 128, 128, 8
        $region24: #{tpu_custom_call.1} parent=11 // pred_fallthru
          _
        // Predicated region
        $region25: #{tpu_custom_call.1} parent=11 // pred_check
          %p218 = pneg %p127
        $region26: #{tpu_custom_call.1} parent=11 // pred_check_branch
          %220 = sbr.rel (%p218) target = $region28
        $region27: #{tpu_custom_call.1} parent=11 // pred_region
          _
        $region28: #{tpu_custom_call.1} parent=11 // pred_fallthru
          _
        // Predicated region
        $region29: #{tpu_custom_call.1} parent=11 // pred_check
          %p221 = pneg %p148
        $region30: #{tpu_custom_call.1} parent=11 // pred_check_branch
          %223 = sbr.rel (%p221) target = $region32
        $region31: #{tpu_custom_call.1} parent=11 // pred_region
          %s225 = ssub.s32 16384, 16384
          %226 = vsyncadd [#allocation8], %s225
          %s227 = sshll.u32 [#allocation7], 4
          %s228 = int_to_ptr.vmem [resolvable:$true] %s227
          %233 = dma.hbm_to_vmem [thread:$0]  %s5, 16384, %s228, [#allocation8], 512, 512, 32
        $region32: #{tpu_custom_call.1} parent=11 // pred_fallthru
          _
      $region12: #{tpu_custom_call.1} parent=5 // pred_fallthru
        _
      %p234 = scmp.lt.s32.totalorder %s17, 2
      // Predicated region
      $region33: #{tpu_custom_call.1} parent=5 // pred_check
        %p235 = pneg %p234
      $region34: #{tpu_custom_call.1} parent=5 // pred_check_branch
        %237 = sbr.rel (%p235) target = $region36
      $region35: #{tpu_custom_call.1} parent=5 // pred_region
        // Predicated region
        $region37: #{tpu_custom_call.1} parent=35 // pred_check
          %p238 = pneg %p37
        $region38: #{tpu_custom_call.1} parent=35 // pred_check_branch
          %240 = sbr.rel (%p238) target = $region40
        $region39: #{tpu_custom_call.1} parent=35 // pred_region
          %s241 = sand.u32 %s27, 1
          %s242 = scalar_lea.sflag [#allocation3], %s241
          %s243 = sand.u32 %s27, 1
          %s244 = smul.addr %s243, 1152
          %s245 = scalar_lea.vmem [#allocation2], %s244
          %s247 = ssub.s32 18432, 18432
          %248 = vsyncadd %s242, %s247
          %s249 = smul.addr %s17, 288
          %s250 = smul.addr %s249, 64
          %s251 = scalar_lea.hbm %s0, %s250
          %s252 = sshll.u32 %s245, 4
          %s253 = int_to_ptr.vmem [resolvable:$true] %s252
          %258 = dma.hbm_to_vmem [thread:$0]  %s251, 18432, %s253, %s242, 128, 128, 8
        $region40: #{tpu_custom_call.1} parent=35 // pred_fallthru
          _
      $region36: #{tpu_custom_call.1} parent=5 // pred_fallthru
        _
      %p259 = scmp.le.s32.totalorder 1, %s17
      %p260 = scmp.lt.s32.totalorder %s17, 3
      %p261 = pnand %p259, %p260
      %p262 = pneg %p261
      // Predicated region
      $region41: #{tpu_custom_call.1} parent=5 // pred_check
        _
      $region42: #{tpu_custom_call.1} parent=5 // pred_check_branch
        %264 = sbr.rel (%p261) target = $region44
      $region43: #{tpu_custom_call.1} parent=5 // pred_region
        %s265 = ssub.s32 %s17, 1
        %s266 = sand.u32 %s30, 1
        %s267 = scalar_lea.sflag [#allocation3], %s266
        %s268 = sand.u32 %s30, 1
        %s269 = smul.addr %s268, 1152
        %s270 = scalar_lea.vmem [#allocation2], %s269
        // Predicated region
        $region45: #{tpu_custom_call.1} parent=43 // pred_check
          %p271 = pneg %p43
        $region46: #{tpu_custom_call.1} parent=43 // pred_check_branch
          %273 = sbr.rel (%p271) target = $region48
        $region47: #{tpu_custom_call.1} parent=43 // pred_region
          %274 = dma.done %s267, 18432
        $region48: #{tpu_custom_call.1} parent=43 // pred_fallthru
          _
        // Predicated region
        $region49: #{tpu_custom_call.1} parent=43 // pred_check
          %p275 = pneg %p64
        $region50: #{tpu_custom_call.1} parent=43 // pred_check_branch
          %277 = sbr.rel (%p275) target = $region52
        $region51: #{tpu_custom_call.1} parent=43 // pred_region
          %278 = dma.done [#allocation5], 18432
        $region52: #{tpu_custom_call.1} parent=43 // pred_fallthru
          _
        // Predicated region
        $region53: #{tpu_custom_call.1} parent=43 // pred_check
          %p279 = pneg %p106
        $region54: #{tpu_custom_call.1} parent=43 // pred_check_branch
          %281 = sbr.rel (%p279) target = $region56
        $region55: #{tpu_custom_call.1} parent=43 // pred_region
          %282 = dma.done [#allocation5], 2176
        $region56: #{tpu_custom_call.1} parent=43 // pred_fallthru
          _
        // Predicated region
        $region57: #{tpu_custom_call.1} parent=43 // pred_check
          %p283 = pneg %p148
        $region58: #{tpu_custom_call.1} parent=43 // pred_check_branch
          %285 = sbr.rel (%p283) target = $region60
        $region59: #{tpu_custom_call.1} parent=43 // pred_region
          %286 = dma.done [#allocation8], 16384
        $region60: #{tpu_custom_call.1} parent=43 // pred_fallthru
          _
        %s287 = sand.u32 %s30, 1
        %s288 = scalar_lea.sflag [#allocation3], %s287
        %s289 = sand.u32 %s30, 1
        %s290 = smul.addr %s289, 1152
        %s291 = scalar_lea.vmem [#allocation2], %s290
        %p292 = pneg %p43
        %p293 = pneg %p40
        %p294 = pneg %p64
        %p295 = pneg %p61
        %p296 = pneg %p85
        %p297 = pneg %p82
        %p298 = pneg %p106
        %p299 = pneg %p103
        %p300 = pneg %p127
        %p301 = pneg %p124
        %p302 = pneg %p148
        %p303 = pneg %p145
        %p304 = pneg %p174
        %p305 = pneg %p171
        %p306 = scmp.lt.s32.totalorder %s22, 1
        %s307 = scalar_select %p306, %s22, 1
        %s308 = smul.addr %s307, 136
        %s309 = smul.addr %s308, 8
        %s310 = scalar_lea.vmem %s6, %s309
        %p311 = scmp.lt.s32.totalorder %s22, 1
        %s312 = scalar_select %p311, %s22, 1
        %s313 = smul.addr %s312, 136
        %s314 = smul.addr %s313, 8
        %s315 = scalar_lea.vmem %s6, %s314
        %v317 = vld [vmem:[#allocation4] sm:$0xff]
        %v318 = vld [vmem:[#allocation4 + $0x8] sm:$0xff]
        %v319 = vld [vmem:[#allocation4 + $0x10] sm:$0xff]
        %v320 = vld [vmem:[#allocation4 + $0x18] sm:$0xff]
        %v321 = vld [vmem:[#allocation4 + $0x20] sm:$0xf]
        %v322 = vld [vmem:[#allocation4 + $0x24] sm:$0xff]
        %v323 = vld [vmem:[#allocation4 + $0x2c] sm:$0xff]
        %v324 = vld [vmem:[#allocation4 + $0x34] sm:$0xff]
        %v325 = vld [vmem:[#allocation4 + $0x3c] sm:$0xff]
        %v326 = vld [vmem:[#allocation4 + $0x44] sm:$0xf]
        %v327 = vld [vmem:[#allocation4 + $0x48] sm:$0xff]
        %v328 = vld [vmem:[#allocation4 + $0x50] sm:$0xff]
        %v329 = vld [vmem:[#allocation4 + $0x58] sm:$0xff]
        %v330 = vld [vmem:[#allocation4 + $0x60] sm:$0xff]
        %v331 = vld [vmem:[#allocation4 + $0x68] sm:$0xf]
        %v332 = vld [vmem:[#allocation4 + $0x6c] sm:$0xff]
        %v333 = vld [vmem:[#allocation4 + $0x74] sm:$0xff]
        %v334 = vld [vmem:[#allocation4 + $0x7c] sm:$0xff]
        %v335 = vld [vmem:[#allocation4 + $0x84] sm:$0xff]
        %v336 = vld [vmem:[#allocation4 + $0x8c] sm:$0xf]
        %v337 = vld [vmem:[#allocation4 + $0x90] sm:$0xff]
        %v338 = vld [vmem:[#allocation4 + $0x98] sm:$0xff]
        %v339 = vld [vmem:[#allocation4 + $0xa0] sm:$0xff]
        %v340 = vld [vmem:[#allocation4 + $0xa8] sm:$0xff]
        %v341 = vld [vmem:[#allocation4 + $0xb0] sm:$0xf]
        %v342 = vld [vmem:[#allocation4 + $0xb4] sm:$0xff]
        %v343 = vld [vmem:[#allocation4 + $0xbc] sm:$0xff]
        %v344 = vld [vmem:[#allocation4 + $0xc4] sm:$0xff]
        %v345 = vld [vmem:[#allocation4 + $0xcc] sm:$0xff]
        %v346 = vld [vmem:[#allocation4 + $0xd4] sm:$0xf]
        %v347 = vld [vmem:[#allocation4 + $0xd8] sm:$0xff]
        %v348 = vld [vmem:[#allocation4 + $0xe0] sm:$0xff]
        %v349 = vld [vmem:[#allocation4 + $0xe8] sm:$0xff]
        %v350 = vld [vmem:[#allocation4 + $0xf0] sm:$0xff]
        %v351 = vld [vmem:[#allocation4 + $0xf8] sm:$0xf]
        %v352 = vld [vmem:[#allocation4 + $0xfc] sm:$0xff]
        %v353 = vld [vmem:[#allocation4 + $0x104] sm:$0xff]
        %v354 = vld [vmem:[#allocation4 + $0x10c] sm:$0xff]
        %v355 = vld [vmem:[#allocation4 + $0x114] sm:$0xff]
        %v356 = vld [vmem:[#allocation4 + $0x11c] sm:$0xf]
        %v357 = vld [vmem:[#allocation4 + $0x120] sm:$0xff]
        %v358 = vld [vmem:[#allocation4 + $0x128] sm:$0xff]
        %v359 = vld [vmem:[#allocation4 + $0x130] sm:$0xff]
        %v360 = vld [vmem:[#allocation4 + $0x138] sm:$0xff]
        %v361 = vld [vmem:[#allocation4 + $0x140] sm:$0xf]
        %v362 = vld [vmem:[#allocation4 + $0x144] sm:$0xff]
        %v363 = vld [vmem:[#allocation4 + $0x14c] sm:$0xff]
        %v364 = vld [vmem:[#allocation4 + $0x154] sm:$0xff]
        %v365 = vld [vmem:[#allocation4 + $0x15c] sm:$0xff]
        %v366 = vld [vmem:[#allocation4 + $0x164] sm:$0xf]
        %v367 = vld [vmem:[#allocation4 + $0x168] sm:$0xff]
        %v368 = vld [vmem:[#allocation4 + $0x170] sm:$0xff]
        %v369 = vld [vmem:[#allocation4 + $0x178] sm:$0xff]
        %v370 = vld [vmem:[#allocation4 + $0x180] sm:$0xff]
        %v371 = vld [vmem:[#allocation4 + $0x188] sm:$0xf]
        %v372 = vld [vmem:[#allocation4 + $0x18c] sm:$0xff]
        %v373 = vld [vmem:[#allocation4 + $0x194] sm:$0xff]
        %v374 = vld [vmem:[#allocation4 + $0x19c] sm:$0xff]
        %v375 = vld [vmem:[#allocation4 + $0x1a4] sm:$0xff]
        %v376 = vld [vmem:[#allocation4 + $0x1ac] sm:$0xf]
        %v377 = vld [vmem:[#allocation4 + $0x1b0] sm:$0xff]
        %v378 = vld [vmem:[#allocation4 + $0x1b8] sm:$0xff]
        %v379 = vld [vmem:[#allocation4 + $0x1c0] sm:$0xff]
        %v380 = vld [vmem:[#allocation4 + $0x1c8] sm:$0xff]
        %v381 = vld [vmem:[#allocation4 + $0x1d0] sm:$0xf]
        %v382 = vld [vmem:[#allocation4 + $0x1d4] sm:$0xff]
        %v383 = vld [vmem:[#allocation4 + $0x1dc] sm:$0xff]
        %v384 = vld [vmem:[#allocation4 + $0x1e4] sm:$0xff]
        %v385 = vld [vmem:[#allocation4 + $0x1ec] sm:$0xff]
        %v386 = vld [vmem:[#allocation4 + $0x1f4] sm:$0xf]
        %v387 = vld [vmem:[#allocation4 + $0x1f8] sm:$0xff]
        %v388 = vld [vmem:[#allocation4 + $0x200] sm:$0xff]
        %v389 = vld [vmem:[#allocation4 + $0x208] sm:$0xff]
        %v390 = vld [vmem:[#allocation4 + $0x210] sm:$0xff]
        %v391 = vld [vmem:[#allocation4 + $0x218] sm:$0xf]
        %v392 = vld [vmem:[#allocation4 + $0x21c] sm:$0xff]
        %v393 = vld [vmem:[#allocation4 + $0x224] sm:$0xff]
        %v394 = vld [vmem:[#allocation4 + $0x22c] sm:$0xff]
        %v395 = vld [vmem:[#allocation4 + $0x234] sm:$0xff]
        %v396 = vld [vmem:[#allocation4 + $0x23c] sm:$0xf]
        %v397 = vld [vmem:[#allocation4 + $0x240] sm:$0xff]
        %v398 = vld [vmem:[#allocation4 + $0x248] sm:$0xff]
        %v399 = vld [vmem:[#allocation4 + $0x250] sm:$0xff]
        %v400 = vld [vmem:[#allocation4 + $0x258] sm:$0xff]
        %v401 = vld [vmem:[#allocation4 + $0x260] sm:$0xf]
        %v402 = vld [vmem:[#allocation4 + $0x264] sm:$0xff]
        %v403 = vld [vmem:[#allocation4 + $0x26c] sm:$0xff]
        %v404 = vld [vmem:[#allocation4 + $0x274] sm:$0xff]
        %v405 = vld [vmem:[#allocation4 + $0x27c] sm:$0xff]
        %v406 = vld [vmem:[#allocation4 + $0x284] sm:$0xf]
        %v407 = vld [vmem:[#allocation4 + $0x288] sm:$0xff]
        %v408 = vld [vmem:[#allocation4 + $0x290] sm:$0xff]
        %v409 = vld [vmem:[#allocation4 + $0x298] sm:$0xff]
        %v410 = vld [vmem:[#allocation4 + $0x2a0] sm:$0xff]
        %v411 = vld [vmem:[#allocation4 + $0x2a8] sm:$0xf]
        %v412 = vld [vmem:[#allocation4 + $0x2ac] sm:$0xff]
        %v413 = vld [vmem:[#allocation4 + $0x2b4] sm:$0xff]
        %v414 = vld [vmem:[#allocation4 + $0x2bc] sm:$0xff]
        %v415 = vld [vmem:[#allocation4 + $0x2c4] sm:$0xff]
        %v416 = vld [vmem:[#allocation4 + $0x2cc] sm:$0xf]
        %v417 = vld [vmem:[#allocation4 + $0x2d0] sm:$0xff]
        %v418 = vld [vmem:[#allocation4 + $0x2d8] sm:$0xff]
        %v419 = vld [vmem:[#allocation4 + $0x2e0] sm:$0xff]
        %v420 = vld [vmem:[#allocation4 + $0x2e8] sm:$0xff]
        %v421 = vld [vmem:[#allocation4 + $0x2f0] sm:$0xf]
        %v422 = vld [vmem:[#allocation4 + $0x2f4] sm:$0xff]
        %v423 = vld [vmem:[#allocation4 + $0x2fc] sm:$0xff]
        %v424 = vld [vmem:[#allocation4 + $0x304] sm:$0xff]
        %v425 = vld [vmem:[#allocation4 + $0x30c] sm:$0xff]
        %v426 = vld [vmem:[#allocation4 + $0x314] sm:$0xf]
        %v427 = vld [vmem:[#allocation4 + $0x318] sm:$0xff]
        %v428 = vld [vmem:[#allocation4 + $0x320] sm:$0xff]
        %v429 = vld [vmem:[#allocation4 + $0x328] sm:$0xff]
        %v430 = vld [vmem:[#allocation4 + $0x330] sm:$0xff]
        %v431 = vld [vmem:[#allocation4 + $0x338] sm:$0xf]
        %v432 = vld [vmem:[#allocation4 + $0x33c] sm:$0xff]
        %v433 = vld [vmem:[#allocation4 + $0x344] sm:$0xff]
        %v434 = vld [vmem:[#allocation4 + $0x34c] sm:$0xff]
        %v435 = vld [vmem:[#allocation4 + $0x354] sm:$0xff]
        %v436 = vld [vmem:[#allocation4 + $0x35c] sm:$0xf]
        %v437 = vld [vmem:[#allocation4 + $0x360] sm:$0xff]
        %v438 = vld [vmem:[#allocation4 + $0x368] sm:$0xff]
        %v439 = vld [vmem:[#allocation4 + $0x370] sm:$0xff]
        %v440 = vld [vmem:[#allocation4 + $0x378] sm:$0xff]
        %v441 = vld [vmem:[#allocation4 + $0x380] sm:$0xf]
        %v442 = vld [vmem:[#allocation4 + $0x384] sm:$0xff]
        %v443 = vld [vmem:[#allocation4 + $0x38c] sm:$0xff]
        %v444 = vld [vmem:[#allocation4 + $0x394] sm:$0xff]
        %v445 = vld [vmem:[#allocation4 + $0x39c] sm:$0xff]
        %v446 = vld [vmem:[#allocation4 + $0x3a4] sm:$0xf]
        %v447 = vld [vmem:[#allocation4 + $0x3a8] sm:$0xff]
        %v448 = vld [vmem:[#allocation4 + $0x3b0] sm:$0xff]
        %v449 = vld [vmem:[#allocation4 + $0x3b8] sm:$0xff]
        %v450 = vld [vmem:[#allocation4 + $0x3c0] sm:$0xff]
        %v451 = vld [vmem:[#allocation4 + $0x3c8] sm:$0xf]
        %v452 = vld [vmem:[#allocation4 + $0x3cc] sm:$0xff]
        %v453 = vld [vmem:[#allocation4 + $0x3d4] sm:$0xff]
        %v454 = vld [vmem:[#allocation4 + $0x3dc] sm:$0xff]
        %v455 = vld [vmem:[#allocation4 + $0x3e4] sm:$0xff]
        %v456 = vld [vmem:[#allocation4 + $0x3ec] sm:$0xf]
        %v457 = vld [vmem:[#allocation4 + $0x3f0] sm:$0xff]
        %v458 = vld [vmem:[#allocation4 + $0x3f8] sm:$0xff]
        %v459 = vld [vmem:[#allocation4 + $0x400] sm:$0xff]
        %v460 = vld [vmem:[#allocation4 + $0x408] sm:$0xff]
        %v461 = vld [vmem:[#allocation4 + $0x410] sm:$0xf]
        %v462 = vld [vmem:[#allocation4 + $0x414] sm:$0xff]
        %v463 = vld [vmem:[#allocation4 + $0x41c] sm:$0xff]
        %v464 = vld [vmem:[#allocation4 + $0x424] sm:$0xff]
        %v465 = vld [vmem:[#allocation4 + $0x42c] sm:$0xff]
        %v466 = vld [vmem:[#allocation4 + $0x434] sm:$0xf]
        %v467 = vld [vmem:[#allocation4 + $0x438] sm:$0xff]
        %v468 = vld [vmem:[#allocation4 + $0x440] sm:$0xff]
        %v469 = vld [vmem:[#allocation4 + $0x448] sm:$0xff]
        %v470 = vld [vmem:[#allocation4 + $0x450] sm:$0xff]
        %v471 = vld [vmem:[#allocation4 + $0x458] sm:$0xf]
        %v472 = vld [vmem:[#allocation4 + $0x45c] sm:$0xff]
        %v473 = vld [vmem:[#allocation4 + $0x464] sm:$0xff]
        %v474 = vld [vmem:[#allocation4 + $0x46c] sm:$0xff]
        %v475 = vld [vmem:[#allocation4 + $0x474] sm:$0xff]
        %v476 = vld [vmem:[#allocation4 + $0x47c] sm:$0xf]
        %v477 = vld [vmem:[%s270] sm:$0xff]
        %v478 = vld [vmem:[%s270 + $0x8] sm:$0xff]
        %v479 = vld [vmem:[%s270 + $0x10] sm:$0xff]
        %v480 = vld [vmem:[%s270 + $0x18] sm:$0xff]
        %v481 = vld [vmem:[%s270 + $0x20] sm:$0xff]
        %v482 = vld [vmem:[%s270 + $0x28] sm:$0xff]
        %v483 = vld [vmem:[%s270 + $0x30] sm:$0xff]
        %v484 = vld [vmem:[%s270 + $0x38] sm:$0xff]
        %v485 = vld [vmem:[%s270 + $0x40] sm:$0xff]
        %v486 = vld [vmem:[%s270 + $0x48] sm:$0xff]
        %v487 = vld [vmem:[%s270 + $0x50] sm:$0xff]
        %v488 = vld [vmem:[%s270 + $0x58] sm:$0xff]
        %v489 = vld [vmem:[%s270 + $0x60] sm:$0xff]
        %v490 = vld [vmem:[%s270 + $0x68] sm:$0xff]
        %v491 = vld [vmem:[%s270 + $0x70] sm:$0xff]
        %v492 = vld [vmem:[%s270 + $0x78] sm:$0xff]
        %v493 = vld [vmem:[%s270 + $0x80] sm:$0xff]
        %v494 = vld [vmem:[%s270 + $0x88] sm:$0xff]
        %v495 = vld [vmem:[%s270 + $0x90] sm:$0xff]
        %v496 = vld [vmem:[%s270 + $0x98] sm:$0xff]
        %v497 = vld [vmem:[%s270 + $0xa0] sm:$0xff]
        %v498 = vld [vmem:[%s270 + $0xa8] sm:$0xff]
        %v499 = vld [vmem:[%s270 + $0xb0] sm:$0xff]
        %v500 = vld [vmem:[%s270 + $0xb8] sm:$0xff]
        %v501 = vld [vmem:[%s270 + $0xc0] sm:$0xff]
        %v502 = vld [vmem:[%s270 + $0xc8] sm:$0xff]
        %v503 = vld [vmem:[%s270 + $0xd0] sm:$0xff]
        %v504 = vld [vmem:[%s270 + $0xd8] sm:$0xff]
        %v505 = vld [vmem:[%s270 + $0xe0] sm:$0xff]
        %v506 = vld [vmem:[%s270 + $0xe8] sm:$0xff]
        %v507 = vld [vmem:[%s270 + $0xf0] sm:$0xff]
        %v508 = vld [vmem:[%s270 + $0xf8] sm:$0xff]
        %v509 = vld [vmem:[%s270 + $0x100] sm:$0xff]
        %v510 = vld [vmem:[%s270 + $0x108] sm:$0xff]
        %v511 = vld [vmem:[%s270 + $0x110] sm:$0xff]
        %v512 = vld [vmem:[%s270 + $0x118] sm:$0xff]
        %v513 = vld [vmem:[%s270 + $0x120] sm:$0xff]
        %v514 = vld [vmem:[%s270 + $0x128] sm:$0xff]
        %v515 = vld [vmem:[%s270 + $0x130] sm:$0xff]
        %v516 = vld [vmem:[%s270 + $0x138] sm:$0xff]
        %v517 = vld [vmem:[%s270 + $0x140] sm:$0xff]
        %v518 = vld [vmem:[%s270 + $0x148] sm:$0xff]
        %v519 = vld [vmem:[%s270 + $0x150] sm:$0xff]
        %v520 = vld [vmem:[%s270 + $0x158] sm:$0xff]
        %v521 = vld [vmem:[%s270 + $0x160] sm:$0xff]
        %v522 = vld [vmem:[%s270 + $0x168] sm:$0xff]
        %v523 = vld [vmem:[%s270 + $0x170] sm:$0xff]
        %v524 = vld [vmem:[%s270 + $0x178] sm:$0xff]
        %v525 = vld [vmem:[%s270 + $0x180] sm:$0xff]
        %v526 = vld [vmem:[%s270 + $0x188] sm:$0xff]
        %v527 = vld [vmem:[%s270 + $0x190] sm:$0xff]
        %v528 = vld [vmem:[%s270 + $0x198] sm:$0xff]
        %v529 = vld [vmem:[%s270 + $0x1a0] sm:$0xff]
        %v530 = vld [vmem:[%s270 + $0x1a8] sm:$0xff]
        %v531 = vld [vmem:[%s270 + $0x1b0] sm:$0xff]
        %v532 = vld [vmem:[%s270 + $0x1b8] sm:$0xff]
        %v533 = vld [vmem:[%s270 + $0x1c0] sm:$0xff]
        %v534 = vld [vmem:[%s270 + $0x1c8] sm:$0xff]
        %v535 = vld [vmem:[%s270 + $0x1d0] sm:$0xff]
        %v536 = vld [vmem:[%s270 + $0x1d8] sm:$0xff]
        %v537 = vld [vmem:[%s270 + $0x1e0] sm:$0xff]
        %v538 = vld [vmem:[%s270 + $0x1e8] sm:$0xff]
        %v539 = vld [vmem:[%s270 + $0x1f0] sm:$0xff]
        %v540 = vld [vmem:[%s270 + $0x1f8] sm:$0xff]
        %v541 = vld [vmem:[%s270 + $0x200] sm:$0xff]
        %v542 = vld [vmem:[%s270 + $0x208] sm:$0xff]
        %v543 = vld [vmem:[%s270 + $0x210] sm:$0xff]
        %v544 = vld [vmem:[%s270 + $0x218] sm:$0xff]
        %v545 = vld [vmem:[%s270 + $0x220] sm:$0xff]
        %v546 = vld [vmem:[%s270 + $0x228] sm:$0xff]
        %v547 = vld [vmem:[%s270 + $0x230] sm:$0xff]
        %v548 = vld [vmem:[%s270 + $0x238] sm:$0xff]
        %v549 = vld [vmem:[%s270 + $0x240] sm:$0xff]
        %v550 = vld [vmem:[%s270 + $0x248] sm:$0xff]
        %v551 = vld [vmem:[%s270 + $0x250] sm:$0xff]
        %v552 = vld [vmem:[%s270 + $0x258] sm:$0xff]
        %v553 = vld [vmem:[%s270 + $0x260] sm:$0xff]
        %v554 = vld [vmem:[%s270 + $0x268] sm:$0xff]
        %v555 = vld [vmem:[%s270 + $0x270] sm:$0xff]
        %v556 = vld [vmem:[%s270 + $0x278] sm:$0xff]
        %v557 = vld [vmem:[%s270 + $0x280] sm:$0xff]
        %v558 = vld [vmem:[%s270 + $0x288] sm:$0xff]
        %v559 = vld [vmem:[%s270 + $0x290] sm:$0xff]
        %v560 = vld [vmem:[%s270 + $0x298] sm:$0xff]
        %v561 = vld [vmem:[%s270 + $0x2a0] sm:$0xff]
        %v562 = vld [vmem:[%s270 + $0x2a8] sm:$0xff]
        %v563 = vld [vmem:[%s270 + $0x2b0] sm:$0xff]
        %v564 = vld [vmem:[%s270 + $0x2b8] sm:$0xff]
        %v565 = vld [vmem:[%s270 + $0x2c0] sm:$0xff]
        %v566 = vld [vmem:[%s270 + $0x2c8] sm:$0xff]
        %v567 = vld [vmem:[%s270 + $0x2d0] sm:$0xff]
        %v568 = vld [vmem:[%s270 + $0x2d8] sm:$0xff]
        %v569 = vld [vmem:[%s270 + $0x2e0] sm:$0xff]
        %v570 = vld [vmem:[%s270 + $0x2e8] sm:$0xff]
        %v571 = vld [vmem:[%s270 + $0x2f0] sm:$0xff]
        %v572 = vld [vmem:[%s270 + $0x2f8] sm:$0xff]
        %v573 = vld [vmem:[%s270 + $0x300] sm:$0xff]
        %v574 = vld [vmem:[%s270 + $0x308] sm:$0xff]
        %v575 = vld [vmem:[%s270 + $0x310] sm:$0xff]
        %v576 = vld [vmem:[%s270 + $0x318] sm:$0xff]
        %v577 = vld [vmem:[%s270 + $0x320] sm:$0xff]
        %v578 = vld [vmem:[%s270 + $0x328] sm:$0xff]
        %v579 = vld [vmem:[%s270 + $0x330] sm:$0xff]
        %v580 = vld [vmem:[%s270 + $0x338] sm:$0xff]
        %v581 = vld [vmem:[%s270 + $0x340] sm:$0xff]
        %v582 = vld [vmem:[%s270 + $0x348] sm:$0xff]
        %v583 = vld [vmem:[%s270 + $0x350] sm:$0xff]
        %v584 = vld [vmem:[%s270 + $0x358] sm:$0xff]
        %v585 = vld [vmem:[%s270 + $0x360] sm:$0xff]
        %v586 = vld [vmem:[%s270 + $0x368] sm:$0xff]
        %v587 = vld [vmem:[%s270 + $0x370] sm:$0xff]
        %v588 = vld [vmem:[%s270 + $0x378] sm:$0xff]
        %v589 = vld [vmem:[%s270 + $0x380] sm:$0xff]
        %v590 = vld [vmem:[%s270 + $0x388] sm:$0xff]
        %v591 = vld [vmem:[%s270 + $0x390] sm:$0xff]
        %v592 = vld [vmem:[%s270 + $0x398] sm:$0xff]
        %v593 = vld [vmem:[%s270 + $0x3a0] sm:$0xff]
        %v594 = vld [vmem:[%s270 + $0x3a8] sm:$0xff]
        %v595 = vld [vmem:[%s270 + $0x3b0] sm:$0xff]
        %v596 = vld [vmem:[%s270 + $0x3b8] sm:$0xff]
        %v597 = vld [vmem:[%s270 + $0x3c0] sm:$0xff]
        %v598 = vld [vmem:[%s270 + $0x3c8] sm:$0xff]
        %v599 = vld [vmem:[%s270 + $0x3d0] sm:$0xff]
        %v600 = vld [vmem:[%s270 + $0x3d8] sm:$0xff]
        %v601 = vld [vmem:[%s270 + $0x3e0] sm:$0xff]
        %v602 = vld [vmem:[%s270 + $0x3e8] sm:$0xff]
        %v603 = vld [vmem:[%s270 + $0x3f0] sm:$0xff]
        %v604 = vld [vmem:[%s270 + $0x3f8] sm:$0xff]
        %v605 = vld [vmem:[%s270 + $0x400] sm:$0xff]
        %v606 = vld [vmem:[%s270 + $0x408] sm:$0xff]
        %v607 = vld [vmem:[%s270 + $0x410] sm:$0xff]
        %v608 = vld [vmem:[%s270 + $0x418] sm:$0xff]
        %v609 = vld [vmem:[%s270 + $0x420] sm:$0xff]
        %v610 = vld [vmem:[%s270 + $0x428] sm:$0xff]
        %v611 = vld [vmem:[%s270 + $0x430] sm:$0xff]
        %v612 = vld [vmem:[%s270 + $0x438] sm:$0xff]
        %v613 = vld [vmem:[%s270 + $0x440] sm:$0xff]
        %v614 = vld [vmem:[%s270 + $0x448] sm:$0xff]
        %v615 = vld [vmem:[%s270 + $0x450] sm:$0xff]
        %v616 = vld [vmem:[%s270 + $0x458] sm:$0xff]
        %v617 = vld [vmem:[%s270 + $0x460] sm:$0xff]
        %v618 = vld [vmem:[%s270 + $0x468] sm:$0xff]
        %v619 = vld [vmem:[%s270 + $0x470] sm:$0xff]
        %v620 = vld [vmem:[%s270 + $0x478] sm:$0xff]
        %v621 = vld [vmem:[%s2] sm:$0xff]
        %v622 = vld [vmem:[%s2 + $0x8] sm:$0xff]
        %v623 = vld [vmem:[%s2 + $0x10] sm:$0xff]
        %v624 = vld [vmem:[%s2 + $0x18] sm:$0xff]
        %v625 = vld [vmem:[%s2 + $0x20] sm:$0xff]
        %v626 = vld [vmem:[%s2 + $0x28] sm:$0xff]
        %v627 = vld [vmem:[%s2 + $0x30] sm:$0xff]
        %v628 = vld [vmem:[%s2 + $0x38] sm:$0xff]
        %v629 = vld [vmem:[%s2 + $0x40] sm:$0xff]
        %v630 = vld [vmem:[%s2 + $0x48] sm:$0xff]
        %v631 = vld [vmem:[%s2 + $0x50] sm:$0xff]
        %v632 = vld [vmem:[%s2 + $0x58] sm:$0xff]
        %v633 = vld [vmem:[%s2 + $0x60] sm:$0xff]
        %v634 = vld [vmem:[%s2 + $0x68] sm:$0xff]
        %v635 = vld [vmem:[%s2 + $0x70] sm:$0xff]
        %v636 = vld [vmem:[%s2 + $0x78] sm:$0xff]
        %v637 = vld [vmem:[%s2 + $0x80] sm:$0xff]
        %v638 = vld [vmem:[%s2 + $0x88] sm:$0xff]
        %v639 = vld [vmem:[%s2 + $0x90] sm:$0xff]
        %v640 = vld [vmem:[%s2 + $0x98] sm:$0xff]
        %v641 = vld [vmem:[%s2 + $0xa0] sm:$0xff]
        %v642 = vld [vmem:[%s2 + $0xa8] sm:$0xff]
        %v643 = vld [vmem:[%s2 + $0xb0] sm:$0xff]
        %v644 = vld [vmem:[%s2 + $0xb8] sm:$0xff]
        %v645 = vld [vmem:[%s2 + $0xc0] sm:$0xff]
        %v646 = vld [vmem:[%s2 + $0xc8] sm:$0xff]
        %v647 = vld [vmem:[%s2 + $0xd0] sm:$0xff]
        %v648 = vld [vmem:[%s2 + $0xd8] sm:$0xff]
        %v649 = vld [vmem:[%s2 + $0xe0] sm:$0xff]
        %v650 = vld [vmem:[%s2 + $0xe8] sm:$0xff]
        %v651 = vld [vmem:[%s2 + $0xf0] sm:$0xff]
        %v652 = vld [vmem:[%s2 + $0xf8] sm:$0xff]
        %654 = vset.pattern.permute.xlu0 0
        %655 = vperm.xlu0 %654, %v621
        %v656 = vpop.permute.xlu0 %655
        %659 = vset.pattern.permute.xlu0 0
        %660 = vperm.xlu0 %659, %v622
        %v661 = vpop.permute.xlu0 %660
        %664 = vset.pattern.permute.xlu0 0
        %665 = vperm.xlu0 %664, %v623
        %v666 = vpop.permute.xlu0 %665
        %669 = vset.pattern.permute.xlu0 0
        %670 = vperm.xlu0 %669, %v624
        %v671 = vpop.permute.xlu0 %670
        %674 = vset.pattern.permute.xlu0 0
        %675 = vperm.xlu0 %674, %v625
        %v676 = vpop.permute.xlu0 %675
        %679 = vset.pattern.permute.xlu0 0
        %680 = vperm.xlu0 %679, %v626
        %v681 = vpop.permute.xlu0 %680
        %684 = vset.pattern.permute.xlu0 0
        %685 = vperm.xlu0 %684, %v627
        %v686 = vpop.permute.xlu0 %685
        %689 = vset.pattern.permute.xlu0 0
        %690 = vperm.xlu0 %689, %v628
        %v691 = vpop.permute.xlu0 %690
        %694 = vset.pattern.permute.xlu0 0
        %695 = vperm.xlu0 %694, %v629
        %v696 = vpop.permute.xlu0 %695
        %699 = vset.pattern.permute.xlu0 0
        %700 = vperm.xlu0 %699, %v630
        %v701 = vpop.permute.xlu0 %700
        %704 = vset.pattern.permute.xlu0 0
        %705 = vperm.xlu0 %704, %v631
        %v706 = vpop.permute.xlu0 %705
        %709 = vset.pattern.permute.xlu0 0
        %710 = vperm.xlu0 %709, %v632
        %v711 = vpop.permute.xlu0 %710
        %714 = vset.pattern.permute.xlu0 0
        %715 = vperm.xlu0 %714, %v633
        %v716 = vpop.permute.xlu0 %715
        %719 = vset.pattern.permute.xlu0 0
        %720 = vperm.xlu0 %719, %v634
        %v721 = vpop.permute.xlu0 %720
        %724 = vset.pattern.permute.xlu0 0
        %725 = vperm.xlu0 %724, %v635
        %v726 = vpop.permute.xlu0 %725
        %729 = vset.pattern.permute.xlu0 0
        %730 = vperm.xlu0 %729, %v636
        %v731 = vpop.permute.xlu0 %730
        %734 = vset.pattern.permute.xlu0 0
        %735 = vperm.xlu0 %734, %v637
        %v736 = vpop.permute.xlu0 %735
        %739 = vset.pattern.permute.xlu0 0
        %740 = vperm.xlu0 %739, %v638
        %v741 = vpop.permute.xlu0 %740
        %744 = vset.pattern.permute.xlu0 0
        %745 = vperm.xlu0 %744, %v639
        %v746 = vpop.permute.xlu0 %745
        %749 = vset.pattern.permute.xlu0 0
        %750 = vperm.xlu0 %749, %v640
        %v751 = vpop.permute.xlu0 %750
        %754 = vset.pattern.permute.xlu0 0
        %755 = vperm.xlu0 %754, %v641
        %v756 = vpop.permute.xlu0 %755
        %759 = vset.pattern.permute.xlu0 0
        %760 = vperm.xlu0 %759, %v642
        %v761 = vpop.permute.xlu0 %760
        %764 = vset.pattern.permute.xlu0 0
        %765 = vperm.xlu0 %764, %v643
        %v766 = vpop.permute.xlu0 %765
        %769 = vset.pattern.permute.xlu0 0
        %770 = vperm.xlu0 %769, %v644
        %v771 = vpop.permute.xlu0 %770
        %774 = vset.pattern.permute.xlu0 0
        %775 = vperm.xlu0 %774, %v645
        %v776 = vpop.permute.xlu0 %775
        %779 = vset.pattern.permute.xlu0 0
        %780 = vperm.xlu0 %779, %v646
        %v781 = vpop.permute.xlu0 %780
        %784 = vset.pattern.permute.xlu0 0
        %785 = vperm.xlu0 %784, %v647
        %v786 = vpop.permute.xlu0 %785
        %789 = vset.pattern.permute.xlu0 0
        %790 = vperm.xlu0 %789, %v648
        %v791 = vpop.permute.xlu0 %790
        %794 = vset.pattern.permute.xlu0 0
        %795 = vperm.xlu0 %794, %v649
        %v796 = vpop.permute.xlu0 %795
        %799 = vset.pattern.permute.xlu0 0
        %800 = vperm.xlu0 %799, %v650
        %v801 = vpop.permute.xlu0 %800
        %804 = vset.pattern.permute.xlu0 0
        %805 = vperm.xlu0 %804, %v651
        %v806 = vpop.permute.xlu0 %805
        %809 = vset.pattern.permute.xlu0 0
        %810 = vperm.xlu0 %809, %v652
        %v811 = vpop.permute.xlu0 %810
        %v973 = vunpack.c.l.b16 %v317
        %v974 = vunpack.c.h.b16 %v317
        %v975 = vunpack.c.l.b16 %v318
        %v976 = vunpack.c.h.b16 %v318
        %v977 = vunpack.c.l.b16 %v319
        %v978 = vunpack.c.h.b16 %v319
        %v979 = vunpack.c.l.b16 %v320
        %v980 = vunpack.c.h.b16 %v320
        %v981 = vunpack.c.l.b16 %v321
        %v982 = vunpack.c.l.b16 %v322
        %v983 = vunpack.c.h.b16 %v322
        %v984 = vunpack.c.l.b16 %v323
        %v985 = vunpack.c.h.b16 %v323
        %v986 = vunpack.c.l.b16 %v324
        %v987 = vunpack.c.h.b16 %v324
        %v988 = vunpack.c.l.b16 %v325
        %v989 = vunpack.c.h.b16 %v325
        %v990 = vunpack.c.l.b16 %v326
        %v991 = vunpack.c.l.b16 %v327
        %v992 = vunpack.c.h.b16 %v327
        %v993 = vunpack.c.l.b16 %v328
        %v994 = vunpack.c.h.b16 %v328
        %v995 = vunpack.c.l.b16 %v329
        %v996 = vunpack.c.h.b16 %v329
        %v997 = vunpack.c.l.b16 %v330
        %v998 = vunpack.c.h.b16 %v330
        %v999 = vunpack.c.l.b16 %v331
        %v1000 = vunpack.c.l.b16 %v332
        %v1001 = vunpack.c.h.b16 %v332
        %v1002 = vunpack.c.l.b16 %v333
        %v1003 = vunpack.c.h.b16 %v333
        %v1004 = vunpack.c.l.b16 %v334
        %v1005 = vunpack.c.h.b16 %v334
        %v1006 = vunpack.c.l.b16 %v335
        %v1007 = vunpack.c.h.b16 %v335
        %v1008 = vunpack.c.l.b16 %v336
        %v1009 = vunpack.c.l.b16 %v337
        %v1010 = vunpack.c.h.b16 %v337
        %v1011 = vunpack.c.l.b16 %v338
        %v1012 = vunpack.c.h.b16 %v338
        %v1013 = vunpack.c.l.b16 %v339
        %v1014 = vunpack.c.h.b16 %v339
        %v1015 = vunpack.c.l.b16 %v340
        %v1016 = vunpack.c.h.b16 %v340
        %v1017 = vunpack.c.l.b16 %v341
        %v1018 = vunpack.c.l.b16 %v342
        %v1019 = vunpack.c.h.b16 %v342
        %v1020 = vunpack.c.l.b16 %v343
        %v1021 = vunpack.c.h.b16 %v343
        %v1022 = vunpack.c.l.b16 %v344
        %v1023 = vunpack.c.h.b16 %v344
        %v1024 = vunpack.c.l.b16 %v345
        %v1025 = vunpack.c.h.b16 %v345
        %v1026 = vunpack.c.l.b16 %v346
        %v1027 = vunpack.c.l.b16 %v347
        %v1028 = vunpack.c.h.b16 %v347
        %v1029 = vunpack.c.l.b16 %v348
        %v1030 = vunpack.c.h.b16 %v348
        %v1031 = vunpack.c.l.b16 %v349
        %v1032 = vunpack.c.h.b16 %v349
        %v1033 = vunpack.c.l.b16 %v350
        %v1034 = vunpack.c.h.b16 %v350
        %v1035 = vunpack.c.l.b16 %v351
        %v1036 = vunpack.c.l.b16 %v352
        %v1037 = vunpack.c.h.b16 %v352
        %v1038 = vunpack.c.l.b16 %v353
        %v1039 = vunpack.c.h.b16 %v353
        %v1040 = vunpack.c.l.b16 %v354
        %v1041 = vunpack.c.h.b16 %v354
        %v1042 = vunpack.c.l.b16 %v355
        %v1043 = vunpack.c.h.b16 %v355
        %v1044 = vunpack.c.l.b16 %v356
        %v1045 = vunpack.c.l.b16 %v357
        %v1046 = vunpack.c.h.b16 %v357
        %v1047 = vunpack.c.l.b16 %v358
        %v1048 = vunpack.c.h.b16 %v358
        %v1049 = vunpack.c.l.b16 %v359
        %v1050 = vunpack.c.h.b16 %v359
        %v1051 = vunpack.c.l.b16 %v360
        %v1052 = vunpack.c.h.b16 %v360
        %v1053 = vunpack.c.l.b16 %v361
        %v1054 = vunpack.c.l.b16 %v362
        %v1055 = vunpack.c.h.b16 %v362
        %v1056 = vunpack.c.l.b16 %v363
        %v1057 = vunpack.c.h.b16 %v363
        %v1058 = vunpack.c.l.b16 %v364
        %v1059 = vunpack.c.h.b16 %v364
        %v1060 = vunpack.c.l.b16 %v365
        %v1061 = vunpack.c.h.b16 %v365
        %v1062 = vunpack.c.l.b16 %v366
        %v1063 = vunpack.c.l.b16 %v367
        %v1064 = vunpack.c.h.b16 %v367
        %v1065 = vunpack.c.l.b16 %v368
        %v1066 = vunpack.c.h.b16 %v368
        %v1067 = vunpack.c.l.b16 %v369
        %v1068 = vunpack.c.h.b16 %v369
        %v1069 = vunpack.c.l.b16 %v370
        %v1070 = vunpack.c.h.b16 %v370
        %v1071 = vunpack.c.l.b16 %v371
        %v1072 = vunpack.c.l.b16 %v372
        %v1073 = vunpack.c.h.b16 %v372
        %v1074 = vunpack.c.l.b16 %v373
        %v1075 = vunpack.c.h.b16 %v373
        %v1076 = vunpack.c.l.b16 %v374
        %v1077 = vunpack.c.h.b16 %v374
        %v1078 = vunpack.c.l.b16 %v375
        %v1079 = vunpack.c.h.b16 %v375
        %v1080 = vunpack.c.l.b16 %v376
        %v1081 = vunpack.c.l.b16 %v377
        %v1082 = vunpack.c.h.b16 %v377
        %v1083 = vunpack.c.l.b16 %v378
        %v1084 = vunpack.c.h.b16 %v378
        %v1085 = vunpack.c.l.b16 %v379
        %v1086 = vunpack.c.h.b16 %v379
        %v1087 = vunpack.c.l.b16 %v380
        %v1088 = vunpack.c.h.b16 %v380
        %v1089 = vunpack.c.l.b16 %v381
        %v1090 = vunpack.c.l.b16 %v382
        %v1091 = vunpack.c.h.b16 %v382
        %v1092 = vunpack.c.l.b16 %v383
        %v1093 = vunpack.c.h.b16 %v383
        %v1094 = vunpack.c.l.b16 %v384
        %v1095 = vunpack.c.h.b16 %v384
        %v1096 = vunpack.c.l.b16 %v385
        %v1097 = vunpack.c.h.b16 %v385
        %v1098 = vunpack.c.l.b16 %v386
        %v1099 = vunpack.c.l.b16 %v387
        %v1100 = vunpack.c.h.b16 %v387
        %v1101 = vunpack.c.l.b16 %v388
        %v1102 = vunpack.c.h.b16 %v388
        %v1103 = vunpack.c.l.b16 %v389
        %v1104 = vunpack.c.h.b16 %v389
        %v1105 = vunpack.c.l.b16 %v390
        %v1106 = vunpack.c.h.b16 %v390
        %v1107 = vunpack.c.l.b16 %v391
        %v1108 = vunpack.c.l.b16 %v392
        %v1109 = vunpack.c.h.b16 %v392
        %v1110 = vunpack.c.l.b16 %v393
        %v1111 = vunpack.c.h.b16 %v393
        %v1112 = vunpack.c.l.b16 %v394
        %v1113 = vunpack.c.h.b16 %v394
        %v1114 = vunpack.c.l.b16 %v395
        %v1115 = vunpack.c.h.b16 %v395
        %v1116 = vunpack.c.l.b16 %v396
        %v1117 = vunpack.c.l.b16 %v397
        %v1118 = vunpack.c.h.b16 %v397
        %v1119 = vunpack.c.l.b16 %v398
        %v1120 = vunpack.c.h.b16 %v398
        %v1121 = vunpack.c.l.b16 %v399
        %v1122 = vunpack.c.h.b16 %v399
        %v1123 = vunpack.c.l.b16 %v400
        %v1124 = vunpack.c.h.b16 %v400
        %v1125 = vunpack.c.l.b16 %v401
        %v1126 = vunpack.c.l.b16 %v402
        %v1127 = vunpack.c.h.b16 %v402
        %v1128 = vunpack.c.l.b16 %v403
        %v1129 = vunpack.c.h.b16 %v403
        %v1130 = vunpack.c.l.b16 %v404
        %v1131 = vunpack.c.h.b16 %v404
        %v1132 = vunpack.c.l.b16 %v405
        %v1133 = vunpack.c.h.b16 %v405
        %v1134 = vunpack.c.l.b16 %v406
        %v1135 = vunpack.c.l.b16 %v407
        %v1136 = vunpack.c.h.b16 %v407
        %v1137 = vunpack.c.l.b16 %v408
        %v1138 = vunpack.c.h.b16 %v408
        %v1139 = vunpack.c.l.b16 %v409
        %v1140 = vunpack.c.h.b16 %v409
        %v1141 = vunpack.c.l.b16 %v410
        %v1142 = vunpack.c.h.b16 %v410
        %v1143 = vunpack.c.l.b16 %v411
        %v1144 = vunpack.c.l.b16 %v412
        %v1145 = vunpack.c.h.b16 %v412
        %v1146 = vunpack.c.l.b16 %v413
        %v1147 = vunpack.c.h.b16 %v413
        %v1148 = vunpack.c.l.b16 %v414
        %v1149 = vunpack.c.h.b16 %v414
        %v1150 = vunpack.c.l.b16 %v415
        %v1151 = vunpack.c.h.b16 %v415
        %v1152 = vunpack.c.l.b16 %v416
        %v1153 = vunpack.c.l.b16 %v417
        %v1154 = vunpack.c.h.b16 %v417
        %v1155 = vunpack.c.l.b16 %v418
        %v1156 = vunpack.c.h.b16 %v418
        %v1157 = vunpack.c.l.b16 %v419
        %v1158 = vunpack.c.h.b16 %v419
        %v1159 = vunpack.c.l.b16 %v420
        %v1160 = vunpack.c.h.b16 %v420
        %v1161 = vunpack.c.l.b16 %v421
        %v1162 = vunpack.c.l.b16 %v422
        %v1163 = vunpack.c.h.b16 %v422
        %v1164 = vunpack.c.l.b16 %v423
        %v1165 = vunpack.c.h.b16 %v423
        %v1166 = vunpack.c.l.b16 %v424
        %v1167 = vunpack.c.h.b16 %v424
        %v1168 = vunpack.c.l.b16 %v425
        %v1169 = vunpack.c.h.b16 %v425
        %v1170 = vunpack.c.l.b16 %v426
        %v1171 = vunpack.c.l.b16 %v427
        %v1172 = vunpack.c.h.b16 %v427
        %v1173 = vunpack.c.l.b16 %v428
        %v1174 = vunpack.c.h.b16 %v428
        %v1175 = vunpack.c.l.b16 %v429
        %v1176 = vunpack.c.h.b16 %v429
        %v1177 = vunpack.c.l.b16 %v430
        %v1178 = vunpack.c.h.b16 %v430
        %v1179 = vunpack.c.l.b16 %v431
        %v1180 = vunpack.c.l.b16 %v432
        %v1181 = vunpack.c.h.b16 %v432
        %v1182 = vunpack.c.l.b16 %v433
        %v1183 = vunpack.c.h.b16 %v433
        %v1184 = vunpack.c.l.b16 %v434
        %v1185 = vunpack.c.h.b16 %v434
        %v1186 = vunpack.c.l.b16 %v435
        %v1187 = vunpack.c.h.b16 %v435
        %v1188 = vunpack.c.l.b16 %v436
        %v1189 = vunpack.c.l.b16 %v437
        %v1190 = vunpack.c.h.b16 %v437
        %v1191 = vunpack.c.l.b16 %v438
        %v1192 = vunpack.c.h.b16 %v438
        %v1193 = vunpack.c.l.b16 %v439
        %v1194 = vunpack.c.h.b16 %v439
        %v1195 = vunpack.c.l.b16 %v440
        %v1196 = vunpack.c.h.b16 %v440
        %v1197 = vunpack.c.l.b16 %v441
        %v1198 = vunpack.c.l.b16 %v442
        %v1199 = vunpack.c.h.b16 %v442
        %v1200 = vunpack.c.l.b16 %v443
        %v1201 = vunpack.c.h.b16 %v443
        %v1202 = vunpack.c.l.b16 %v444
        %v1203 = vunpack.c.h.b16 %v444
        %v1204 = vunpack.c.l.b16 %v445
        %v1205 = vunpack.c.h.b16 %v445
        %v1206 = vunpack.c.l.b16 %v446
        %v1207 = vunpack.c.l.b16 %v447
        %v1208 = vunpack.c.h.b16 %v447
        %v1209 = vunpack.c.l.b16 %v448
        %v1210 = vunpack.c.h.b16 %v448
        %v1211 = vunpack.c.l.b16 %v449
        %v1212 = vunpack.c.h.b16 %v449
        %v1213 = vunpack.c.l.b16 %v450
        %v1214 = vunpack.c.h.b16 %v450
        %v1215 = vunpack.c.l.b16 %v451
        %v1216 = vunpack.c.l.b16 %v452
        %v1217 = vunpack.c.h.b16 %v452
        %v1218 = vunpack.c.l.b16 %v453
        %v1219 = vunpack.c.h.b16 %v453
        %v1220 = vunpack.c.l.b16 %v454
        %v1221 = vunpack.c.h.b16 %v454
        %v1222 = vunpack.c.l.b16 %v455
        %v1223 = vunpack.c.h.b16 %v455
        %v1224 = vunpack.c.l.b16 %v456
        %v1225 = vunpack.c.l.b16 %v457
        %v1226 = vunpack.c.h.b16 %v457
        %v1227 = vunpack.c.l.b16 %v458
        %v1228 = vunpack.c.h.b16 %v458
        %v1229 = vunpack.c.l.b16 %v459
        %v1230 = vunpack.c.h.b16 %v459
        %v1231 = vunpack.c.l.b16 %v460
        %v1232 = vunpack.c.h.b16 %v460
        %v1233 = vunpack.c.l.b16 %v461
        %v1234 = vunpack.c.l.b16 %v462
        %v1235 = vunpack.c.h.b16 %v462
        %v1236 = vunpack.c.l.b16 %v463
        %v1237 = vunpack.c.h.b16 %v463
        %v1238 = vunpack.c.l.b16 %v464
        %v1239 = vunpack.c.h.b16 %v464
        %v1240 = vunpack.c.l.b16 %v465
        %v1241 = vunpack.c.h.b16 %v465
        %v1242 = vunpack.c.l.b16 %v466
        %v1243 = vunpack.c.l.b16 %v467
        %v1244 = vunpack.c.h.b16 %v467
        %v1245 = vunpack.c.l.b16 %v468
        %v1246 = vunpack.c.h.b16 %v468
        %v1247 = vunpack.c.l.b16 %v469
        %v1248 = vunpack.c.h.b16 %v469
        %v1249 = vunpack.c.l.b16 %v470
        %v1250 = vunpack.c.h.b16 %v470
        %v1251 = vunpack.c.l.b16 %v471
        %v1252 = vunpack.c.l.b16 %v472
        %v1253 = vunpack.c.h.b16 %v472
        %v1254 = vunpack.c.l.b16 %v473
        %v1255 = vunpack.c.h.b16 %v473
        %v1256 = vunpack.c.l.b16 %v474
        %v1257 = vunpack.c.h.b16 %v474
        %v1258 = vunpack.c.l.b16 %v475
        %v1259 = vunpack.c.h.b16 %v475
        %v1260 = vunpack.c.l.b16 %v476
        %v1261 = vpack.c.b16 %v982, %v973
        %v1262 = vpack.c.b16 %v983, %v974
        %v1263 = vpack.c.b16 %v984, %v975
        %v1264 = vpack.c.b16 %v985, %v976
        %v1265 = vpack.c.b16 %v986, %v977
        %v1266 = vpack.c.b16 %v987, %v978
        %v1267 = vpack.c.b16 %v988, %v979
        %v1268 = vpack.c.b16 %v989, %v980
        %v1269 = vpack.c.b16 %v990, %v981
        %v1270 = vpack.c.b16 %v1000, %v991
        %v1271 = vpack.c.b16 %v1001, %v992
        %v1272 = vpack.c.b16 %v1002, %v993
        %v1273 = vpack.c.b16 %v1003, %v994
        %v1274 = vpack.c.b16 %v1004, %v995
        %v1275 = vpack.c.b16 %v1005, %v996
        %v1276 = vpack.c.b16 %v1006, %v997
        %v1277 = vpack.c.b16 %v1007, %v998
        %v1278 = vpack.c.b16 %v1008, %v999
        %v1279 = vpack.c.b16 %v1018, %v1009
        %v1280 = vpack.c.b16 %v1019, %v1010
        %v1281 = vpack.c.b16 %v1020, %v1011
        %v1282 = vpack.c.b16 %v1021, %v1012
        %v1283 = vpack.c.b16 %v1022, %v1013
        %v1284 = vpack.c.b16 %v1023, %v1014
        %v1285 = vpack.c.b16 %v1024, %v1015
        %v1286 = vpack.c.b16 %v1025, %v1016
        %v1287 = vpack.c.b16 %v1026, %v1017
        %v1288 = vpack.c.b16 %v1036, %v1027
        %v1289 = vpack.c.b16 %v1037, %v1028
        %v1290 = vpack.c.b16 %v1038, %v1029
        %v1291 = vpack.c.b16 %v1039, %v1030
        %v1292 = vpack.c.b16 %v1040, %v1031
        %v1293 = vpack.c.b16 %v1041, %v1032
        %v1294 = vpack.c.b16 %v1042, %v1033
        %v1295 = vpack.c.b16 %v1043, %v1034
        %v1296 = vpack.c.b16 %v1044, %v1035
        %v1297 = vpack.c.b16 %v1054, %v1045
        %v1298 = vpack.c.b16 %v1055, %v1046
        %v1299 = vpack.c.b16 %v1056, %v1047
        %v1300 = vpack.c.b16 %v1057, %v1048
        %v1301 = vpack.c.b16 %v1058, %v1049
        %v1302 = vpack.c.b16 %v1059, %v1050
        %v1303 = vpack.c.b16 %v1060, %v1051
        %v1304 = vpack.c.b16 %v1061, %v1052
        %v1305 = vpack.c.b16 %v1062, %v1053
        %v1306 = vpack.c.b16 %v1072, %v1063
        %v1307 = vpack.c.b16 %v1073, %v1064
        %v1308 = vpack.c.b16 %v1074, %v1065
        %v1309 = vpack.c.b16 %v1075, %v1066
        %v1310 = vpack.c.b16 %v1076, %v1067
        %v1311 = vpack.c.b16 %v1077, %v1068
        %v1312 = vpack.c.b16 %v1078, %v1069
        %v1313 = vpack.c.b16 %v1079, %v1070
        %v1314 = vpack.c.b16 %v1080, %v1071
        %v1315 = vpack.c.b16 %v1090, %v1081
        %v1316 = vpack.c.b16 %v1091, %v1082
        %v1317 = vpack.c.b16 %v1092, %v1083
        %v1318 = vpack.c.b16 %v1093, %v1084
        %v1319 = vpack.c.b16 %v1094, %v1085
        %v1320 = vpack.c.b16 %v1095, %v1086
        %v1321 = vpack.c.b16 %v1096, %v1087
        %v1322 = vpack.c.b16 %v1097, %v1088
        %v1323 = vpack.c.b16 %v1098, %v1089
        %v1324 = vpack.c.b16 %v1108, %v1099
        %v1325 = vpack.c.b16 %v1109, %v1100
        %v1326 = vpack.c.b16 %v1110, %v1101
        %v1327 = vpack.c.b16 %v1111, %v1102
        %v1328 = vpack.c.b16 %v1112, %v1103
        %v1329 = vpack.c.b16 %v1113, %v1104
        %v1330 = vpack.c.b16 %v1114, %v1105
        %v1331 = vpack.c.b16 %v1115, %v1106
        %v1332 = vpack.c.b16 %v1116, %v1107
        %v1333 = vpack.c.b16 %v1126, %v1117
        %v1334 = vpack.c.b16 %v1127, %v1118
        %v1335 = vpack.c.b16 %v1128, %v1119
        %v1336 = vpack.c.b16 %v1129, %v1120
        %v1337 = vpack.c.b16 %v1130, %v1121
        %v1338 = vpack.c.b16 %v1131, %v1122
        %v1339 = vpack.c.b16 %v1132, %v1123
        %v1340 = vpack.c.b16 %v1133, %v1124
        %v1341 = vpack.c.b16 %v1134, %v1125
        %v1342 = vpack.c.b16 %v1144, %v1135
        %v1343 = vpack.c.b16 %v1145, %v1136
        %v1344 = vpack.c.b16 %v1146, %v1137
        %v1345 = vpack.c.b16 %v1147, %v1138
        %v1346 = vpack.c.b16 %v1148, %v1139
        %v1347 = vpack.c.b16 %v1149, %v1140
        %v1348 = vpack.c.b16 %v1150, %v1141
        %v1349 = vpack.c.b16 %v1151, %v1142
        %v1350 = vpack.c.b16 %v1152, %v1143
        %v1351 = vpack.c.b16 %v1162, %v1153
        %v1352 = vpack.c.b16 %v1163, %v1154
        %v1353 = vpack.c.b16 %v1164, %v1155
        %v1354 = vpack.c.b16 %v1165, %v1156
        %v1355 = vpack.c.b16 %v1166, %v1157
        %v1356 = vpack.c.b16 %v1167, %v1158
        %v1357 = vpack.c.b16 %v1168, %v1159
        %v1358 = vpack.c.b16 %v1169, %v1160
        %v1359 = vpack.c.b16 %v1170, %v1161
        %v1360 = vpack.c.b16 %v1180, %v1171
        %v1361 = vpack.c.b16 %v1181, %v1172
        %v1362 = vpack.c.b16 %v1182, %v1173
        %v1363 = vpack.c.b16 %v1183, %v1174
        %v1364 = vpack.c.b16 %v1184, %v1175
        %v1365 = vpack.c.b16 %v1185, %v1176
        %v1366 = vpack.c.b16 %v1186, %v1177
        %v1367 = vpack.c.b16 %v1187, %v1178
        %v1368 = vpack.c.b16 %v1188, %v1179
        %v1369 = vpack.c.b16 %v1198, %v1189
        %v1370 = vpack.c.b16 %v1199, %v1190
        %v1371 = vpack.c.b16 %v1200, %v1191
        %v1372 = vpack.c.b16 %v1201, %v1192
        %v1373 = vpack.c.b16 %v1202, %v1193
        %v1374 = vpack.c.b16 %v1203, %v1194
        %v1375 = vpack.c.b16 %v1204, %v1195
        %v1376 = vpack.c.b16 %v1205, %v1196
        %v1377 = vpack.c.b16 %v1206, %v1197
        %v1378 = vpack.c.b16 %v1216, %v1207
        %v1379 = vpack.c.b16 %v1217, %v1208
        %v1380 = vpack.c.b16 %v1218, %v1209
        %v1381 = vpack.c.b16 %v1219, %v1210
        %v1382 = vpack.c.b16 %v1220, %v1211
        %v1383 = vpack.c.b16 %v1221, %v1212
        %v1384 = vpack.c.b16 %v1222, %v1213
        %v1385 = vpack.c.b16 %v1223, %v1214
        %v1386 = vpack.c.b16 %v1224, %v1215
        %v1387 = vpack.c.b16 %v1234, %v1225
        %v1388 = vpack.c.b16 %v1235, %v1226
        %v1389 = vpack.c.b16 %v1236, %v1227
        %v1390 = vpack.c.b16 %v1237, %v1228
        %v1391 = vpack.c.b16 %v1238, %v1229
        %v1392 = vpack.c.b16 %v1239, %v1230
        %v1393 = vpack.c.b16 %v1240, %v1231
        %v1394 = vpack.c.b16 %v1241, %v1232
        %v1395 = vpack.c.b16 %v1242, %v1233
        %v1396 = vpack.c.b16 %v1252, %v1243
        %v1397 = vpack.c.b16 %v1253, %v1244
        %v1398 = vpack.c.b16 %v1254, %v1245
        %v1399 = vpack.c.b16 %v1255, %v1246
        %v1400 = vpack.c.b16 %v1256, %v1247
        %v1401 = vpack.c.b16 %v1257, %v1248
        %v1402 = vpack.c.b16 %v1258, %v1249
        %v1403 = vpack.c.b16 %v1259, %v1250
        %v1404 = vpack.c.b16 %v1260, %v1251
        %v1693 = vunpack.c.l.b16 %v477
        %v1694 = vunpack.c.h.b16 %v477
        %v1695 = vunpack.c.l.b16 %v478
        %v1696 = vunpack.c.h.b16 %v478
        %v1697 = vunpack.c.l.b16 %v479
        %v1698 = vunpack.c.h.b16 %v479
        %v1699 = vunpack.c.l.b16 %v480
        %v1700 = vunpack.c.h.b16 %v480
        %v1701 = vunpack.c.l.b16 %v481
        %v1702 = vunpack.c.h.b16 %v481
        %v1703 = vunpack.c.l.b16 %v482
        %v1704 = vunpack.c.h.b16 %v482
        %v1705 = vunpack.c.l.b16 %v483
        %v1706 = vunpack.c.h.b16 %v483
        %v1707 = vunpack.c.l.b16 %v484
        %v1708 = vunpack.c.h.b16 %v484
        %v1709 = vunpack.c.l.b16 %v485
        %v1710 = vunpack.c.h.b16 %v485
        %v1711 = vunpack.c.l.b16 %v486
        %v1712 = vunpack.c.h.b16 %v486
        %v1713 = vunpack.c.l.b16 %v487
        %v1714 = vunpack.c.h.b16 %v487
        %v1715 = vunpack.c.l.b16 %v488
        %v1716 = vunpack.c.h.b16 %v488
        %v1717 = vunpack.c.l.b16 %v489
        %v1718 = vunpack.c.h.b16 %v489
        %v1719 = vunpack.c.l.b16 %v490
        %v1720 = vunpack.c.h.b16 %v490
        %v1721 = vunpack.c.l.b16 %v491
        %v1722 = vunpack.c.h.b16 %v491
        %v1723 = vunpack.c.l.b16 %v492
        %v1724 = vunpack.c.h.b16 %v492
        %v1725 = vunpack.c.l.b16 %v493
        %v1726 = vunpack.c.h.b16 %v493
        %v1727 = vunpack.c.l.b16 %v494
        %v1728 = vunpack.c.h.b16 %v494
        %v1729 = vunpack.c.l.b16 %v495
        %v1730 = vunpack.c.h.b16 %v495
        %v1731 = vunpack.c.l.b16 %v496
        %v1732 = vunpack.c.h.b16 %v496
        %v1733 = vunpack.c.l.b16 %v497
        %v1734 = vunpack.c.h.b16 %v497
        %v1735 = vunpack.c.l.b16 %v498
        %v1736 = vunpack.c.h.b16 %v498
        %v1737 = vunpack.c.l.b16 %v499
        %v1738 = vunpack.c.h.b16 %v499
        %v1739 = vunpack.c.l.b16 %v500
        %v1740 = vunpack.c.h.b16 %v500
        %v1741 = vunpack.c.l.b16 %v501
        %v1742 = vunpack.c.h.b16 %v501
        %v1743 = vunpack.c.l.b16 %v502
        %v1744 = vunpack.c.h.b16 %v502
        %v1745 = vunpack.c.l.b16 %v503
        %v1746 = vunpack.c.h.b16 %v503
        %v1747 = vunpack.c.l.b16 %v504
        %v1748 = vunpack.c.h.b16 %v504
        %v1749 = vunpack.c.l.b16 %v505
        %v1750 = vunpack.c.h.b16 %v505
        %v1751 = vunpack.c.l.b16 %v506
        %v1752 = vunpack.c.h.b16 %v506
        %v1753 = vunpack.c.l.b16 %v507
        %v1754 = vunpack.c.h.b16 %v507
        %v1755 = vunpack.c.l.b16 %v508
        %v1756 = vunpack.c.h.b16 %v508
        %v1757 = vunpack.c.l.b16 %v509
        %v1758 = vunpack.c.h.b16 %v509
        %v1759 = vunpack.c.l.b16 %v510
        %v1760 = vunpack.c.h.b16 %v510
        %v1761 = vunpack.c.l.b16 %v511
        %v1762 = vunpack.c.h.b16 %v511
        %v1763 = vunpack.c.l.b16 %v512
        %v1764 = vunpack.c.h.b16 %v512
        %v1765 = vunpack.c.l.b16 %v513
        %v1766 = vunpack.c.h.b16 %v513
        %v1767 = vunpack.c.l.b16 %v514
        %v1768 = vunpack.c.h.b16 %v514
        %v1769 = vunpack.c.l.b16 %v515
        %v1770 = vunpack.c.h.b16 %v515
        %v1771 = vunpack.c.l.b16 %v516
        %v1772 = vunpack.c.h.b16 %v516
        %v1773 = vunpack.c.l.b16 %v517
        %v1774 = vunpack.c.h.b16 %v517
        %v1775 = vunpack.c.l.b16 %v518
        %v1776 = vunpack.c.h.b16 %v518
        %v1777 = vunpack.c.l.b16 %v519
        %v1778 = vunpack.c.h.b16 %v519
        %v1779 = vunpack.c.l.b16 %v520
        %v1780 = vunpack.c.h.b16 %v520
        %v1781 = vunpack.c.l.b16 %v521
        %v1782 = vunpack.c.h.b16 %v521
        %v1783 = vunpack.c.l.b16 %v522
        %v1784 = vunpack.c.h.b16 %v522
        %v1785 = vunpack.c.l.b16 %v523
        %v1786 = vunpack.c.h.b16 %v523
        %v1787 = vunpack.c.l.b16 %v524
        %v1788 = vunpack.c.h.b16 %v524
        %v1789 = vunpack.c.l.b16 %v525
        %v1790 = vunpack.c.h.b16 %v525
        %v1791 = vunpack.c.l.b16 %v526
        %v1792 = vunpack.c.h.b16 %v526
        %v1793 = vunpack.c.l.b16 %v527
        %v1794 = vunpack.c.h.b16 %v527
        %v1795 = vunpack.c.l.b16 %v528
        %v1796 = vunpack.c.h.b16 %v528
        %v1797 = vunpack.c.l.b16 %v529
        %v1798 = vunpack.c.h.b16 %v529
        %v1799 = vunpack.c.l.b16 %v530
        %v1800 = vunpack.c.h.b16 %v530
        %v1801 = vunpack.c.l.b16 %v531
        %v1802 = vunpack.c.h.b16 %v531
        %v1803 = vunpack.c.l.b16 %v532
        %v1804 = vunpack.c.h.b16 %v532
        %v1805 = vunpack.c.l.b16 %v533
        %v1806 = vunpack.c.h.b16 %v533
        %v1807 = vunpack.c.l.b16 %v534
        %v1808 = vunpack.c.h.b16 %v534
        %v1809 = vunpack.c.l.b16 %v535
        %v1810 = vunpack.c.h.b16 %v535
        %v1811 = vunpack.c.l.b16 %v536
        %v1812 = vunpack.c.h.b16 %v536
        %v1813 = vunpack.c.l.b16 %v537
        %v1814 = vunpack.c.h.b16 %v537
        %v1815 = vunpack.c.l.b16 %v538
        %v1816 = vunpack.c.h.b16 %v538
        %v1817 = vunpack.c.l.b16 %v539
        %v1818 = vunpack.c.h.b16 %v539
        %v1819 = vunpack.c.l.b16 %v540
        %v1820 = vunpack.c.h.b16 %v540
        %v1821 = vunpack.c.l.b16 %v541
        %v1822 = vunpack.c.h.b16 %v541
        %v1823 = vunpack.c.l.b16 %v542
        %v1824 = vunpack.c.h.b16 %v542
        %v1825 = vunpack.c.l.b16 %v543
        %v1826 = vunpack.c.h.b16 %v543
        %v1827 = vunpack.c.l.b16 %v544
        %v1828 = vunpack.c.h.b16 %v544
        %v1829 = vunpack.c.l.b16 %v545
        %v1830 = vunpack.c.h.b16 %v545
        %v1831 = vunpack.c.l.b16 %v546
        %v1832 = vunpack.c.h.b16 %v546
        %v1833 = vunpack.c.l.b16 %v547
        %v1834 = vunpack.c.h.b16 %v547
        %v1835 = vunpack.c.l.b16 %v548
        %v1836 = vunpack.c.h.b16 %v548
        %v1837 = vunpack.c.l.b16 %v549
        %v1838 = vunpack.c.h.b16 %v549
        %v1839 = vunpack.c.l.b16 %v550
        %v1840 = vunpack.c.h.b16 %v550
        %v1841 = vunpack.c.l.b16 %v551
        %v1842 = vunpack.c.h.b16 %v551
        %v1843 = vunpack.c.l.b16 %v552
        %v1844 = vunpack.c.h.b16 %v552
        %v1845 = vunpack.c.l.b16 %v553
        %v1846 = vunpack.c.h.b16 %v553
        %v1847 = vunpack.c.l.b16 %v554
        %v1848 = vunpack.c.h.b16 %v554
        %v1849 = vunpack.c.l.b16 %v555
        %v1850 = vunpack.c.h.b16 %v555
        %v1851 = vunpack.c.l.b16 %v556
        %v1852 = vunpack.c.h.b16 %v556
        %v1853 = vunpack.c.l.b16 %v557
        %v1854 = vunpack.c.h.b16 %v557
        %v1855 = vunpack.c.l.b16 %v558
        %v1856 = vunpack.c.h.b16 %v558
        %v1857 = vunpack.c.l.b16 %v559
        %v1858 = vunpack.c.h.b16 %v559
        %v1859 = vunpack.c.l.b16 %v560
        %v1860 = vunpack.c.h.b16 %v560
        %v1861 = vunpack.c.l.b16 %v561
        %v1862 = vunpack.c.h.b16 %v561
        %v1863 = vunpack.c.l.b16 %v562
        %v1864 = vunpack.c.h.b16 %v562
        %v1865 = vunpack.c.l.b16 %v563
        %v1866 = vunpack.c.h.b16 %v563
        %v1867 = vunpack.c.l.b16 %v564
        %v1868 = vunpack.c.h.b16 %v564
        %v1869 = vunpack.c.l.b16 %v565
        %v1870 = vunpack.c.h.b16 %v565
        %v1871 = vunpack.c.l.b16 %v566
        %v1872 = vunpack.c.h.b16 %v566
        %v1873 = vunpack.c.l.b16 %v567
        %v1874 = vunpack.c.h.b16 %v567
        %v1875 = vunpack.c.l.b16 %v568
        %v1876 = vunpack.c.h.b16 %v568
        %v1877 = vunpack.c.l.b16 %v569
        %v1878 = vunpack.c.h.b16 %v569
        %v1879 = vunpack.c.l.b16 %v570
        %v1880 = vunpack.c.h.b16 %v570
        %v1881 = vunpack.c.l.b16 %v571
        %v1882 = vunpack.c.h.b16 %v571
        %v1883 = vunpack.c.l.b16 %v572
        %v1884 = vunpack.c.h.b16 %v572
        %v1885 = vunpack.c.l.b16 %v573
        %v1886 = vunpack.c.h.b16 %v573
        %v1887 = vunpack.c.l.b16 %v574
        %v1888 = vunpack.c.h.b16 %v574
        %v1889 = vunpack.c.l.b16 %v575
        %v1890 = vunpack.c.h.b16 %v575
        %v1891 = vunpack.c.l.b16 %v576
        %v1892 = vunpack.c.h.b16 %v576
        %v1893 = vunpack.c.l.b16 %v577
        %v1894 = vunpack.c.h.b16 %v577
        %v1895 = vunpack.c.l.b16 %v578
        %v1896 = vunpack.c.h.b16 %v578
        %v1897 = vunpack.c.l.b16 %v579
        %v1898 = vunpack.c.h.b16 %v579
        %v1899 = vunpack.c.l.b16 %v580
        %v1900 = vunpack.c.h.b16 %v580
        %v1901 = vunpack.c.l.b16 %v581
        %v1902 = vunpack.c.h.b16 %v581
        %v1903 = vunpack.c.l.b16 %v582
        %v1904 = vunpack.c.h.b16 %v582
        %v1905 = vunpack.c.l.b16 %v583
        %v1906 = vunpack.c.h.b16 %v583
        %v1907 = vunpack.c.l.b16 %v584
        %v1908 = vunpack.c.h.b16 %v584
        %v1909 = vunpack.c.l.b16 %v585
        %v1910 = vunpack.c.h.b16 %v585
        %v1911 = vunpack.c.l.b16 %v586
        %v1912 = vunpack.c.h.b16 %v586
        %v1913 = vunpack.c.l.b16 %v587
        %v1914 = vunpack.c.h.b16 %v587
        %v1915 = vunpack.c.l.b16 %v588
        %v1916 = vunpack.c.h.b16 %v588
        %v1917 = vunpack.c.l.b16 %v589
        %v1918 = vunpack.c.h.b16 %v589
        %v1919 = vunpack.c.l.b16 %v590
        %v1920 = vunpack.c.h.b16 %v590
        %v1921 = vunpack.c.l.b16 %v591
        %v1922 = vunpack.c.h.b16 %v591
        %v1923 = vunpack.c.l.b16 %v592
        %v1924 = vunpack.c.h.b16 %v592
        %v1925 = vunpack.c.l.b16 %v593
        %v1926 = vunpack.c.h.b16 %v593
        %v1927 = vunpack.c.l.b16 %v594
        %v1928 = vunpack.c.h.b16 %v594
        %v1929 = vunpack.c.l.b16 %v595
        %v1930 = vunpack.c.h.b16 %v595
        %v1931 = vunpack.c.l.b16 %v596
        %v1932 = vunpack.c.h.b16 %v596
        %v1933 = vunpack.c.l.b16 %v597
        %v1934 = vunpack.c.h.b16 %v597
        %v1935 = vunpack.c.l.b16 %v598
        %v1936 = vunpack.c.h.b16 %v598
        %v1937 = vunpack.c.l.b16 %v599
        %v1938 = vunpack.c.h.b16 %v599
        %v1939 = vunpack.c.l.b16 %v600
        %v1940 = vunpack.c.h.b16 %v600
        %v1941 = vunpack.c.l.b16 %v601
        %v1942 = vunpack.c.h.b16 %v601
        %v1943 = vunpack.c.l.b16 %v602
        %v1944 = vunpack.c.h.b16 %v602
        %v1945 = vunpack.c.l.b16 %v603
        %v1946 = vunpack.c.h.b16 %v603
        %v1947 = vunpack.c.l.b16 %v604
        %v1948 = vunpack.c.h.b16 %v604
        %v1949 = vunpack.c.l.b16 %v605
        %v1950 = vunpack.c.h.b16 %v605
        %v1951 = vunpack.c.l.b16 %v606
        %v1952 = vunpack.c.h.b16 %v606
        %v1953 = vunpack.c.l.b16 %v607
        %v1954 = vunpack.c.h.b16 %v607
        %v1955 = vunpack.c.l.b16 %v608
        %v1956 = vunpack.c.h.b16 %v608
        %v1957 = vunpack.c.l.b16 %v609
        %v1958 = vunpack.c.h.b16 %v609
        %v1959 = vunpack.c.l.b16 %v610
        %v1960 = vunpack.c.h.b16 %v610
        %v1961 = vunpack.c.l.b16 %v611
        %v1962 = vunpack.c.h.b16 %v611
        %v1963 = vunpack.c.l.b16 %v612
        %v1964 = vunpack.c.h.b16 %v612
        %v1965 = vunpack.c.l.b16 %v613
        %v1966 = vunpack.c.h.b16 %v613
        %v1967 = vunpack.c.l.b16 %v614
        %v1968 = vunpack.c.h.b16 %v614
        %v1969 = vunpack.c.l.b16 %v615
        %v1970 = vunpack.c.h.b16 %v615
        %v1971 = vunpack.c.l.b16 %v616
        %v1972 = vunpack.c.h.b16 %v616
        %v1973 = vunpack.c.l.b16 %v617
        %v1974 = vunpack.c.h.b16 %v617
        %v1975 = vunpack.c.l.b16 %v618
        %v1976 = vunpack.c.h.b16 %v618
        %v1977 = vunpack.c.l.b16 %v619
        %v1978 = vunpack.c.h.b16 %v619
        %v1979 = vunpack.c.l.b16 %v620
        %v1980 = vunpack.c.h.b16 %v620
        %v1981 = vpack.c.b16 %v1695, %v1693
        %v1982 = vpack.c.b16 %v1696, %v1694
        %v1983 = vpack.c.b16 %v1699, %v1697
        %v1984 = vpack.c.b16 %v1700, %v1698
        %v1985 = vpack.c.b16 %v1703, %v1701
        %v1986 = vpack.c.b16 %v1704, %v1702
        %v1987 = vpack.c.b16 %v1707, %v1705
        %v1988 = vpack.c.b16 %v1708, %v1706
        %v1989 = vpack.c.b16 %v1711, %v1709
        %v1990 = vpack.c.b16 %v1712, %v1710
        %v1991 = vpack.c.b16 %v1715, %v1713
        %v1992 = vpack.c.b16 %v1716, %v1714
        %v1993 = vpack.c.b16 %v1719, %v1717
        %v1994 = vpack.c.b16 %v1720, %v1718
        %v1995 = vpack.c.b16 %v1723, %v1721
        %v1996 = vpack.c.b16 %v1724, %v1722
        %v1997 = vpack.c.b16 %v1727, %v1725
        %v1998 = vpack.c.b16 %v1728, %v1726
        %v1999 = vpack.c.b16 %v1731, %v1729
        %v2000 = vpack.c.b16 %v1732, %v1730
        %v2001 = vpack.c.b16 %v1735, %v1733
        %v2002 = vpack.c.b16 %v1736, %v1734
        %v2003 = vpack.c.b16 %v1739, %v1737
        %v2004 = vpack.c.b16 %v1740, %v1738
        %v2005 = vpack.c.b16 %v1743, %v1741
        %v2006 = vpack.c.b16 %v1744, %v1742
        %v2007 = vpack.c.b16 %v1747, %v1745
        %v2008 = vpack.c.b16 %v1748, %v1746
        %v2009 = vpack.c.b16 %v1751, %v1749
        %v2010 = vpack.c.b16 %v1752, %v1750
        %v2011 = vpack.c.b16 %v1755, %v1753
        %v2012 = vpack.c.b16 %v1756, %v1754
        %v2013 = vpack.c.b16 %v1759, %v1757
        %v2014 = vpack.c.b16 %v1760, %v1758
        %v2015 = vpack.c.b16 %v1763, %v1761
        %v2016 = vpack.c.b16 %v1764, %v1762
        %v2017 = vpack.c.b16 %v1767, %v1765
        %v2018 = vpack.c.b16 %v1768, %v1766
        %v2019 = vpack.c.b16 %v1771, %v1769
        %v2020 = vpack.c.b16 %v1772, %v1770
        %v2021 = vpack.c.b16 %v1775, %v1773
        %v2022 = vpack.c.b16 %v1776, %v1774
        %v2023 = vpack.c.b16 %v1779, %v1777
        %v2024 = vpack.c.b16 %v1780, %v1778
        %v2025 = vpack.c.b16 %v1783, %v1781
        %v2026 = vpack.c.b16 %v1784, %v1782
        %v2027 = vpack.c.b16 %v1787, %v1785
        %v2028 = vpack.c.b16 %v1788, %v1786
        %v2029 = vpack.c.b16 %v1791, %v1789
        %v2030 = vpack.c.b16 %v1792, %v1790
        %v2031 = vpack.c.b16 %v1795, %v1793
        %v2032 = vpack.c.b16 %v1796, %v1794
        %v2033 = vpack.c.b16 %v1799, %v1797
        %v2034 = vpack.c.b16 %v1800, %v1798
        %v2035 = vpack.c.b16 %v1803, %v1801
        %v2036 = vpack.c.b16 %v1804, %v1802
        %v2037 = vpack.c.b16 %v1807, %v1805
        %v2038 = vpack.c.b16 %v1808, %v1806
        %v2039 = vpack.c.b16 %v1811, %v1809
        %v2040 = vpack.c.b16 %v1812, %v1810
        %v2041 = vpack.c.b16 %v1815, %v1813
        %v2042 = vpack.c.b16 %v1816, %v1814
        %v2043 = vpack.c.b16 %v1819, %v1817
        %v2044 = vpack.c.b16 %v1820, %v1818
        %v2045 = vpack.c.b16 %v1823, %v1821
        %v2046 = vpack.c.b16 %v1824, %v1822
        %v2047 = vpack.c.b16 %v1827, %v1825
        %v2048 = vpack.c.b16 %v1828, %v1826
        %v2049 = vpack.c.b16 %v1831, %v1829
        %v2050 = vpack.c.b16 %v1832, %v1830
        %v2051 = vpack.c.b16 %v1835, %v1833
        %v2052 = vpack.c.b16 %v1836, %v1834
        %v2053 = vpack.c.b16 %v1839, %v1837
        %v2054 = vpack.c.b16 %v1840, %v1838
        %v2055 = vpack.c.b16 %v1843, %v1841
        %v2056 = vpack.c.b16 %v1844, %v1842
        %v2057 = vpack.c.b16 %v1847, %v1845
        %v2058 = vpack.c.b16 %v1848, %v1846
        %v2059 = vpack.c.b16 %v1851, %v1849
        %v2060 = vpack.c.b16 %v1852, %v1850
        %v2061 = vpack.c.b16 %v1855, %v1853
        %v2062 = vpack.c.b16 %v1856, %v1854
        %v2063 = vpack.c.b16 %v1859, %v1857
        %v2064 = vpack.c.b16 %v1860, %v1858
        %v2065 = vpack.c.b16 %v1863, %v1861
        %v2066 = vpack.c.b16 %v1864, %v1862
        %v2067 = vpack.c.b16 %v1867, %v1865
        %v2068 = vpack.c.b16 %v1868, %v1866
        %v2069 = vpack.c.b16 %v1871, %v1869
        %v2070 = vpack.c.b16 %v1872, %v1870
        %v2071 = vpack.c.b16 %v1875, %v1873
        %v2072 = vpack.c.b16 %v1876, %v1874
        %v2073 = vpack.c.b16 %v1879, %v1877
        %v2074 = vpack.c.b16 %v1880, %v1878
        %v2075 = vpack.c.b16 %v1883, %v1881
        %v2076 = vpack.c.b16 %v1884, %v1882
        %v2077 = vpack.c.b16 %v1887, %v1885
        %v2078 = vpack.c.b16 %v1888, %v1886
        %v2079 = vpack.c.b16 %v1891, %v1889
        %v2080 = vpack.c.b16 %v1892, %v1890
        %v2081 = vpack.c.b16 %v1895, %v1893
        %v2082 = vpack.c.b16 %v1896, %v1894
        %v2083 = vpack.c.b16 %v1899, %v1897
        %v2084 = vpack.c.b16 %v1900, %v1898
        %v2085 = vpack.c.b16 %v1903, %v1901
        %v2086 = vpack.c.b16 %v1904, %v1902
        %v2087 = vpack.c.b16 %v1907, %v1905
        %v2088 = vpack.c.b16 %v1908, %v1906
        %v2089 = vpack.c.b16 %v1911, %v1909
        %v2090 = vpack.c.b16 %v1912, %v1910
        %v2091 = vpack.c.b16 %v1915, %v1913
        %v2092 = vpack.c.b16 %v1916, %v1914
        %v2093 = vpack.c.b16 %v1919, %v1917
        %v2094 = vpack.c.b16 %v1920, %v1918
        %v2095 = vpack.c.b16 %v1923, %v1921
        %v2096 = vpack.c.b16 %v1924, %v1922
        %v2097 = vpack.c.b16 %v1927, %v1925
        %v2098 = vpack.c.b16 %v1928, %v1926
        %v2099 = vpack.c.b16 %v1931, %v1929
        %v2100 = vpack.c.b16 %v1932, %v1930
        %v2101 = vpack.c.b16 %v1935, %v1933
        %v2102 = vpack.c.b16 %v1936, %v1934
        %v2103 = vpack.c.b16 %v1939, %v1937
        %v2104 = vpack.c.b16 %v1940, %v1938
        %v2105 = vpack.c.b16 %v1943, %v1941
        %v2106 = vpack.c.b16 %v1944, %v1942
        %v2107 = vpack.c.b16 %v1947, %v1945
        %v2108 = vpack.c.b16 %v1948, %v1946
        %v2109 = vpack.c.b16 %v1951, %v1949
        %v2110 = vpack.c.b16 %v1952, %v1950
        %v2111 = vpack.c.b16 %v1955, %v1953
        %v2112 = vpack.c.b16 %v1956, %v1954
        %v2113 = vpack.c.b16 %v1959, %v1957
        %v2114 = vpack.c.b16 %v1960, %v1958
        %v2115 = vpack.c.b16 %v1963, %v1961
        %v2116 = vpack.c.b16 %v1964, %v1962
        %v2117 = vpack.c.b16 %v1967, %v1965
        %v2118 = vpack.c.b16 %v1968, %v1966
        %v2119 = vpack.c.b16 %v1971, %v1969
        %v2120 = vpack.c.b16 %v1972, %v1970
        %v2121 = vpack.c.b16 %v1975, %v1973
        %v2122 = vpack.c.b16 %v1976, %v1974
        %v2123 = vpack.c.b16 %v1979, %v1977
        %v2124 = vpack.c.b16 %v1980, %v1978
        %2269 = vmatprep.subr.bf16.mxu0 %v1982
        %2270 = vmatpush1.bf16.msra.mxu0 %v1981
        %2271 = vmatprep.subr.bf16.mxu0 %v1984
        %2272 = vmatpush1.bf16.msra.mxu0 %v1983
        %2273 = vmatprep.subr.bf16.mxu0 %v1986
        %2274 = vmatpush1.bf16.msra.mxu0 %v1985
        %2275 = vmatprep.subr.bf16.mxu0 %v1988
        %2276 = vmatpush1.bf16.msra.mxu0 %v1987
        %2277 = vmatprep.subr.bf16.mxu0 %v1990
        %2278 = vmatpush1.bf16.msra.mxu0 %v1989
        %2279 = vmatprep.subr.bf16.mxu0 %v1992
        %2280 = vmatpush1.bf16.msra.mxu0 %v1991
        %2281 = vmatprep.subr.bf16.mxu0 %v1994
        %2282 = vmatpush1.bf16.msra.mxu0 %v1993
        %2283 = vmatprep.subr.bf16.mxu0 %v1996
        %2284 = vmatpush1.bf16.msra.mxu0 %v1995
        %2285 = vmatprep.subr.bf16.mxu0 %v1998
        %2286 = vmatpush1.bf16.msra.mxu0 %v1997
        %2287 = vmatprep.subr.bf16.mxu0 %v2000
        %2288 = vmatpush1.bf16.msra.mxu0 %v1999
        %2289 = vmatprep.subr.bf16.mxu0 %v2002
        %2290 = vmatpush1.bf16.msra.mxu0 %v2001
        %2291 = vmatprep.subr.bf16.mxu0 %v2004
        %2292 = vmatpush1.bf16.msra.mxu0 %v2003
        %2293 = vmatprep.subr.bf16.mxu0 %v2006
        %2294 = vmatpush1.bf16.msra.mxu0 %v2005
        %2295 = vmatprep.subr.bf16.mxu0 %v2008
        %2296 = vmatpush1.bf16.msra.mxu0 %v2007
        %2297 = vmatprep.subr.bf16.mxu0 %v2010
        %2298 = vmatpush1.bf16.msra.mxu0 %v2009
        %2299 = vmatprep.subr.bf16.mxu0 %v2012
        %2300 = vmatpush1.bf16.msra.mxu0 %v2011
        %2301 = vmatprep.mubr.bf16.mxu0 %v1262
        %2302 = vmatmul.mubr.bf16.gmra.mrb[0].mxu0 %v1261
        %v2303 = vpop.f32.mrb[0].mxu0
        %v2304 = vadd.f32 %v656, %v2303
        %v2305 = vpop.f32.mrb[0].mxu0
        %v2306 = vadd.f32 %v656, %v2305
        %v2307 = vpop.f32.mrb[0].mxu0
        %v2308 = vadd.f32 %v661, %v2307
        %v2309 = vpop.f32.mrb[0].mxu0
        %v2310 = vadd.f32 %v661, %v2309
        %2311 = vmatprep.mubr.bf16.mxu0 %v1271
        %2312 = vmatmul.mubr.bf16.gmra.mrb[0].mxu0 %v1270
        %v2313 = vpop.f32.mrb[0].mxu0
        %v2314 = vadd.f32 %v666, %v2313
        %v2315 = vpop.f32.mrb[0].mxu0
        %v2316 = vadd.f32 %v666, %v2315
        %v2317 = vpop.f32.mrb[0].mxu0
        %v2318 = vadd.f32 %v671, %v2317
        %v2319 = vpop.f32.mrb[0].mxu0
        %v2320 = vadd.f32 %v671, %v2319
        %2321 = vmatprep.mubr.bf16.mxu0 %v1280
        %2322 = vmatmul.mubr.bf16.gmra.mrb[0].mxu0 %v1279
        %v2323 = vpop.f32.mrb[0].mxu0
        %v2324 = vadd.f32 %v676, %v2323
        %v2325 = vpop.f32.mrb[0].mxu0
        %v2326 = vadd.f32 %v676, %v2325
        %v2327 = vpop.f32.mrb[0].mxu0
        %v2328 = vadd.f32 %v681, %v2327
        %v2329 = vpop.f32.mrb[0].mxu0
        %v2330 = vadd.f32 %v681, %v2329
        %2331 = vmatprep.mubr.bf16.mxu0 %v1289
        %2332 = vmatmul.mubr.bf16.gmra.mrb[0].mxu0 %v1288
        %v2333 = vpop.f32.mrb[0].mxu0
        %v2334 = vadd.f32 %v686, %v2333
        %v2335 = vpop.f32.mrb[0].mxu0
        %v2336 = vadd.f32 %v686, %v2335
        %v2337 = vpop.f32.mrb[0].mxu0
        %v2338 = vadd.f32 %v691, %v2337
        %v2339 = vpop.f32.mrb[0].mxu0
        %v2340 = vadd.f32 %v691, %v2339
        %2341 = vmatprep.mubr.bf16.mxu0 %v1298
        %2342 = vmatmul.mubr.bf16.gmra.mrb[0].mxu0 %v1297
        %v2343 = vpop.f32.mrb[0].mxu0
        %v2344 = vadd.f32 %v696, %v2343
        %v2345 = vpop.f32.mrb[0].mxu0
        %v2346 = vadd.f32 %v696, %v2345
        %v2347 = vpop.f32.mrb[0].mxu0
        %v2348 = vadd.f32 %v701, %v2347
        %v2349 = vpop.f32.mrb[0].mxu0
        %v2350 = vadd.f32 %v701, %v2349
        %2351 = vmatprep.mubr.bf16.mxu0 %v1307
        %2352 = vmatmul.mubr.bf16.gmra.mrb[0].mxu0 %v1306
        %v2353 = vpop.f32.mrb[0].mxu0
        %v2354 = vadd.f32 %v706, %v2353
        %v2355 = vpop.f32.mrb[0].mxu0
        %v2356 = vadd.f32 %v706, %v2355
        %v2357 = vpop.f32.mrb[0].mxu0
        %v2358 = vadd.f32 %v711, %v2357
        %v2359 = vpop.f32.mrb[0].mxu0
        %v2360 = vadd.f32 %v711, %v2359
        %2361 = vmatprep.mubr.bf16.mxu0 %v1316
        %2362 = vmatmul.mubr.bf16.gmra.mrb[0].mxu0 %v1315
        %v2363 = vpop.f32.mrb[0].mxu0
        %v2364 = vadd.f32 %v716, %v2363
        %v2365 = vpop.f32.mrb[0].mxu0
        %v2366 = vadd.f32 %v716, %v2365
        %v2367 = vpop.f32.mrb[0].mxu0
        %v2368 = vadd.f32 %v721, %v2367
        %v2369 = vpop.f32.mrb[0].mxu0
        %v2370 = vadd.f32 %v721, %v2369
        %2371 = vmatprep.mubr.bf16.mxu0 %v1325
        %2372 = vmatmul.mubr.bf16.gmra.mrb[0].mxu0 %v1324
        %v2373 = vpop.f32.mrb[0].mxu0
        %v2374 = vadd.f32 %v726, %v2373
        %v2375 = vpop.f32.mrb[0].mxu0
        %v2376 = vadd.f32 %v726, %v2375
        %v2377 = vpop.f32.mrb[0].mxu0
        %v2378 = vadd.f32 %v731, %v2377
        %v2379 = vpop.f32.mrb[0].mxu0
        %v2380 = vadd.f32 %v731, %v2379
        %2381 = vmatprep.mubr.bf16.mxu0 %v1334
        %2382 = vmatmul.mubr.bf16.gmra.mrb[0].mxu0 %v1333
        %v2383 = vpop.f32.mrb[0].mxu0
        %v2384 = vadd.f32 %v736, %v2383
        %v2385 = vpop.f32.mrb[0].mxu0
        %v2386 = vadd.f32 %v736, %v2385
        %v2387 = vpop.f32.mrb[0].mxu0
        %v2388 = vadd.f32 %v741, %v2387
        %v2389 = vpop.f32.mrb[0].mxu0
        %v2390 = vadd.f32 %v741, %v2389
        %2391 = vmatprep.mubr.bf16.mxu0 %v1343
        %2392 = vmatmul.mubr.bf16.gmra.mrb[0].mxu0 %v1342
        %v2393 = vpop.f32.mrb[0].mxu0
        %v2394 = vadd.f32 %v746, %v2393
        %v2395 = vpop.f32.mrb[0].mxu0
        %v2396 = vadd.f32 %v746, %v2395
        %v2397 = vpop.f32.mrb[0].mxu0
        %v2398 = vadd.f32 %v751, %v2397
        %v2399 = vpop.f32.mrb[0].mxu0
        %v2400 = vadd.f32 %v751, %v2399
        %2401 = vmatprep.mubr.bf16.mxu0 %v1352
        %2402 = vmatmul.mubr.bf16.gmra.mrb[0].mxu0 %v1351
        %v2403 = vpop.f32.mrb[0].mxu0
        %v2404 = vadd.f32 %v756, %v2403
        %v2405 = vpop.f32.mrb[0].mxu0
        %v2406 = vadd.f32 %v756, %v2405
        %v2407 = vpop.f32.mrb[0].mxu0
        %v2408 = vadd.f32 %v761, %v2407
        %v2409 = vpop.f32.mrb[0].mxu0
        %v2410 = vadd.f32 %v761, %v2409
        %2411 = vmatprep.mubr.bf16.mxu0 %v1361
        %2412 = vmatmul.mubr.bf16.gmra.mrb[0].mxu0 %v1360
        %v2413 = vpop.f32.mrb[0].mxu0
        %v2414 = vadd.f32 %v766, %v2413
        %v2415 = vpop.f32.mrb[0].mxu0
        %v2416 = vadd.f32 %v766, %v2415
        %v2417 = vpop.f32.mrb[0].mxu0
        %v2418 = vadd.f32 %v771, %v2417
        %v2419 = vpop.f32.mrb[0].mxu0
        %v2420 = vadd.f32 %v771, %v2419
        %2421 = vmatprep.mubr.bf16.mxu0 %v1370
        %2422 = vmatmul.mubr.bf16.gmra.mrb[0].mxu0 %v1369
        %v2423 = vpop.f32.mrb[0].mxu0
        %v2424 = vadd.f32 %v776, %v2423
        %v2425 = vpop.f32.mrb[0].mxu0
        %v2426 = vadd.f32 %v776, %v2425
        %v2427 = vpop.f32.mrb[0].mxu0
        %v2428 = vadd.f32 %v781, %v2427
        %v2429 = vpop.f32.mrb[0].mxu0
        %v2430 = vadd.f32 %v781, %v2429
        %2431 = vmatprep.mubr.bf16.mxu0 %v1379
        %2432 = vmatmul.mubr.bf16.gmra.mrb[0].mxu0 %v1378
        %v2433 = vpop.f32.mrb[0].mxu0
        %v2434 = vadd.f32 %v786, %v2433
        %v2435 = vpop.f32.mrb[0].mxu0
        %v2436 = vadd.f32 %v786, %v2435
        %v2437 = vpop.f32.mrb[0].mxu0
        %v2438 = vadd.f32 %v791, %v2437
        %v2439 = vpop.f32.mrb[0].mxu0
        %v2440 = vadd.f32 %v791, %v2439
        %2441 = vmatprep.mubr.bf16.mxu0 %v1388
        %2442 = vmatmul.mubr.bf16.gmra.mrb[0].mxu0 %v1387
        %v2443 = vpop.f32.mrb[0].mxu0
        %v2444 = vadd.f32 %v796, %v2443
        %v2445 = vpop.f32.mrb[0].mxu0
        %v2446 = vadd.f32 %v796, %v2445
        %v2447 = vpop.f32.mrb[0].mxu0
        %v2448 = vadd.f32 %v801, %v2447
        %v2449 = vpop.f32.mrb[0].mxu0
        %v2450 = vadd.f32 %v801, %v2449
        %2451 = vmatprep.mubr.bf16.mxu0 %v1397
        %2452 = vmatmul.mubr.bf16.gmra.mrb[0].mxu0 %v1396
        %v2453 = vpop.f32.mrb[0].mxu0
        %v2454 = vadd.f32 %v806, %v2453
        %v2455 = vpop.f32.mrb[0].mxu0
        %v2456 = vadd.f32 %v806, %v2455
        %v2457 = vpop.f32.mrb[0].mxu0
        %v2458 = vadd.f32 %v811, %v2457
        %v2459 = vpop.f32.mrb[0].mxu0
        %v2460 = vadd.f32 %v811, %v2459
        %2461 = vdwg.mxu0
        %2462 = vmatprep.subr.bf16.mxu0 %v2014
        %2463 = vmatpush1.bf16.msra.mxu0 %v2013
        %2464 = vmatprep.subr.bf16.mxu0 %v2016
        %2465 = vmatpush1.bf16.msra.mxu0 %v2015
        %2466 = vmatprep.subr.bf16.mxu0 %v2018
        %2467 = vmatpush1.bf16.msra.mxu0 %v2017
        %2468 = vmatprep.subr.bf16.mxu0 %v2020
        %2469 = vmatpush1.bf16.msra.mxu0 %v2019
        %2470 = vmatprep.subr.bf16.mxu0 %v2022
        %2471 = vmatpush1.bf16.msra.mxu0 %v2021
        %2472 = vmatprep.subr.bf16.mxu0 %v2024
        %2473 = vmatpush1.bf16.msra.mxu0 %v2023
        %2474 = vmatprep.subr.bf16.mxu0 %v2026
        %2475 = vmatpush1.bf16.msra.mxu0 %v2025
        %2476 = vmatprep.subr.bf16.mxu0 %v2028
        %2477 = vmatpush1.bf16.msra.mxu0 %v2027
        %2478 = vmatprep.subr.bf16.mxu0 %v2030
        %2479 = vmatpush1.bf16.msra.mxu0 %v2029
        %2480 = vmatprep.subr.bf16.mxu0 %v2032
        %2481 = vmatpush1.bf16.msra.mxu0 %v2031
        %2482 = vmatprep.subr.bf16.mxu0 %v2034
        %2483 = vmatpush1.bf16.msra.mxu0 %v2033
        %2484 = vmatprep.subr.bf16.mxu0 %v2036
        %2485 = vmatpush1.bf16.msra.mxu0 %v2035
        %2486 = vmatprep.subr.bf16.mxu0 %v2038
        %2487 = vmatpush1.bf16.msra.mxu0 %v2037
        %2488 = vmatprep.subr.bf16.mxu0 %v2040
        %2489 = vmatpush1.bf16.msra.mxu0 %v2039
        %2490 = vmatprep.subr.bf16.mxu0 %v2042
        %2491 = vmatpush1.bf16.msra.mxu0 %v2041
        %2492 = vmatprep.subr.bf16.mxu0 %v2044
        %2493 = vmatpush1.bf16.msra.mxu0 %v2043
        %2494 = vmatprep.mubr.bf16.mxu0 %v1264
        %2495 = vmatmul.mubr.bf16.gmra.mrb[0].mxu0 %v1263
        %v2496 = vpop.f32.mrb[0].mxu0
        %v2497 = vadd.f32 %v2304, %v2496
        %v2498 = vpop.f32.mrb[0].mxu0
        %v2499 = vadd.f32 %v2306, %v2498
        %v2500 = vpop.f32.mrb[0].mxu0
        %v2501 = vadd.f32 %v2308, %v2500
        %v2502 = vpop.f32.mrb[0].mxu0
        %v2503 = vadd.f32 %v2310, %v2502
        %2504 = vmatprep.mubr.bf16.mxu0 %v1273
        %2505 = vmatmul.mubr.bf16.gmra.mrb[0].mxu0 %v1272
        %v2506 = vpop.f32.mrb[0].mxu0
        %v2507 = vadd.f32 %v2314, %v2506
        %v2508 = vpop.f32.mrb[0].mxu0
        %v2509 = vadd.f32 %v2316, %v2508
        %v2510 = vpop.f32.mrb[0].mxu0
        %v2511 = vadd.f32 %v2318, %v2510
        %v2512 = vpop.f32.mrb[0].mxu0
        %v2513 = vadd.f32 %v2320, %v2512
        %2514 = vmatprep.mubr.bf16.mxu0 %v1282
        %2515 = vmatmul.mubr.bf16.gmra.mrb[0].mxu0 %v1281
        %v2516 = vpop.f32.mrb[0].mxu0
        %v2517 = vadd.f32 %v2324, %v2516
        %v2518 = vpop.f32.mrb[0].mxu0
        %v2519 = vadd.f32 %v2326, %v2518
        %v2520 = vpop.f32.mrb[0].mxu0
        %v2521 = vadd.f32 %v2328, %v2520
        %v2522 = vpop.f32.mrb[0].mxu0
        %v2523 = vadd.f32 %v2330, %v2522
        %2524 = vmatprep.mubr.bf16.mxu0 %v1291
        %2525 = vmatmul.mubr.bf16.gmra.mrb[0].mxu0 %v1290
        %v2526 = vpop.f32.mrb[0].mxu0
        %v2527 = vadd.f32 %v2334, %v2526
        %v2528 = vpop.f32.mrb[0].mxu0
        %v2529 = vadd.f32 %v2336, %v2528
        %v2530 = vpop.f32.mrb[0].mxu0
        %v2531 = vadd.f32 %v2338, %v2530
        %v2532 = vpop.f32.mrb[0].mxu0
        %v2533 = vadd.f32 %v2340, %v2532
        %2534 = vmatprep.mubr.bf16.mxu0 %v1300
        %2535 = vmatmul.mubr.bf16.gmra.mrb[0].mxu0 %v1299
        %v2536 = vpop.f32.mrb[0].mxu0
        %v2537 = vadd.f32 %v2344, %v2536
        %v2538 = vpop.f32.mrb[0].mxu0
        %v2539 = vadd.f32 %v2346, %v2538
        %v2540 = vpop.f32.mrb[0].mxu0
        %v2541 = vadd.f32 %v2348, %v2540
        %v2542 = vpop.f32.mrb[0].mxu0
        %v2543 = vadd.f32 %v2350, %v2542
        %2544 = vmatprep.mubr.bf16.mxu0 %v1309
        %2545 = vmatmul.mubr.bf16.gmra.mrb[0].mxu0 %v1308
        %v2546 = vpop.f32.mrb[0].mxu0
        %v2547 = vadd.f32 %v2354, %v2546
        %v2548 = vpop.f32.mrb[0].mxu0
        %v2549 = vadd.f32 %v2356, %v2548
        %v2550 = vpop.f32.mrb[0].mxu0
        %v2551 = vadd.f32 %v2358, %v2550
        %v2552 = vpop.f32.mrb[0].mxu0
        %v2553 = vadd.f32 %v2360, %v2552
        %2554 = vmatprep.mubr.bf16.mxu0 %v1318
        %2555 = vmatmul.mubr.bf16.gmra.mrb[0].mxu0 %v1317
        %v2556 = vpop.f32.mrb[0].mxu0
        %v2557 = vadd.f32 %v2364, %v2556
        %v2558 = vpop.f32.mrb[0].mxu0
        %v2559 = vadd.f32 %v2366, %v2558
        %v2560 = vpop.f32.mrb[0].mxu0
        %v2561 = vadd.f32 %v2368, %v2560
        %v2562 = vpop.f32.mrb[0].mxu0
        %v2563 = vadd.f32 %v2370, %v2562
        %2564 = vmatprep.mubr.bf16.mxu0 %v1327
        %2565 = vmatmul.mubr.bf16.gmra.mrb[0].mxu0 %v1326
        %v2566 = vpop.f32.mrb[0].mxu0
        %v2567 = vadd.f32 %v2374, %v2566
        %v2568 = vpop.f32.mrb[0].mxu0
        %v2569 = vadd.f32 %v2376, %v2568
        %v2570 = vpop.f32.mrb[0].mxu0
        %v2571 = vadd.f32 %v2378, %v2570
        %v2572 = vpop.f32.mrb[0].mxu0
        %v2573 = vadd.f32 %v2380, %v2572
        %2574 = vmatprep.mubr.bf16.mxu0 %v1336
        %2575 = vmatmul.mubr.bf16.gmra.mrb[0].mxu0 %v1335
        %v2576 = vpop.f32.mrb[0].mxu0
        %v2577 = vadd.f32 %v2384, %v2576
        %v2578 = vpop.f32.mrb[0].mxu0
        %v2579 = vadd.f32 %v2386, %v2578
        %v2580 = vpop.f32.mrb[0].mxu0
        %v2581 = vadd.f32 %v2388, %v2580
        %v2582 = vpop.f32.mrb[0].mxu0
        %v2583 = vadd.f32 %v2390, %v2582
        %2584 = vmatprep.mubr.bf16.mxu0 %v1345
        %2585 = vmatmul.mubr.bf16.gmra.mrb[0].mxu0 %v1344
        %v2586 = vpop.f32.mrb[0].mxu0
        %v2587 = vadd.f32 %v2394, %v2586
        %v2588 = vpop.f32.mrb[0].mxu0
        %v2589 = vadd.f32 %v2396, %v2588
        %v2590 = vpop.f32.mrb[0].mxu0
        %v2591 = vadd.f32 %v2398, %v2590
        %v2592 = vpop.f32.mrb[0].mxu0
        %v2593 = vadd.f32 %v2400, %v2592
        %2594 = vmatprep.mubr.bf16.mxu0 %v1354
        %2595 = vmatmul.mubr.bf16.gmra.mrb[0].mxu0 %v1353
        %v2596 = vpop.f32.mrb[0].mxu0
        %v2597 = vadd.f32 %v2404, %v2596
        %v2598 = vpop.f32.mrb[0].mxu0
        %v2599 = vadd.f32 %v2406, %v2598
        %v2600 = vpop.f32.mrb[0].mxu0
        %v2601 = vadd.f32 %v2408, %v2600
        %v2602 = vpop.f32.mrb[0].mxu0
        %v2603 = vadd.f32 %v2410, %v2602
        %2604 = vmatprep.mubr.bf16.mxu0 %v1363
        %2605 = vmatmul.mubr.bf16.gmra.mrb[0].mxu0 %v1362
        %v2606 = vpop.f32.mrb[0].mxu0
        %v2607 = vadd.f32 %v2414, %v2606
        %v2608 = vpop.f32.mrb[0].mxu0
        %v2609 = vadd.f32 %v2416, %v2608
        %v2610 = vpop.f32.mrb[0].mxu0
        %v2611 = vadd.f32 %v2418, %v2610
        %v2612 = vpop.f32.mrb[0].mxu0
        %v2613 = vadd.f32 %v2420, %v2612
        %2614 = vmatprep.mubr.bf16.mxu0 %v1372
        %2615 = vmatmul.mubr.bf16.gmra.mrb[0].mxu0 %v1371
        %v2616 = vpop.f32.mrb[0].mxu0
        %v2617 = vadd.f32 %v2424, %v2616
        %v2618 = vpop.f32.mrb[0].mxu0
        %v2619 = vadd.f32 %v2426, %v2618
        %v2620 = vpop.f32.mrb[0].mxu0
        %v2621 = vadd.f32 %v2428, %v2620
        %v2622 = vpop.f32.mrb[0].mxu0
        %v2623 = vadd.f32 %v2430, %v2622
        %2624 = vmatprep.mubr.bf16.mxu0 %v1381
        %2625 = vmatmul.mubr.bf16.gmra.mrb[0].mxu0 %v1380
        %v2626 = vpop.f32.mrb[0].mxu0
        %v2627 = vadd.f32 %v2434, %v2626
        %v2628 = vpop.f32.mrb[0].mxu0
        %v2629 = vadd.f32 %v2436, %v2628
        %v2630 = vpop.f32.mrb[0].mxu0
        %v2631 = vadd.f32 %v2438, %v2630
        %v2632 = vpop.f32.mrb[0].mxu0
        %v2633 = vadd.f32 %v2440, %v2632
        %2634 = vmatprep.mubr.bf16.mxu0 %v1390
        %2635 = vmatmul.mubr.bf16.gmra.mrb[0].mxu0 %v1389
        %v2636 = vpop.f32.mrb[0].mxu0
        %v2637 = vadd.f32 %v2444, %v2636
        %v2638 = vpop.f32.mrb[0].mxu0
        %v2639 = vadd.f32 %v2446, %v2638
        %v2640 = vpop.f32.mrb[0].mxu0
        %v2641 = vadd.f32 %v2448, %v2640
        %v2642 = vpop.f32.mrb[0].mxu0
        %v2643 = vadd.f32 %v2450, %v2642
        %2644 = vmatprep.mubr.bf16.mxu0 %v1399
        %2645 = vmatmul.mubr.bf16.gmra.mrb[0].mxu0 %v1398
        %v2646 = vpop.f32.mrb[0].mxu0
        %v2647 = vadd.f32 %v2454, %v2646
        %v2648 = vpop.f32.mrb[0].mxu0
        %v2649 = vadd.f32 %v2456, %v2648
        %v2650 = vpop.f32.mrb[0].mxu0
        %v2651 = vadd.f32 %v2458, %v2650
        %v2652 = vpop.f32.mrb[0].mxu0
        %v2653 = vadd.f32 %v2460, %v2652
        %2654 = vdwg.mxu0
        %2655 = vmatprep.subr.bf16.mxu0 %v2046
        %2656 = vmatpush1.bf16.msra.mxu0 %v2045
        %2657 = vmatprep.subr.bf16.mxu0 %v2048
        %2658 = vmatpush1.bf16.msra.mxu0 %v2047
        %2659 = vmatprep.subr.bf16.mxu0 %v2050
        %2660 = vmatpush1.bf16.msra.mxu0 %v2049
        %2661 = vmatprep.subr.bf16.mxu0 %v2052
        %2662 = vmatpush1.bf16.msra.mxu0 %v2051
        %2663 = vmatprep.subr.bf16.mxu0 %v2054
        %2664 = vmatpush1.bf16.msra.mxu0 %v2053
        %2665 = vmatprep.subr.bf16.mxu0 %v2056
        %2666 = vmatpush1.bf16.msra.mxu0 %v2055
        %2667 = vmatprep.subr.bf16.mxu0 %v2058
        %2668 = vmatpush1.bf16.msra.mxu0 %v2057
        %2669 = vmatprep.subr.bf16.mxu0 %v2060
        %2670 = vmatpush1.bf16.msra.mxu0 %v2059
        %2671 = vmatprep.subr.bf16.mxu0 %v2062
        %2672 = vmatpush1.bf16.msra.mxu0 %v2061
        %2673 = vmatprep.subr.bf16.mxu0 %v2064
        %2674 = vmatpush1.bf16.msra.mxu0 %v2063
        %2675 = vmatprep.subr.bf16.mxu0 %v2066
        %2676 = vmatpush1.bf16.msra.mxu0 %v2065
        %2677 = vmatprep.subr.bf16.mxu0 %v2068
        %2678 = vmatpush1.bf16.msra.mxu0 %v2067
        %2679 = vmatprep.subr.bf16.mxu0 %v2070
        %2680 = vmatpush1.bf16.msra.mxu0 %v2069
        %2681 = vmatprep.subr.bf16.mxu0 %v2072
        %2682 = vmatpush1.bf16.msra.mxu0 %v2071
        %2683 = vmatprep.subr.bf16.mxu0 %v2074
        %2684 = vmatpush1.bf16.msra.mxu0 %v2073
        %2685 = vmatprep.subr.bf16.mxu0 %v2076
        %2686 = vmatpush1.bf16.msra.mxu0 %v2075
        %2687 = vmatprep.mubr.bf16.mxu0 %v1266
        %2688 = vmatmul.mubr.bf16.gmra.mrb[0].mxu0 %v1265
        %v2689 = vpop.f32.mrb[0].mxu0
        %v2690 = vadd.f32 %v2497, %v2689
        %v2691 = vpop.f32.mrb[0].mxu0
        %v2692 = vadd.f32 %v2499, %v2691
        %v2693 = vpop.f32.mrb[0].mxu0
        %v2694 = vadd.f32 %v2501, %v2693
        %v2695 = vpop.f32.mrb[0].mxu0
        %v2696 = vadd.f32 %v2503, %v2695
        %2697 = vmatprep.mubr.bf16.mxu0 %v1275
        %2698 = vmatmul.mubr.bf16.gmra.mrb[0].mxu0 %v1274
        %v2699 = vpop.f32.mrb[0].mxu0
        %v2700 = vadd.f32 %v2507, %v2699
        %v2701 = vpop.f32.mrb[0].mxu0
        %v2702 = vadd.f32 %v2509, %v2701
        %v2703 = vpop.f32.mrb[0].mxu0
        %v2704 = vadd.f32 %v2511, %v2703
        %v2705 = vpop.f32.mrb[0].mxu0
        %v2706 = vadd.f32 %v2513, %v2705
        %2707 = vmatprep.mubr.bf16.mxu0 %v1284
        %2708 = vmatmul.mubr.bf16.gmra.mrb[0].mxu0 %v1283
        %v2709 = vpop.f32.mrb[0].mxu0
        %v2710 = vadd.f32 %v2517, %v2709
        %v2711 = vpop.f32.mrb[0].mxu0
        %v2712 = vadd.f32 %v2519, %v2711
        %v2713 = vpop.f32.mrb[0].mxu0
        %v2714 = vadd.f32 %v2521, %v2713
        %v2715 = vpop.f32.mrb[0].mxu0
        %v2716 = vadd.f32 %v2523, %v2715
        %2717 = vmatprep.mubr.bf16.mxu0 %v1293
        %2718 = vmatmul.mubr.bf16.gmra.mrb[0].mxu0 %v1292
        %v2719 = vpop.f32.mrb[0].mxu0
        %v2720 = vadd.f32 %v2527, %v2719
        %v2721 = vpop.f32.mrb[0].mxu0
        %v2722 = vadd.f32 %v2529, %v2721
        %v2723 = vpop.f32.mrb[0].mxu0
        %v2724 = vadd.f32 %v2531, %v2723
        %v2725 = vpop.f32.mrb[0].mxu0
        %v2726 = vadd.f32 %v2533, %v2725
        %2727 = vmatprep.mubr.bf16.mxu0 %v1302
        %2728 = vmatmul.mubr.bf16.gmra.mrb[0].mxu0 %v1301
        %v2729 = vpop.f32.mrb[0].mxu0
        %v2730 = vadd.f32 %v2537, %v2729
        %v2731 = vpop.f32.mrb[0].mxu0
        %v2732 = vadd.f32 %v2539, %v2731
        %v2733 = vpop.f32.mrb[0].mxu0
        %v2734 = vadd.f32 %v2541, %v2733
        %v2735 = vpop.f32.mrb[0].mxu0
        %v2736 = vadd.f32 %v2543, %v2735
        %2737 = vmatprep.mubr.bf16.mxu0 %v1311
        %2738 = vmatmul.mubr.bf16.gmra.mrb[0].mxu0 %v1310
        %v2739 = vpop.f32.mrb[0].mxu0
        %v2740 = vadd.f32 %v2547, %v2739
        %v2741 = vpop.f32.mrb[0].mxu0
        %v2742 = vadd.f32 %v2549, %v2741
        %v2743 = vpop.f32.mrb[0].mxu0
        %v2744 = vadd.f32 %v2551, %v2743
        %v2745 = vpop.f32.mrb[0].mxu0
        %v2746 = vadd.f32 %v2553, %v2745
        %2747 = vmatprep.mubr.bf16.mxu0 %v1320
        %2748 = vmatmul.mubr.bf16.gmra.mrb[0].mxu0 %v1319
        %v2749 = vpop.f32.mrb[0].mxu0
        %v2750 = vadd.f32 %v2557, %v2749
        %v2751 = vpop.f32.mrb[0].mxu0
        %v2752 = vadd.f32 %v2559, %v2751
        %v2753 = vpop.f32.mrb[0].mxu0
        %v2754 = vadd.f32 %v2561, %v2753
        %v2755 = vpop.f32.mrb[0].mxu0
        %v2756 = vadd.f32 %v2563, %v2755
        %2757 = vmatprep.mubr.bf16.mxu0 %v1329
        %2758 = vmatmul.mubr.bf16.gmra.mrb[0].mxu0 %v1328
        %v2759 = vpop.f32.mrb[0].mxu0
        %v2760 = vadd.f32 %v2567, %v2759
        %v2761 = vpop.f32.mrb[0].mxu0
        %v2762 = vadd.f32 %v2569, %v2761
        %v2763 = vpop.f32.mrb[0].mxu0
        %v2764 = vadd.f32 %v2571, %v2763
        %v2765 = vpop.f32.mrb[0].mxu0
        %v2766 = vadd.f32 %v2573, %v2765
        %2767 = vmatprep.mubr.bf16.mxu0 %v1338
        %2768 = vmatmul.mubr.bf16.gmra.mrb[0].mxu0 %v1337
        %v2769 = vpop.f32.mrb[0].mxu0
        %v2770 = vadd.f32 %v2577, %v2769
        %v2771 = vpop.f32.mrb[0].mxu0
        %v2772 = vadd.f32 %v2579, %v2771
        %v2773 = vpop.f32.mrb[0].mxu0
        %v2774 = vadd.f32 %v2581, %v2773
        %v2775 = vpop.f32.mrb[0].mxu0
        %v2776 = vadd.f32 %v2583, %v2775
        %2777 = vmatprep.mubr.bf16.mxu0 %v1347
        %2778 = vmatmul.mubr.bf16.gmra.mrb[0].mxu0 %v1346
        %v2779 = vpop.f32.mrb[0].mxu0
        %v2780 = vadd.f32 %v2587, %v2779
        %v2781 = vpop.f32.mrb[0].mxu0
        %v2782 = vadd.f32 %v2589, %v2781
        %v2783 = vpop.f32.mrb[0].mxu0
        %v2784 = vadd.f32 %v2591, %v2783
        %v2785 = vpop.f32.mrb[0].mxu0
        %v2786 = vadd.f32 %v2593, %v2785
        %2787 = vmatprep.mubr.bf16.mxu0 %v1356
        %2788 = vmatmul.mubr.bf16.gmra.mrb[0].mxu0 %v1355
        %v2789 = vpop.f32.mrb[0].mxu0
        %v2790 = vadd.f32 %v2597, %v2789
        %v2791 = vpop.f32.mrb[0].mxu0
        %v2792 = vadd.f32 %v2599, %v2791
        %v2793 = vpop.f32.mrb[0].mxu0
        %v2794 = vadd.f32 %v2601, %v2793
        %v2795 = vpop.f32.mrb[0].mxu0
        %v2796 = vadd.f32 %v2603, %v2795
        %2797 = vmatprep.mubr.bf16.mxu0 %v1365
        %2798 = vmatmul.mubr.bf16.gmra.mrb[0].mxu0 %v1364
        %v2799 = vpop.f32.mrb[0].mxu0
        %v2800 = vadd.f32 %v2607, %v2799
        %v2801 = vpop.f32.mrb[0].mxu0
        %v2802 = vadd.f32 %v2609, %v2801
        %v2803 = vpop.f32.mrb[0].mxu0
        %v2804 = vadd.f32 %v2611, %v2803
        %v2805 = vpop.f32.mrb[0].mxu0
        %v2806 = vadd.f32 %v2613, %v2805
        %2807 = vmatprep.mubr.bf16.mxu0 %v1374
        %2808 = vmatmul.mubr.bf16.gmra.mrb[0].mxu0 %v1373
        %v2809 = vpop.f32.mrb[0].mxu0
        %v2810 = vadd.f32 %v2617, %v2809
        %v2811 = vpop.f32.mrb[0].mxu0
        %v2812 = vadd.f32 %v2619, %v2811
        %v2813 = vpop.f32.mrb[0].mxu0
        %v2814 = vadd.f32 %v2621, %v2813
        %v2815 = vpop.f32.mrb[0].mxu0
        %v2816 = vadd.f32 %v2623, %v2815
        %2817 = vmatprep.mubr.bf16.mxu0 %v1383
        %2818 = vmatmul.mubr.bf16.gmra.mrb[0].mxu0 %v1382
        %v2819 = vpop.f32.mrb[0].mxu0
        %v2820 = vadd.f32 %v2627, %v2819
        %v2821 = vpop.f32.mrb[0].mxu0
        %v2822 = vadd.f32 %v2629, %v2821
        %v2823 = vpop.f32.mrb[0].mxu0
        %v2824 = vadd.f32 %v2631, %v2823
        %v2825 = vpop.f32.mrb[0].mxu0
        %v2826 = vadd.f32 %v2633, %v2825
        %2827 = vmatprep.mubr.bf16.mxu0 %v1392
        %2828 = vmatmul.mubr.bf16.gmra.mrb[0].mxu0 %v1391
        %v2829 = vpop.f32.mrb[0].mxu0
        %v2830 = vadd.f32 %v2637, %v2829
        %v2831 = vpop.f32.mrb[0].mxu0
        %v2832 = vadd.f32 %v2639, %v2831
        %v2833 = vpop.f32.mrb[0].mxu0
        %v2834 = vadd.f32 %v2641, %v2833
        %v2835 = vpop.f32.mrb[0].mxu0
        %v2836 = vadd.f32 %v2643, %v2835
        %2837 = vmatprep.mubr.bf16.mxu0 %v1401
        %2838 = vmatmul.mubr.bf16.gmra.mrb[0].mxu0 %v1400
        %v2839 = vpop.f32.mrb[0].mxu0
        %v2840 = vadd.f32 %v2647, %v2839
        %v2841 = vpop.f32.mrb[0].mxu0
        %v2842 = vadd.f32 %v2649, %v2841
        %v2843 = vpop.f32.mrb[0].mxu0
        %v2844 = vadd.f32 %v2651, %v2843
        %v2845 = vpop.f32.mrb[0].mxu0
        %v2846 = vadd.f32 %v2653, %v2845
        %2847 = vdwg.mxu0
        %2848 = vmatprep.subr.bf16.mxu0 %v2078
        %2849 = vmatpush1.bf16.msra.mxu0 %v2077
        %2850 = vmatprep.subr.bf16.mxu0 %v2080
        %2851 = vmatpush1.bf16.msra.mxu0 %v2079
        %2852 = vmatprep.subr.bf16.mxu0 %v2082
        %2853 = vmatpush1.bf16.msra.mxu0 %v2081
        %2854 = vmatprep.subr.bf16.mxu0 %v2084
        %2855 = vmatpush1.bf16.msra.mxu0 %v2083
        %2856 = vmatprep.subr.bf16.mxu0 %v2086
        %2857 = vmatpush1.bf16.msra.mxu0 %v2085
        %2858 = vmatprep.subr.bf16.mxu0 %v2088
        %2859 = vmatpush1.bf16.msra.mxu0 %v2087
        %2860 = vmatprep.subr.bf16.mxu0 %v2090
        %2861 = vmatpush1.bf16.msra.mxu0 %v2089
        %2862 = vmatprep.subr.bf16.mxu0 %v2092
        %2863 = vmatpush1.bf16.msra.mxu0 %v2091
        %2864 = vmatprep.subr.bf16.mxu0 %v2094
        %2865 = vmatpush1.bf16.msra.mxu0 %v2093
        %2866 = vmatprep.subr.bf16.mxu0 %v2096
        %2867 = vmatpush1.bf16.msra.mxu0 %v2095
        %2868 = vmatprep.subr.bf16.mxu0 %v2098
        %2869 = vmatpush1.bf16.msra.mxu0 %v2097
        %2870 = vmatprep.subr.bf16.mxu0 %v2100
        %2871 = vmatpush1.bf16.msra.mxu0 %v2099
        %2872 = vmatprep.subr.bf16.mxu0 %v2102
        %2873 = vmatpush1.bf16.msra.mxu0 %v2101
        %2874 = vmatprep.subr.bf16.mxu0 %v2104
        %2875 = vmatpush1.bf16.msra.mxu0 %v2103
        %2876 = vmatprep.subr.bf16.mxu0 %v2106
        %2877 = vmatpush1.bf16.msra.mxu0 %v2105
        %2878 = vmatprep.subr.bf16.mxu0 %v2108
        %2879 = vmatpush1.bf16.msra.mxu0 %v2107
        %2880 = vmatprep.mubr.bf16.mxu0 %v1268
        %2881 = vmatmul.mubr.bf16.gmra.mrb[0].mxu0 %v1267
        %v2882 = vpop.f32.mrb[0].mxu0
        %v2883 = vadd.f32 %v2690, %v2882
        %v2884 = vpop.f32.mrb[0].mxu0
        %v2885 = vadd.f32 %v2692, %v2884
        %v2886 = vpop.f32.mrb[0].mxu0
        %v2887 = vadd.f32 %v2694, %v2886
        %v2888 = vpop.f32.mrb[0].mxu0
        %v2889 = vadd.f32 %v2696, %v2888
        %2890 = vmatprep.mubr.bf16.mxu0 %v1277
        %2891 = vmatmul.mubr.bf16.gmra.mrb[0].mxu0 %v1276
        %v2892 = vpop.f32.mrb[0].mxu0
        %v2893 = vadd.f32 %v2700, %v2892
        %v2894 = vpop.f32.mrb[0].mxu0
        %v2895 = vadd.f32 %v2702, %v2894
        %v2896 = vpop.f32.mrb[0].mxu0
        %v2897 = vadd.f32 %v2704, %v2896
        %v2898 = vpop.f32.mrb[0].mxu0
        %v2899 = vadd.f32 %v2706, %v2898
        %2900 = vmatprep.mubr.bf16.mxu0 %v1286
        %2901 = vmatmul.mubr.bf16.gmra.mrb[0].mxu0 %v1285
        %v2902 = vpop.f32.mrb[0].mxu0
        %v2903 = vadd.f32 %v2710, %v2902
        %v2904 = vpop.f32.mrb[0].mxu0
        %v2905 = vadd.f32 %v2712, %v2904
        %v2906 = vpop.f32.mrb[0].mxu0
        %v2907 = vadd.f32 %v2714, %v2906
        %v2908 = vpop.f32.mrb[0].mxu0
        %v2909 = vadd.f32 %v2716, %v2908
        %2910 = vmatprep.mubr.bf16.mxu0 %v1295
        %2911 = vmatmul.mubr.bf16.gmra.mrb[0].mxu0 %v1294
        %v2912 = vpop.f32.mrb[0].mxu0
        %v2913 = vadd.f32 %v2720, %v2912
        %v2914 = vpop.f32.mrb[0].mxu0
        %v2915 = vadd.f32 %v2722, %v2914
        %v2916 = vpop.f32.mrb[0].mxu0
        %v2917 = vadd.f32 %v2724, %v2916
        %v2918 = vpop.f32.mrb[0].mxu0
        %v2919 = vadd.f32 %v2726, %v2918
        %2920 = vmatprep.mubr.bf16.mxu0 %v1304
        %2921 = vmatmul.mubr.bf16.gmra.mrb[0].mxu0 %v1303
        %v2922 = vpop.f32.mrb[0].mxu0
        %v2923 = vadd.f32 %v2730, %v2922
        %v2924 = vpop.f32.mrb[0].mxu0
        %v2925 = vadd.f32 %v2732, %v2924
        %v2926 = vpop.f32.mrb[0].mxu0
        %v2927 = vadd.f32 %v2734, %v2926
        %v2928 = vpop.f32.mrb[0].mxu0
        %v2929 = vadd.f32 %v2736, %v2928
        %2930 = vmatprep.mubr.bf16.mxu0 %v1313
        %2931 = vmatmul.mubr.bf16.gmra.mrb[0].mxu0 %v1312
        %v2932 = vpop.f32.mrb[0].mxu0
        %v2933 = vadd.f32 %v2740, %v2932
        %v2934 = vpop.f32.mrb[0].mxu0
        %v2935 = vadd.f32 %v2742, %v2934
        %v2936 = vpop.f32.mrb[0].mxu0
        %v2937 = vadd.f32 %v2744, %v2936
        %v2938 = vpop.f32.mrb[0].mxu0
        %v2939 = vadd.f32 %v2746, %v2938
        %2940 = vmatprep.mubr.bf16.mxu0 %v1322
        %2941 = vmatmul.mubr.bf16.gmra.mrb[0].mxu0 %v1321
        %v2942 = vpop.f32.mrb[0].mxu0
        %v2943 = vadd.f32 %v2750, %v2942
        %v2944 = vpop.f32.mrb[0].mxu0
        %v2945 = vadd.f32 %v2752, %v2944
        %v2946 = vpop.f32.mrb[0].mxu0
        %v2947 = vadd.f32 %v2754, %v2946
        %v2948 = vpop.f32.mrb[0].mxu0
        %v2949 = vadd.f32 %v2756, %v2948
        %2950 = vmatprep.mubr.bf16.mxu0 %v1331
        %2951 = vmatmul.mubr.bf16.gmra.mrb[0].mxu0 %v1330
        %v2952 = vpop.f32.mrb[0].mxu0
        %v2953 = vadd.f32 %v2760, %v2952
        %v2954 = vpop.f32.mrb[0].mxu0
        %v2955 = vadd.f32 %v2762, %v2954
        %v2956 = vpop.f32.mrb[0].mxu0
        %v2957 = vadd.f32 %v2764, %v2956
        %v2958 = vpop.f32.mrb[0].mxu0
        %v2959 = vadd.f32 %v2766, %v2958
        %2960 = vmatprep.mubr.bf16.mxu0 %v1340
        %2961 = vmatmul.mubr.bf16.gmra.mrb[0].mxu0 %v1339
        %v2962 = vpop.f32.mrb[0].mxu0
        %v2963 = vadd.f32 %v2770, %v2962
        %v2964 = vpop.f32.mrb[0].mxu0
        %v2965 = vadd.f32 %v2772, %v2964
        %v2966 = vpop.f32.mrb[0].mxu0
        %v2967 = vadd.f32 %v2774, %v2966
        %v2968 = vpop.f32.mrb[0].mxu0
        %v2969 = vadd.f32 %v2776, %v2968
        %2970 = vmatprep.mubr.bf16.mxu0 %v1349
        %2971 = vmatmul.mubr.bf16.gmra.mrb[0].mxu0 %v1348
        %v2972 = vpop.f32.mrb[0].mxu0
        %v2973 = vadd.f32 %v2780, %v2972
        %v2974 = vpop.f32.mrb[0].mxu0
        %v2975 = vadd.f32 %v2782, %v2974
        %v2976 = vpop.f32.mrb[0].mxu0
        %v2977 = vadd.f32 %v2784, %v2976
        %v2978 = vpop.f32.mrb[0].mxu0
        %v2979 = vadd.f32 %v2786, %v2978
        %2980 = vmatprep.mubr.bf16.mxu0 %v1358
        %2981 = vmatmul.mubr.bf16.gmra.mrb[0].mxu0 %v1357
        %v2982 = vpop.f32.mrb[0].mxu0
        %v2983 = vadd.f32 %v2790, %v2982
        %v2984 = vpop.f32.mrb[0].mxu0
        %v2985 = vadd.f32 %v2792, %v2984
        %v2986 = vpop.f32.mrb[0].mxu0
        %v2987 = vadd.f32 %v2794, %v2986
        %v2988 = vpop.f32.mrb[0].mxu0
        %v2989 = vadd.f32 %v2796, %v2988
        %2990 = vmatprep.mubr.bf16.mxu0 %v1367
        %2991 = vmatmul.mubr.bf16.gmra.mrb[0].mxu0 %v1366
        %v2992 = vpop.f32.mrb[0].mxu0
        %v2993 = vadd.f32 %v2800, %v2992
        %v2994 = vpop.f32.mrb[0].mxu0
        %v2995 = vadd.f32 %v2802, %v2994
        %v2996 = vpop.f32.mrb[0].mxu0
        %v2997 = vadd.f32 %v2804, %v2996
        %v2998 = vpop.f32.mrb[0].mxu0
        %v2999 = vadd.f32 %v2806, %v2998
        %3000 = vmatprep.mubr.bf16.mxu0 %v1376
        %3001 = vmatmul.mubr.bf16.gmra.mrb[0].mxu0 %v1375
        %v3002 = vpop.f32.mrb[0].mxu0
        %v3003 = vadd.f32 %v2810, %v3002
        %v3004 = vpop.f32.mrb[0].mxu0
        %v3005 = vadd.f32 %v2812, %v3004
        %v3006 = vpop.f32.mrb[0].mxu0
        %v3007 = vadd.f32 %v2814, %v3006
        %v3008 = vpop.f32.mrb[0].mxu0
        %v3009 = vadd.f32 %v2816, %v3008
        %3010 = vmatprep.mubr.bf16.mxu0 %v1385
        %3011 = vmatmul.mubr.bf16.gmra.mrb[0].mxu0 %v1384
        %v3012 = vpop.f32.mrb[0].mxu0
        %v3013 = vadd.f32 %v2820, %v3012
        %v3014 = vpop.f32.mrb[0].mxu0
        %v3015 = vadd.f32 %v2822, %v3014
        %v3016 = vpop.f32.mrb[0].mxu0
        %v3017 = vadd.f32 %v2824, %v3016
        %v3018 = vpop.f32.mrb[0].mxu0
        %v3019 = vadd.f32 %v2826, %v3018
        %3020 = vmatprep.mubr.bf16.mxu0 %v1394
        %3021 = vmatmul.mubr.bf16.gmra.mrb[0].mxu0 %v1393
        %v3022 = vpop.f32.mrb[0].mxu0
        %v3023 = vadd.f32 %v2830, %v3022
        %v3024 = vpop.f32.mrb[0].mxu0
        %v3025 = vadd.f32 %v2832, %v3024
        %v3026 = vpop.f32.mrb[0].mxu0
        %v3027 = vadd.f32 %v2834, %v3026
        %v3028 = vpop.f32.mrb[0].mxu0
        %v3029 = vadd.f32 %v2836, %v3028
        %3030 = vmatprep.mubr.bf16.mxu0 %v1403
        %3031 = vmatmul.mubr.bf16.gmra.mrb[0].mxu0 %v1402
        %v3032 = vpop.f32.mrb[0].mxu0
        %v3033 = vadd.f32 %v2840, %v3032
        %v3034 = vpop.f32.mrb[0].mxu0
        %v3035 = vadd.f32 %v2842, %v3034
        %v3036 = vpop.f32.mrb[0].mxu0
        %v3037 = vadd.f32 %v2844, %v3036
        %v3038 = vpop.f32.mrb[0].mxu0
        %v3039 = vadd.f32 %v2846, %v3038
        %3040 = vdwg.mxu0
        %3041 = vmatprep.subr.bf16.mxu0 %v2110
        %3042 = vmatpush1.bf16.msra.mxu0 %v2109
        %3043 = vmatprep.subr.bf16.mxu0 %v2112
        %3044 = vmatpush1.bf16.msra.mxu0 %v2111
        %3045 = vmatprep.subr.bf16.mxu0 %v2114
        %3046 = vmatpush1.bf16.msra.mxu0 %v2113
        %3047 = vmatprep.subr.bf16.mxu0 %v2116
        %3048 = vmatpush1.bf16.msra.mxu0 %v2115
        %3049 = vmatprep.subr.bf16.mxu0 %v2118
        %3050 = vmatpush1.bf16.msra.mxu0 %v2117
        %3051 = vmatprep.subr.bf16.mxu0 %v2120
        %3052 = vmatpush1.bf16.msra.mxu0 %v2119
        %3053 = vmatprep.subr.bf16.mxu0 %v2122
        %3054 = vmatpush1.bf16.msra.mxu0 %v2121
        %3055 = vmatprep.subr.bf16.mxu0 %v2124
        %3056 = vmatpush1.bf16.msra.mxu0 %v2123
        %3057 = vmatprep.subr.bf16.mxu0 0
        %3058 = vmatpush1.bf16.msra.mxu0 0
        %3059 = vmatprep.subr.bf16.mxu0 0
        %3060 = vmatpush1.bf16.msra.mxu0 0
        %3061 = vmatprep.subr.bf16.mxu0 0
        %3062 = vmatpush1.bf16.msra.mxu0 0
        %3063 = vmatprep.subr.bf16.mxu0 0
        %3064 = vmatpush1.bf16.msra.mxu0 0
        %3065 = vmatprep.subr.bf16.mxu0 0
        %3066 = vmatpush1.bf16.msra.mxu0 0
        %3067 = vmatprep.subr.bf16.mxu0 0
        %3068 = vmatpush1.bf16.msra.mxu0 0
        %3069 = vmatprep.subr.bf16.mxu0 0
        %3070 = vmatpush1.bf16.msra.mxu0 0
        %3071 = vmatprep.subr.bf16.mxu0 0
        %3072 = vmatpush1.bf16.msra.mxu0 0
        %3073 = vmatprep.mubr.bf16.mxu0 0
        %3074 = vmatmul.mubr.bf16.gmra.mrb[0].mxu0 %v1269
        %v3075 = vpop.f32.mrb[0].mxu0
        %v3076 = vadd.f32 %v2883, %v3075
        %v3077 = vpop.f32.mrb[0].mxu0
        %v3078 = vadd.f32 %v2885, %v3077
        %v3079 = vpop.f32.mrb[0].mxu0
        %v3080 = vadd.f32 %v2887, %v3079
        %v3081 = vpop.f32.mrb[0].mxu0
        %v3082 = vadd.f32 %v2889, %v3081
        %3083 = vmatprep.mubr.bf16.mxu0 0
        %3084 = vmatmul.mubr.bf16.gmra.mrb[0].mxu0 %v1278
        %v3085 = vpop.f32.mrb[0].mxu0
        %v3086 = vadd.f32 %v2893, %v3085
        %v3087 = vpop.f32.mrb[0].mxu0
        %v3088 = vadd.f32 %v2895, %v3087
        %v3089 = vpop.f32.mrb[0].mxu0
        %v3090 = vadd.f32 %v2897, %v3089
        %v3091 = vpop.f32.mrb[0].mxu0
        %v3092 = vadd.f32 %v2899, %v3091
        %3093 = vmatprep.mubr.bf16.mxu0 0
        %3094 = vmatmul.mubr.bf16.gmra.mrb[0].mxu0 %v1287
        %v3095 = vpop.f32.mrb[0].mxu0
        %v3096 = vadd.f32 %v2903, %v3095
        %v3097 = vpop.f32.mrb[0].mxu0
        %v3098 = vadd.f32 %v2905, %v3097
        %v3099 = vpop.f32.mrb[0].mxu0
        %v3100 = vadd.f32 %v2907, %v3099
        %v3101 = vpop.f32.mrb[0].mxu0
        %v3102 = vadd.f32 %v2909, %v3101
        %3103 = vmatprep.mubr.bf16.mxu0 0
        %3104 = vmatmul.mubr.bf16.gmra.mrb[0].mxu0 %v1296
        %v3105 = vpop.f32.mrb[0].mxu0
        %v3106 = vadd.f32 %v2913, %v3105
        %v3107 = vpop.f32.mrb[0].mxu0
        %v3108 = vadd.f32 %v2915, %v3107
        %v3109 = vpop.f32.mrb[0].mxu0
        %v3110 = vadd.f32 %v2917, %v3109
        %v3111 = vpop.f32.mrb[0].mxu0
        %v3112 = vadd.f32 %v2919, %v3111
        %3113 = vmatprep.mubr.bf16.mxu0 0
        %3114 = vmatmul.mubr.bf16.gmra.mrb[0].mxu0 %v1305
        %v3115 = vpop.f32.mrb[0].mxu0
        %v3116 = vadd.f32 %v2923, %v3115
        %v3117 = vpop.f32.mrb[0].mxu0
        %v3118 = vadd.f32 %v2925, %v3117
        %v3119 = vpop.f32.mrb[0].mxu0
        %v3120 = vadd.f32 %v2927, %v3119
        %v3121 = vpop.f32.mrb[0].mxu0
        %v3122 = vadd.f32 %v2929, %v3121
        %3123 = vmatprep.mubr.bf16.mxu0 0
        %3124 = vmatmul.mubr.bf16.gmra.mrb[0].mxu0 %v1314
        %v3125 = vpop.f32.mrb[0].mxu0
        %v3126 = vadd.f32 %v2933, %v3125
        %v3127 = vpop.f32.mrb[0].mxu0
        %v3128 = vadd.f32 %v2935, %v3127
        %v3129 = vpop.f32.mrb[0].mxu0
        %v3130 = vadd.f32 %v2937, %v3129
        %v3131 = vpop.f32.mrb[0].mxu0
        %v3132 = vadd.f32 %v2939, %v3131
        %3133 = vmatprep.mubr.bf16.mxu0 0
        %3134 = vmatmul.mubr.bf16.gmra.mrb[0].mxu0 %v1323
        %v3135 = vpop.f32.mrb[0].mxu0
        %v3136 = vadd.f32 %v2943, %v3135
        %v3137 = vpop.f32.mrb[0].mxu0
        %v3138 = vadd.f32 %v2945, %v3137
        %v3139 = vpop.f32.mrb[0].mxu0
        %v3140 = vadd.f32 %v2947, %v3139
        %v3141 = vpop.f32.mrb[0].mxu0
        %v3142 = vadd.f32 %v2949, %v3141
        %3143 = vmatprep.mubr.bf16.mxu0 0
        %3144 = vmatmul.mubr.bf16.gmra.mrb[0].mxu0 %v1332
        %v3145 = vpop.f32.mrb[0].mxu0
        %v3146 = vadd.f32 %v2953, %v3145
        %v3147 = vpop.f32.mrb[0].mxu0
        %v3148 = vadd.f32 %v2955, %v3147
        %v3149 = vpop.f32.mrb[0].mxu0
        %v3150 = vadd.f32 %v2957, %v3149
        %v3151 = vpop.f32.mrb[0].mxu0
        %v3152 = vadd.f32 %v2959, %v3151
        %3153 = vmatprep.mubr.bf16.mxu0 0
        %3154 = vmatmul.mubr.bf16.gmra.mrb[0].mxu0 %v1341
        %v3155 = vpop.f32.mrb[0].mxu0
        %v3156 = vadd.f32 %v2963, %v3155
        %v3157 = vpop.f32.mrb[0].mxu0
        %v3158 = vadd.f32 %v2965, %v3157
        %v3159 = vpop.f32.mrb[0].mxu0
        %v3160 = vadd.f32 %v2967, %v3159
        %v3161 = vpop.f32.mrb[0].mxu0
        %v3162 = vadd.f32 %v2969, %v3161
        %3163 = vmatprep.mubr.bf16.mxu0 0
        %3164 = vmatmul.mubr.bf16.gmra.mrb[0].mxu0 %v1350
        %v3165 = vpop.f32.mrb[0].mxu0
        %v3166 = vadd.f32 %v2973, %v3165
        %v3167 = vpop.f32.mrb[0].mxu0
        %v3168 = vadd.f32 %v2975, %v3167
        %v3169 = vpop.f32.mrb[0].mxu0
        %v3170 = vadd.f32 %v2977, %v3169
        %v3171 = vpop.f32.mrb[0].mxu0
        %v3172 = vadd.f32 %v2979, %v3171
        %3173 = vmatprep.mubr.bf16.mxu0 0
        %3174 = vmatmul.mubr.bf16.gmra.mrb[0].mxu0 %v1359
        %v3175 = vpop.f32.mrb[0].mxu0
        %v3176 = vadd.f32 %v2983, %v3175
        %v3177 = vpop.f32.mrb[0].mxu0
        %v3178 = vadd.f32 %v2985, %v3177
        %v3179 = vpop.f32.mrb[0].mxu0
        %v3180 = vadd.f32 %v2987, %v3179
        %v3181 = vpop.f32.mrb[0].mxu0
        %v3182 = vadd.f32 %v2989, %v3181
        %3183 = vmatprep.mubr.bf16.mxu0 0
        %3184 = vmatmul.mubr.bf16.gmra.mrb[0].mxu0 %v1368
        %v3185 = vpop.f32.mrb[0].mxu0
        %v3186 = vadd.f32 %v2993, %v3185
        %v3187 = vpop.f32.mrb[0].mxu0
        %v3188 = vadd.f32 %v2995, %v3187
        %v3189 = vpop.f32.mrb[0].mxu0
        %v3190 = vadd.f32 %v2997, %v3189
        %v3191 = vpop.f32.mrb[0].mxu0
        %v3192 = vadd.f32 %v2999, %v3191
        %3193 = vmatprep.mubr.bf16.mxu0 0
        %3194 = vmatmul.mubr.bf16.gmra.mrb[0].mxu0 %v1377
        %v3195 = vpop.f32.mrb[0].mxu0
        %v3196 = vadd.f32 %v3003, %v3195
        %v3197 = vpop.f32.mrb[0].mxu0
        %v3198 = vadd.f32 %v3005, %v3197
        %v3199 = vpop.f32.mrb[0].mxu0
        %v3200 = vadd.f32 %v3007, %v3199
        %v3201 = vpop.f32.mrb[0].mxu0
        %v3202 = vadd.f32 %v3009, %v3201
        %3203 = vmatprep.mubr.bf16.mxu0 0
        %3204 = vmatmul.mubr.bf16.gmra.mrb[0].mxu0 %v1386
        %v3205 = vpop.f32.mrb[0].mxu0
        %v3206 = vadd.f32 %v3013, %v3205
        %v3207 = vpop.f32.mrb[0].mxu0
        %v3208 = vadd.f32 %v3015, %v3207
        %v3209 = vpop.f32.mrb[0].mxu0
        %v3210 = vadd.f32 %v3017, %v3209
        %v3211 = vpop.f32.mrb[0].mxu0
        %v3212 = vadd.f32 %v3019, %v3211
        %3213 = vmatprep.mubr.bf16.mxu0 0
        %3214 = vmatmul.mubr.bf16.gmra.mrb[0].mxu0 %v1395
        %v3215 = vpop.f32.mrb[0].mxu0
        %v3216 = vadd.f32 %v3023, %v3215
        %v3217 = vpop.f32.mrb[0].mxu0
        %v3218 = vadd.f32 %v3025, %v3217
        %v3219 = vpop.f32.mrb[0].mxu0
        %v3220 = vadd.f32 %v3027, %v3219
        %v3221 = vpop.f32.mrb[0].mxu0
        %v3222 = vadd.f32 %v3029, %v3221
        %3223 = vmatprep.mubr.bf16.mxu0 0
        %3224 = vmatmul.mubr.bf16.gmra.mrb[0].mxu0 %v1404
        %v3225 = vpop.f32.mrb[0].mxu0
        %v3226 = vadd.f32 %v3033, %v3225
        %v3227 = vpop.f32.mrb[0].mxu0
        %v3228 = vadd.f32 %v3035, %v3227
        %v3229 = vpop.f32.mrb[0].mxu0
        %v3230 = vadd.f32 %v3037, %v3229
        %v3231 = vpop.f32.mrb[0].mxu0
        %v3232 = vadd.f32 %v3039, %v3231
        %3233 = vdwg.mxu0
        %v3234 = vmax.f32 %v3076, 0.0
        %v3235 = vmax.f32 %v3078, 0.0
        %v3236 = vmax.f32 %v3080, 0.0
        %v3237 = vmax.f32 %v3082, 0.0
        %v3238 = vmax.f32 %v3086, 0.0
        %v3239 = vmax.f32 %v3088, 0.0
        %v3240 = vmax.f32 %v3090, 0.0
        %v3241 = vmax.f32 %v3092, 0.0
        %v3242 = vmax.f32 %v3096, 0.0
        %v3243 = vmax.f32 %v3098, 0.0
        %v3244 = vmax.f32 %v3100, 0.0
        %v3245 = vmax.f32 %v3102, 0.0
        %v3246 = vmax.f32 %v3106, 0.0
        %v3247 = vmax.f32 %v3108, 0.0
        %v3248 = vmax.f32 %v3110, 0.0
        %v3249 = vmax.f32 %v3112, 0.0
        %v3250 = vmax.f32 %v3116, 0.0
        %v3251 = vmax.f32 %v3118, 0.0
        %v3252 = vmax.f32 %v3120, 0.0
        %v3253 = vmax.f32 %v3122, 0.0
        %v3254 = vmax.f32 %v3126, 0.0
        %v3255 = vmax.f32 %v3128, 0.0
        %v3256 = vmax.f32 %v3130, 0.0
        %v3257 = vmax.f32 %v3132, 0.0
        %v3258 = vmax.f32 %v3136, 0.0
        %v3259 = vmax.f32 %v3138, 0.0
        %v3260 = vmax.f32 %v3140, 0.0
        %v3261 = vmax.f32 %v3142, 0.0
        %v3262 = vmax.f32 %v3146, 0.0
        %v3263 = vmax.f32 %v3148, 0.0
        %v3264 = vmax.f32 %v3150, 0.0
        %v3265 = vmax.f32 %v3152, 0.0
        %v3266 = vmax.f32 %v3156, 0.0
        %v3267 = vmax.f32 %v3158, 0.0
        %v3268 = vmax.f32 %v3160, 0.0
        %v3269 = vmax.f32 %v3162, 0.0
        %v3270 = vmax.f32 %v3166, 0.0
        %v3271 = vmax.f32 %v3168, 0.0
        %v3272 = vmax.f32 %v3170, 0.0
        %v3273 = vmax.f32 %v3172, 0.0
        %v3274 = vmax.f32 %v3176, 0.0
        %v3275 = vmax.f32 %v3178, 0.0
        %v3276 = vmax.f32 %v3180, 0.0
        %v3277 = vmax.f32 %v3182, 0.0
        %v3278 = vmax.f32 %v3186, 0.0
        %v3279 = vmax.f32 %v3188, 0.0
        %v3280 = vmax.f32 %v3190, 0.0
        %v3281 = vmax.f32 %v3192, 0.0
        %v3282 = vmax.f32 %v3196, 0.0
        %v3283 = vmax.f32 %v3198, 0.0
        %v3284 = vmax.f32 %v3200, 0.0
        %v3285 = vmax.f32 %v3202, 0.0
        %v3286 = vmax.f32 %v3206, 0.0
        %v3287 = vmax.f32 %v3208, 0.0
        %v3288 = vmax.f32 %v3210, 0.0
        %v3289 = vmax.f32 %v3212, 0.0
        %v3290 = vmax.f32 %v3216, 0.0
        %v3291 = vmax.f32 %v3218, 0.0
        %v3292 = vmax.f32 %v3220, 0.0
        %v3293 = vmax.f32 %v3222, 0.0
        %v3294 = vmax.f32 %v3226, 0.0
        %v3295 = vmax.f32 %v3228, 0.0
        %v3296 = vmax.f32 %v3230, 0.0
        %v3297 = vmax.f32 %v3232, 0.0
        %v3298 = vpack.c.bf16 %v3236, %v3234
        %v3299 = vpack.c.bf16 %v3237, %v3235
        %v3300 = vpack.c.bf16 %v3240, %v3238
        %v3301 = vpack.c.bf16 %v3241, %v3239
        %v3302 = vpack.c.bf16 %v3244, %v3242
        %v3303 = vpack.c.bf16 %v3245, %v3243
        %v3304 = vpack.c.bf16 %v3248, %v3246
        %v3305 = vpack.c.bf16 %v3249, %v3247
        %v3306 = vpack.c.bf16 %v3252, %v3250
        %v3307 = vpack.c.bf16 %v3253, %v3251
        %v3308 = vpack.c.bf16 %v3256, %v3254
        %v3309 = vpack.c.bf16 %v3257, %v3255
        %v3310 = vpack.c.bf16 %v3260, %v3258
        %v3311 = vpack.c.bf16 %v3261, %v3259
        %v3312 = vpack.c.bf16 %v3264, %v3262
        %v3313 = vpack.c.bf16 %v3265, %v3263
        %v3314 = vpack.c.bf16 %v3268, %v3266
        %v3315 = vpack.c.bf16 %v3269, %v3267
        %v3316 = vpack.c.bf16 %v3272, %v3270
        %v3317 = vpack.c.bf16 %v3273, %v3271
        %v3318 = vpack.c.bf16 %v3276, %v3274
        %v3319 = vpack.c.bf16 %v3277, %v3275
        %v3320 = vpack.c.bf16 %v3280, %v3278
        %v3321 = vpack.c.bf16 %v3281, %v3279
        %v3322 = vpack.c.bf16 %v3284, %v3282
        %v3323 = vpack.c.bf16 %v3285, %v3283
        %v3324 = vpack.c.bf16 %v3288, %v3286
        %v3325 = vpack.c.bf16 %v3289, %v3287
        %v3326 = vpack.c.bf16 %v3292, %v3290
        %v3327 = vpack.c.bf16 %v3293, %v3291
        %v3328 = vpack.c.bf16 %v3296, %v3294
        %v3329 = vpack.c.bf16 %v3297, %v3295
        %v3330 = vld [vmem:[#allocation6] sm:$0xff]
        %v3331 = vld [vmem:[#allocation6 + $0x8] sm:$0xff]
        %v3332 = vld [vmem:[#allocation6 + $0x10] sm:$0xff]
        %v3333 = vld [vmem:[#allocation6 + $0x18] sm:$0xff]
        %v3334 = vld [vmem:[#allocation6 + $0x20] sm:$0xff]
        %v3335 = vld [vmem:[#allocation6 + $0x28] sm:$0xff]
        %v3336 = vld [vmem:[#allocation6 + $0x30] sm:$0xff]
        %v3337 = vld [vmem:[#allocation6 + $0x38] sm:$0xff]
        %v3338 = vld [vmem:[#allocation6 + $0x40] sm:$0xff]
        %v3339 = vld [vmem:[#allocation6 + $0x48] sm:$0xff]
        %v3340 = vld [vmem:[#allocation6 + $0x50] sm:$0xff]
        %v3341 = vld [vmem:[#allocation6 + $0x58] sm:$0xff]
        %v3342 = vld [vmem:[#allocation6 + $0x60] sm:$0xff]
        %v3343 = vld [vmem:[#allocation6 + $0x68] sm:$0xff]
        %v3344 = vld [vmem:[#allocation6 + $0x70] sm:$0xff]
        %v3345 = vld [vmem:[#allocation6 + $0x78] sm:$0xff]
        %v3346 = vld [vmem:[#allocation6 + $0x80] sm:$0x77]
        %v3347 = vld [vmem:[%s4] sm:$0xff]
        %v3348 = vld [vmem:[%s4 + $0x8] sm:$0xff]
        %v3349 = vld [vmem:[%s4 + $0x10] sm:$0xff]
        %v3350 = vld [vmem:[%s4 + $0x18] sm:$0xff]
        %v3351 = vld [vmem:[%s4 + $0x20] sm:$0xff]
        %v3352 = vld [vmem:[%s4 + $0x28] sm:$0xff]
        %v3353 = vld [vmem:[%s4 + $0x30] sm:$0xff]
        %v3354 = vld [vmem:[%s4 + $0x38] sm:$0xff]
        %v3355 = vld [vmem:[%s4 + $0x40] sm:$0xff]
        %v3356 = vld [vmem:[%s4 + $0x48] sm:$0xff]
        %v3357 = vld [vmem:[%s4 + $0x50] sm:$0xff]
        %v3358 = vld [vmem:[%s4 + $0x58] sm:$0xff]
        %v3359 = vld [vmem:[%s4 + $0x60] sm:$0xff]
        %v3360 = vld [vmem:[%s4 + $0x68] sm:$0xff]
        %v3361 = vld [vmem:[%s4 + $0x70] sm:$0xff]
        %v3362 = vld [vmem:[%s4 + $0x78] sm:$0xff]
        %v3363 = vld [vmem:[%s4 + $0x80] sm:$0x1f]
        %3365 = vset.pattern.permute.xlu0 0
        %3366 = vperm.xlu0 %3365, %v3347
        %v3367 = vpop.permute.xlu0 %3366
        %3370 = vset.pattern.permute.xlu0 0
        %3371 = vperm.xlu0 %3370, %v3348
        %v3372 = vpop.permute.xlu0 %3371
        %3375 = vset.pattern.permute.xlu0 0
        %3376 = vperm.xlu0 %3375, %v3349
        %v3377 = vpop.permute.xlu0 %3376
        %3380 = vset.pattern.permute.xlu0 0
        %3381 = vperm.xlu0 %3380, %v3350
        %v3382 = vpop.permute.xlu0 %3381
        %3385 = vset.pattern.permute.xlu0 0
        %3386 = vperm.xlu0 %3385, %v3351
        %v3387 = vpop.permute.xlu0 %3386
        %3390 = vset.pattern.permute.xlu0 0
        %3391 = vperm.xlu0 %3390, %v3352
        %v3392 = vpop.permute.xlu0 %3391
        %3395 = vset.pattern.permute.xlu0 0
        %3396 = vperm.xlu0 %3395, %v3353
        %v3397 = vpop.permute.xlu0 %3396
        %3400 = vset.pattern.permute.xlu0 0
        %3401 = vperm.xlu0 %3400, %v3354
        %v3402 = vpop.permute.xlu0 %3401
        %3405 = vset.pattern.permute.xlu0 0
        %3406 = vperm.xlu0 %3405, %v3355
        %v3407 = vpop.permute.xlu0 %3406
        %3410 = vset.pattern.permute.xlu0 0
        %3411 = vperm.xlu0 %3410, %v3356
        %v3412 = vpop.permute.xlu0 %3411
        %3415 = vset.pattern.permute.xlu0 0
        %3416 = vperm.xlu0 %3415, %v3357
        %v3417 = vpop.permute.xlu0 %3416
        %3420 = vset.pattern.permute.xlu0 0
        %3421 = vperm.xlu0 %3420, %v3358
        %v3422 = vpop.permute.xlu0 %3421
        %3425 = vset.pattern.permute.xlu0 0
        %3426 = vperm.xlu0 %3425, %v3359
        %v3427 = vpop.permute.xlu0 %3426
        %3430 = vset.pattern.permute.xlu0 0
        %3431 = vperm.xlu0 %3430, %v3360
        %v3432 = vpop.permute.xlu0 %3431
        %3435 = vset.pattern.permute.xlu0 0
        %3436 = vperm.xlu0 %3435, %v3361
        %v3437 = vpop.permute.xlu0 %3436
        %3440 = vset.pattern.permute.xlu0 0
        %3441 = vperm.xlu0 %3440, %v3362
        %v3442 = vpop.permute.xlu0 %3441
        %3445 = vset.pattern.permute.xlu0 0
        %3446 = vperm.xlu0 %3445, %v3363
        %v3447 = vpop.permute.xlu0 %3446
        %v3466 = vunpack.c.l.b16 %v3330
        %v3467 = vunpack.c.h.b16 %v3330
        %v3468 = vunpack.c.l.b16 %v3331
        %v3469 = vunpack.c.h.b16 %v3331
        %v3470 = vunpack.c.l.b16 %v3332
        %v3471 = vunpack.c.h.b16 %v3332
        %v3472 = vunpack.c.l.b16 %v3333
        %v3473 = vunpack.c.h.b16 %v3333
        %v3474 = vunpack.c.l.b16 %v3334
        %v3475 = vunpack.c.h.b16 %v3334
        %v3476 = vunpack.c.l.b16 %v3335
        %v3477 = vunpack.c.h.b16 %v3335
        %v3478 = vunpack.c.l.b16 %v3336
        %v3479 = vunpack.c.h.b16 %v3336
        %v3480 = vunpack.c.l.b16 %v3337
        %v3481 = vunpack.c.h.b16 %v3337
        %v3482 = vunpack.c.l.b16 %v3338
        %v3483 = vunpack.c.h.b16 %v3338
        %v3484 = vunpack.c.l.b16 %v3339
        %v3485 = vunpack.c.h.b16 %v3339
        %v3486 = vunpack.c.l.b16 %v3340
        %v3487 = vunpack.c.h.b16 %v3340
        %v3488 = vunpack.c.l.b16 %v3341
        %v3489 = vunpack.c.h.b16 %v3341
        %v3490 = vunpack.c.l.b16 %v3342
        %v3491 = vunpack.c.h.b16 %v3342
        %v3492 = vunpack.c.l.b16 %v3343
        %v3493 = vunpack.c.h.b16 %v3343
        %v3494 = vunpack.c.l.b16 %v3344
        %v3495 = vunpack.c.h.b16 %v3344
        %v3496 = vunpack.c.l.b16 %v3345
        %v3497 = vunpack.c.h.b16 %v3345
        %v3498 = vunpack.c.l.b16 %v3346
        %v3499 = vunpack.c.h.b16 %v3346
        %v3500 = vpack.c.b16 %v3468, %v3466
        %v3501 = vpack.c.b16 %v3469, %v3467
        %v3502 = vpack.c.b16 %v3472, %v3470
        %v3503 = vpack.c.b16 %v3473, %v3471
        %v3504 = vpack.c.b16 %v3476, %v3474
        %v3505 = vpack.c.b16 %v3477, %v3475
        %v3506 = vpack.c.b16 %v3480, %v3478
        %v3507 = vpack.c.b16 %v3481, %v3479
        %v3508 = vpack.c.b16 %v3484, %v3482
        %v3509 = vpack.c.b16 %v3485, %v3483
        %v3510 = vpack.c.b16 %v3488, %v3486
        %v3511 = vpack.c.b16 %v3489, %v3487
        %v3512 = vpack.c.b16 %v3492, %v3490
        %v3513 = vpack.c.b16 %v3493, %v3491
        %v3514 = vpack.c.b16 %v3496, %v3494
        %v3515 = vpack.c.b16 %v3497, %v3495
        %v3516 = vpack.c.b16 %v3498, %v3498
        %v3517 = vpack.c.b16 %v3499, %v3499
        %3536 = vmatprep.subr.bf16.mxu0 %v3299
        %3537 = vmatpush1.bf16.msra.mxu0 %v3298
        %3538 = vmatprep.subr.bf16.mxu0 %v3301
        %3539 = vmatpush1.bf16.msra.mxu0 %v3300
        %3540 = vmatprep.subr.bf16.mxu0 %v3303
        %3541 = vmatpush1.bf16.msra.mxu0 %v3302
        %3542 = vmatprep.subr.bf16.mxu0 %v3305
        %3543 = vmatpush1.bf16.msra.mxu0 %v3304
        %3544 = vmatprep.subr.bf16.mxu0 %v3307
        %3545 = vmatpush1.bf16.msra.mxu0 %v3306
        %3546 = vmatprep.subr.bf16.mxu0 %v3309
        %3547 = vmatpush1.bf16.msra.mxu0 %v3308
        %3548 = vmatprep.subr.bf16.mxu0 %v3311
        %3549 = vmatpush1.bf16.msra.mxu0 %v3310
        %3550 = vmatprep.subr.bf16.mxu0 %v3313
        %3551 = vmatpush1.bf16.msra.mxu0 %v3312
        %3552 = vmatprep.subr.bf16.mxu0 %v3315
        %3553 = vmatpush1.bf16.msra.mxu0 %v3314
        %3554 = vmatprep.subr.bf16.mxu0 %v3317
        %3555 = vmatpush1.bf16.msra.mxu0 %v3316
        %3556 = vmatprep.subr.bf16.mxu0 %v3319
        %3557 = vmatpush1.bf16.msra.mxu0 %v3318
        %3558 = vmatprep.subr.bf16.mxu0 %v3321
        %3559 = vmatpush1.bf16.msra.mxu0 %v3320
        %3560 = vmatprep.subr.bf16.mxu0 %v3323
        %3561 = vmatpush1.bf16.msra.mxu0 %v3322
        %3562 = vmatprep.subr.bf16.mxu0 %v3325
        %3563 = vmatpush1.bf16.msra.mxu0 %v3324
        %3564 = vmatprep.subr.bf16.mxu0 %v3327
        %3565 = vmatpush1.bf16.msra.mxu0 %v3326
        %3566 = vmatprep.subr.bf16.mxu0 %v3329
        %3567 = vmatpush1.bf16.msra.mxu0 %v3328
        %3568 = vmatprep.mubr.bf16.mxu0 %v3501
        %3569 = vmatmul.mubr.bf16.gmra.mrb[0].mxu0 %v3500
        %v3570 = vpop.f32.mrb[0].mxu0
        %v3571 = vadd.f32 %v3367, %v3570
        %v3572 = vpop.f32.mrb[0].mxu0
        %v3573 = vadd.f32 %v3367, %v3572
        %v3574 = vpop.f32.mrb[0].mxu0
        %v3575 = vadd.f32 %v3372, %v3574
        %v3576 = vpop.f32.mrb[0].mxu0
        %v3577 = vadd.f32 %v3372, %v3576
        %3578 = vmatprep.mubr.bf16.mxu0 %v3503
        %3579 = vmatmul.mubr.bf16.gmra.mrb[0].mxu0 %v3502
        %v3580 = vpop.f32.mrb[0].mxu0
        %v3581 = vadd.f32 %v3377, %v3580
        %v3582 = vpop.f32.mrb[0].mxu0
        %v3583 = vadd.f32 %v3377, %v3582
        %v3584 = vpop.f32.mrb[0].mxu0
        %v3585 = vadd.f32 %v3382, %v3584
        %v3586 = vpop.f32.mrb[0].mxu0
        %v3587 = vadd.f32 %v3382, %v3586
        %3588 = vmatprep.mubr.bf16.mxu0 %v3505
        %3589 = vmatmul.mubr.bf16.gmra.mrb[0].mxu0 %v3504
        %v3590 = vpop.f32.mrb[0].mxu0
        %v3591 = vadd.f32 %v3387, %v3590
        %v3592 = vpop.f32.mrb[0].mxu0
        %v3593 = vadd.f32 %v3387, %v3592
        %v3594 = vpop.f32.mrb[0].mxu0
        %v3595 = vadd.f32 %v3392, %v3594
        %v3596 = vpop.f32.mrb[0].mxu0
        %v3597 = vadd.f32 %v3392, %v3596
        %3598 = vmatprep.mubr.bf16.mxu0 %v3507
        %3599 = vmatmul.mubr.bf16.gmra.mrb[0].mxu0 %v3506
        %v3600 = vpop.f32.mrb[0].mxu0
        %v3601 = vadd.f32 %v3397, %v3600
        %v3602 = vpop.f32.mrb[0].mxu0
        %v3603 = vadd.f32 %v3397, %v3602
        %v3604 = vpop.f32.mrb[0].mxu0
        %v3605 = vadd.f32 %v3402, %v3604
        %v3606 = vpop.f32.mrb[0].mxu0
        %v3607 = vadd.f32 %v3402, %v3606
        %3608 = vmatprep.mubr.bf16.mxu0 %v3509
        %3609 = vmatmul.mubr.bf16.gmra.mrb[0].mxu0 %v3508
        %v3610 = vpop.f32.mrb[0].mxu0
        %v3611 = vadd.f32 %v3407, %v3610
        %v3612 = vpop.f32.mrb[0].mxu0
        %v3613 = vadd.f32 %v3407, %v3612
        %v3614 = vpop.f32.mrb[0].mxu0
        %v3615 = vadd.f32 %v3412, %v3614
        %v3616 = vpop.f32.mrb[0].mxu0
        %v3617 = vadd.f32 %v3412, %v3616
        %3618 = vmatprep.mubr.bf16.mxu0 %v3511
        %3619 = vmatmul.mubr.bf16.gmra.mrb[0].mxu0 %v3510
        %v3620 = vpop.f32.mrb[0].mxu0
        %v3621 = vadd.f32 %v3417, %v3620
        %v3622 = vpop.f32.mrb[0].mxu0
        %v3623 = vadd.f32 %v3417, %v3622
        %v3624 = vpop.f32.mrb[0].mxu0
        %v3625 = vadd.f32 %v3422, %v3624
        %v3626 = vpop.f32.mrb[0].mxu0
        %v3627 = vadd.f32 %v3422, %v3626
        %3628 = vmatprep.mubr.bf16.mxu0 %v3513
        %3629 = vmatmul.mubr.bf16.gmra.mrb[0].mxu0 %v3512
        %v3630 = vpop.f32.mrb[0].mxu0
        %v3631 = vadd.f32 %v3427, %v3630
        %v3632 = vpop.f32.mrb[0].mxu0
        %v3633 = vadd.f32 %v3427, %v3632
        %v3634 = vpop.f32.mrb[0].mxu0
        %v3635 = vadd.f32 %v3432, %v3634
        %v3636 = vpop.f32.mrb[0].mxu0
        %v3637 = vadd.f32 %v3432, %v3636
        %3638 = vmatprep.mubr.bf16.mxu0 %v3515
        %3639 = vmatmul.mubr.bf16.gmra.mrb[0].mxu0 %v3514
        %v3640 = vpop.f32.mrb[0].mxu0
        %v3641 = vadd.f32 %v3437, %v3640
        %v3642 = vpop.f32.mrb[0].mxu0
        %v3643 = vadd.f32 %v3437, %v3642
        %v3644 = vpop.f32.mrb[0].mxu0
        %v3645 = vadd.f32 %v3442, %v3644
        %v3646 = vpop.f32.mrb[0].mxu0
        %v3647 = vadd.f32 %v3442, %v3646
        %3648 = vmatprep.mubr.bf16.mxu0 %v3517
        %3649 = vmatmul.mubr.bf16.gmra.mrb[0].mxu0 %v3516
        %v3650 = vpop.f32.mrb[0].mxu0
        %v3651 = vadd.f32 %v3447, %v3650
        %v3652 = vpop.f32.mrb[0].mxu0
        %v3653 = vadd.f32 %v3447, %v3652
        %v3654 = vpop.f32.mrb[0].mxu0
        %v3655 = vpop.f32.mrb[0].mxu0
        %3656 = vdwg.mxu0
        %v3657 = vpack.c.bf16 %v3575, %v3571
        %v3658 = vpack.c.bf16 %v3577, %v3573
        %v3659 = vpack.c.bf16 %v3585, %v3581
        %v3660 = vpack.c.bf16 %v3587, %v3583
        %v3661 = vpack.c.bf16 %v3595, %v3591
        %v3662 = vpack.c.bf16 %v3597, %v3593
        %v3663 = vpack.c.bf16 %v3605, %v3601
        %v3664 = vpack.c.bf16 %v3607, %v3603
        %v3665 = vpack.c.bf16 %v3615, %v3611
        %v3666 = vpack.c.bf16 %v3617, %v3613
        %v3667 = vpack.c.bf16 %v3625, %v3621
        %v3668 = vpack.c.bf16 %v3627, %v3623
        %v3669 = vpack.c.bf16 %v3635, %v3631
        %v3670 = vpack.c.bf16 %v3637, %v3633
        %v3671 = vpack.c.bf16 %v3645, %v3641
        %v3672 = vpack.c.bf16 %v3647, %v3643
        %v3673 = vpack.c.bf16 %v3651, %v3651
        %v3674 = vpack.c.bf16 %v3653, %v3653
        %v3675 = vld [vmem:[#allocation7] sm:$0xff]
        %v3676 = vld [vmem:[#allocation7 + $0x8] sm:$0xff]
        %v3677 = vld [vmem:[#allocation7 + $0x10] sm:$0xff]
        %v3678 = vld [vmem:[#allocation7 + $0x18] sm:$0xff]
        %v3679 = vld [vmem:[#allocation7 + $0x20] sm:$0xff]
        %v3680 = vld [vmem:[#allocation7 + $0x28] sm:$0xff]
        %v3681 = vld [vmem:[#allocation7 + $0x30] sm:$0xff]
        %v3682 = vld [vmem:[#allocation7 + $0x38] sm:$0xff]
        %v3683 = vld [vmem:[#allocation7 + $0x40] sm:$0xff]
        %v3684 = vld [vmem:[#allocation7 + $0x48] sm:$0xff]
        %v3685 = vld [vmem:[#allocation7 + $0x50] sm:$0xff]
        %v3686 = vld [vmem:[#allocation7 + $0x58] sm:$0xff]
        %v3687 = vld [vmem:[#allocation7 + $0x60] sm:$0xff]
        %v3688 = vld [vmem:[#allocation7 + $0x68] sm:$0xff]
        %v3689 = vld [vmem:[#allocation7 + $0x70] sm:$0xff]
        %v3690 = vld [vmem:[#allocation7 + $0x78] sm:$0xff]
        %v3691 = vld [vmem:[#allocation7 + $0x80] sm:$0xff]
        %v3692 = vld [vmem:[#allocation7 + $0x88] sm:$0xff]
        %v3693 = vld [vmem:[#allocation7 + $0x90] sm:$0xff]
        %v3694 = vld [vmem:[#allocation7 + $0x98] sm:$0xff]
        %v3695 = vld [vmem:[#allocation7 + $0xa0] sm:$0xff]
        %v3696 = vld [vmem:[#allocation7 + $0xa8] sm:$0xff]
        %v3697 = vld [vmem:[#allocation7 + $0xb0] sm:$0xff]
        %v3698 = vld [vmem:[#allocation7 + $0xb8] sm:$0xff]
        %v3699 = vld [vmem:[#allocation7 + $0xc0] sm:$0xff]
        %v3700 = vld [vmem:[#allocation7 + $0xc8] sm:$0xff]
        %v3701 = vld [vmem:[#allocation7 + $0xd0] sm:$0xff]
        %v3702 = vld [vmem:[#allocation7 + $0xd8] sm:$0xff]
        %v3703 = vld [vmem:[#allocation7 + $0xe0] sm:$0xff]
        %v3704 = vld [vmem:[#allocation7 + $0xe8] sm:$0xff]
        %v3705 = vld [vmem:[#allocation7 + $0xf0] sm:$0xff]
        %v3706 = vld [vmem:[#allocation7 + $0xf8] sm:$0xff]
        %v3707 = vld [vmem:[#allocation7 + $0x100] sm:$0xff]
        %v3708 = vld [vmem:[#allocation7 + $0x108] sm:$0xff]
        %v3709 = vld [vmem:[#allocation7 + $0x110] sm:$0xff]
        %v3710 = vld [vmem:[#allocation7 + $0x118] sm:$0xff]
        %v3711 = vld [vmem:[#allocation7 + $0x120] sm:$0xff]
        %v3712 = vld [vmem:[#allocation7 + $0x128] sm:$0xff]
        %v3713 = vld [vmem:[#allocation7 + $0x130] sm:$0xff]
        %v3714 = vld [vmem:[#allocation7 + $0x138] sm:$0xff]
        %v3715 = vld [vmem:[#allocation7 + $0x140] sm:$0xff]
        %v3716 = vld [vmem:[#allocation7 + $0x148] sm:$0xff]
        %v3717 = vld [vmem:[#allocation7 + $0x150] sm:$0xff]
        %v3718 = vld [vmem:[#allocation7 + $0x158] sm:$0xff]
        %v3719 = vld [vmem:[#allocation7 + $0x160] sm:$0xff]
        %v3720 = vld [vmem:[#allocation7 + $0x168] sm:$0xff]
        %v3721 = vld [vmem:[#allocation7 + $0x170] sm:$0xff]
        %v3722 = vld [vmem:[#allocation7 + $0x178] sm:$0xff]
        %v3723 = vld [vmem:[#allocation7 + $0x180] sm:$0xff]
        %v3724 = vld [vmem:[#allocation7 + $0x188] sm:$0xff]
        %v3725 = vld [vmem:[#allocation7 + $0x190] sm:$0xff]
        %v3726 = vld [vmem:[#allocation7 + $0x198] sm:$0xff]
        %v3727 = vld [vmem:[#allocation7 + $0x1a0] sm:$0xff]
        %v3728 = vld [vmem:[#allocation7 + $0x1a8] sm:$0xff]
        %v3729 = vld [vmem:[#allocation7 + $0x1b0] sm:$0xff]
        %v3730 = vld [vmem:[#allocation7 + $0x1b8] sm:$0xff]
        %v3731 = vld [vmem:[#allocation7 + $0x1c0] sm:$0xff]
        %v3732 = vld [vmem:[#allocation7 + $0x1c8] sm:$0xff]
        %v3733 = vld [vmem:[#allocation7 + $0x1d0] sm:$0xff]
        %v3734 = vld [vmem:[#allocation7 + $0x1d8] sm:$0xff]
        %v3735 = vld [vmem:[#allocation7 + $0x1e0] sm:$0xff]
        %v3736 = vld [vmem:[#allocation7 + $0x1e8] sm:$0xff]
        %v3737 = vld [vmem:[#allocation7 + $0x1f0] sm:$0xff]
        %v3738 = vld [vmem:[#allocation7 + $0x1f8] sm:$0xff]
        %v3739 = vld [vmem:[#allocation7 + $0x200] sm:$0xff]
        %v3740 = vld [vmem:[#allocation7 + $0x208] sm:$0xff]
        %v3741 = vld [vmem:[#allocation7 + $0x210] sm:$0xff]
        %v3742 = vld [vmem:[#allocation7 + $0x218] sm:$0xff]
        %v3743 = vld [vmem:[#allocation7 + $0x220] sm:$0xff]
        %v3744 = vld [vmem:[#allocation7 + $0x228] sm:$0xff]
        %v3745 = vld [vmem:[#allocation7 + $0x230] sm:$0xff]
        %v3746 = vld [vmem:[#allocation7 + $0x238] sm:$0xff]
        %v3747 = vld [vmem:[#allocation7 + $0x240] sm:$0xff]
        %v3748 = vld [vmem:[#allocation7 + $0x248] sm:$0xff]
        %v3749 = vld [vmem:[#allocation7 + $0x250] sm:$0xff]
        %v3750 = vld [vmem:[#allocation7 + $0x258] sm:$0xff]
        %v3751 = vld [vmem:[#allocation7 + $0x260] sm:$0xff]
        %v3752 = vld [vmem:[#allocation7 + $0x268] sm:$0xff]
        %v3753 = vld [vmem:[#allocation7 + $0x270] sm:$0xff]
        %v3754 = vld [vmem:[#allocation7 + $0x278] sm:$0xff]
        %v3755 = vld [vmem:[#allocation7 + $0x280] sm:$0xff]
        %v3756 = vld [vmem:[#allocation7 + $0x288] sm:$0xff]
        %v3757 = vld [vmem:[#allocation7 + $0x290] sm:$0xff]
        %v3758 = vld [vmem:[#allocation7 + $0x298] sm:$0xff]
        %v3759 = vld [vmem:[#allocation7 + $0x2a0] sm:$0xff]
        %v3760 = vld [vmem:[#allocation7 + $0x2a8] sm:$0xff]
        %v3761 = vld [vmem:[#allocation7 + $0x2b0] sm:$0xff]
        %v3762 = vld [vmem:[#allocation7 + $0x2b8] sm:$0xff]
        %v3763 = vld [vmem:[#allocation7 + $0x2c0] sm:$0xff]
        %v3764 = vld [vmem:[#allocation7 + $0x2c8] sm:$0xff]
        %v3765 = vld [vmem:[#allocation7 + $0x2d0] sm:$0xff]
        %v3766 = vld [vmem:[#allocation7 + $0x2d8] sm:$0xff]
        %v3767 = vld [vmem:[#allocation7 + $0x2e0] sm:$0xff]
        %v3768 = vld [vmem:[#allocation7 + $0x2e8] sm:$0xff]
        %v3769 = vld [vmem:[#allocation7 + $0x2f0] sm:$0xff]
        %v3770 = vld [vmem:[#allocation7 + $0x2f8] sm:$0xff]
        %v3771 = vld [vmem:[#allocation7 + $0x300] sm:$0xff]
        %v3772 = vld [vmem:[#allocation7 + $0x308] sm:$0xff]
        %v3773 = vld [vmem:[#allocation7 + $0x310] sm:$0xff]
        %v3774 = vld [vmem:[#allocation7 + $0x318] sm:$0xff]
        %v3775 = vld [vmem:[#allocation7 + $0x320] sm:$0xff]
        %v3776 = vld [vmem:[#allocation7 + $0x328] sm:$0xff]
        %v3777 = vld [vmem:[#allocation7 + $0x330] sm:$0xff]
        %v3778 = vld [vmem:[#allocation7 + $0x338] sm:$0xff]
        %v3779 = vld [vmem:[#allocation7 + $0x340] sm:$0xff]
        %v3780 = vld [vmem:[#allocation7 + $0x348] sm:$0xff]
        %v3781 = vld [vmem:[#allocation7 + $0x350] sm:$0xff]
        %v3782 = vld [vmem:[#allocation7 + $0x358] sm:$0xff]
        %v3783 = vld [vmem:[#allocation7 + $0x360] sm:$0xff]
        %v3784 = vld [vmem:[#allocation7 + $0x368] sm:$0xff]
        %v3785 = vld [vmem:[#allocation7 + $0x370] sm:$0xff]
        %v3786 = vld [vmem:[#allocation7 + $0x378] sm:$0xff]
        %v3787 = vld [vmem:[#allocation7 + $0x380] sm:$0xff]
        %v3788 = vld [vmem:[#allocation7 + $0x388] sm:$0xff]
        %v3789 = vld [vmem:[#allocation7 + $0x390] sm:$0xff]
        %v3790 = vld [vmem:[#allocation7 + $0x398] sm:$0xff]
        %v3791 = vld [vmem:[#allocation7 + $0x3a0] sm:$0xff]
        %v3792 = vld [vmem:[#allocation7 + $0x3a8] sm:$0xff]
        %v3793 = vld [vmem:[#allocation7 + $0x3b0] sm:$0xff]
        %v3794 = vld [vmem:[#allocation7 + $0x3b8] sm:$0xff]
        %v3795 = vld [vmem:[#allocation7 + $0x3c0] sm:$0xff]
        %v3796 = vld [vmem:[#allocation7 + $0x3c8] sm:$0xff]
        %v3797 = vld [vmem:[#allocation7 + $0x3d0] sm:$0xff]
        %v3798 = vld [vmem:[#allocation7 + $0x3d8] sm:$0xff]
        %v3799 = vld [vmem:[#allocation7 + $0x3e0] sm:$0xff]
        %v3800 = vld [vmem:[#allocation7 + $0x3e8] sm:$0xff]
        %v3801 = vld [vmem:[#allocation7 + $0x3f0] sm:$0xff]
        %v3802 = vld [vmem:[#allocation7 + $0x3f8] sm:$0xff]
        %v3931 = vunpack.c.l.b16 %v3675
        %v3932 = vunpack.c.h.b16 %v3675
        %v3933 = vunpack.c.l.b16 %v3676
        %v3934 = vunpack.c.h.b16 %v3676
        %v3935 = vunpack.c.l.b16 %v3677
        %v3936 = vunpack.c.h.b16 %v3677
        %v3937 = vunpack.c.l.b16 %v3678
        %v3938 = vunpack.c.h.b16 %v3678
        %v3939 = vunpack.c.l.b16 %v3679
        %v3940 = vunpack.c.h.b16 %v3679
        %v3941 = vunpack.c.l.b16 %v3680
        %v3942 = vunpack.c.h.b16 %v3680
        %v3943 = vunpack.c.l.b16 %v3681
        %v3944 = vunpack.c.h.b16 %v3681
        %v3945 = vunpack.c.l.b16 %v3682
        %v3946 = vunpack.c.h.b16 %v3682
        %v3947 = vunpack.c.l.b16 %v3683
        %v3948 = vunpack.c.h.b16 %v3683
        %v3949 = vunpack.c.l.b16 %v3684
        %v3950 = vunpack.c.h.b16 %v3684
        %v3951 = vunpack.c.l.b16 %v3685
        %v3952 = vunpack.c.h.b16 %v3685
        %v3953 = vunpack.c.l.b16 %v3686
        %v3954 = vunpack.c.h.b16 %v3686
        %v3955 = vunpack.c.l.b16 %v3687
        %v3956 = vunpack.c.h.b16 %v3687
        %v3957 = vunpack.c.l.b16 %v3688
        %v3958 = vunpack.c.h.b16 %v3688
        %v3959 = vunpack.c.l.b16 %v3689
        %v3960 = vunpack.c.h.b16 %v3689
        %v3961 = vunpack.c.l.b16 %v3690
        %v3962 = vunpack.c.h.b16 %v3690
        %v3963 = vunpack.c.l.b16 %v3691
        %v3964 = vunpack.c.h.b16 %v3691
        %v3965 = vunpack.c.l.b16 %v3692
        %v3966 = vunpack.c.h.b16 %v3692
        %v3967 = vunpack.c.l.b16 %v3693
        %v3968 = vunpack.c.h.b16 %v3693
        %v3969 = vunpack.c.l.b16 %v3694
        %v3970 = vunpack.c.h.b16 %v3694
        %v3971 = vunpack.c.l.b16 %v3695
        %v3972 = vunpack.c.h.b16 %v3695
        %v3973 = vunpack.c.l.b16 %v3696
        %v3974 = vunpack.c.h.b16 %v3696
        %v3975 = vunpack.c.l.b16 %v3697
        %v3976 = vunpack.c.h.b16 %v3697
        %v3977 = vunpack.c.l.b16 %v3698
        %v3978 = vunpack.c.h.b16 %v3698
        %v3979 = vunpack.c.l.b16 %v3699
        %v3980 = vunpack.c.h.b16 %v3699
        %v3981 = vunpack.c.l.b16 %v3700
        %v3982 = vunpack.c.h.b16 %v3700
        %v3983 = vunpack.c.l.b16 %v3701
        %v3984 = vunpack.c.h.b16 %v3701
        %v3985 = vunpack.c.l.b16 %v3702
        %v3986 = vunpack.c.h.b16 %v3702
        %v3987 = vunpack.c.l.b16 %v3703
        %v3988 = vunpack.c.h.b16 %v3703
        %v3989 = vunpack.c.l.b16 %v3704
        %v3990 = vunpack.c.h.b16 %v3704
        %v3991 = vunpack.c.l.b16 %v3705
        %v3992 = vunpack.c.h.b16 %v3705
        %v3993 = vunpack.c.l.b16 %v3706
        %v3994 = vunpack.c.h.b16 %v3706
        %v3995 = vunpack.c.l.b16 %v3707
        %v3996 = vunpack.c.h.b16 %v3707
        %v3997 = vunpack.c.l.b16 %v3708
        %v3998 = vunpack.c.h.b16 %v3708
        %v3999 = vunpack.c.l.b16 %v3709
        %v4000 = vunpack.c.h.b16 %v3709
        %v4001 = vunpack.c.l.b16 %v3710
        %v4002 = vunpack.c.h.b16 %v3710
        %v4003 = vunpack.c.l.b16 %v3711
        %v4004 = vunpack.c.h.b16 %v3711
        %v4005 = vunpack.c.l.b16 %v3712
        %v4006 = vunpack.c.h.b16 %v3712
        %v4007 = vunpack.c.l.b16 %v3713
        %v4008 = vunpack.c.h.b16 %v3713
        %v4009 = vunpack.c.l.b16 %v3714
        %v4010 = vunpack.c.h.b16 %v3714
        %v4011 = vunpack.c.l.b16 %v3715
        %v4012 = vunpack.c.h.b16 %v3715
        %v4013 = vunpack.c.l.b16 %v3716
        %v4014 = vunpack.c.h.b16 %v3716
        %v4015 = vunpack.c.l.b16 %v3717
        %v4016 = vunpack.c.h.b16 %v3717
        %v4017 = vunpack.c.l.b16 %v3718
        %v4018 = vunpack.c.h.b16 %v3718
        %v4019 = vunpack.c.l.b16 %v3719
        %v4020 = vunpack.c.h.b16 %v3719
        %v4021 = vunpack.c.l.b16 %v3720
        %v4022 = vunpack.c.h.b16 %v3720
        %v4023 = vunpack.c.l.b16 %v3721
        %v4024 = vunpack.c.h.b16 %v3721
        %v4025 = vunpack.c.l.b16 %v3722
        %v4026 = vunpack.c.h.b16 %v3722
        %v4027 = vunpack.c.l.b16 %v3723
        %v4028 = vunpack.c.h.b16 %v3723
        %v4029 = vunpack.c.l.b16 %v3724
        %v4030 = vunpack.c.h.b16 %v3724
        %v4031 = vunpack.c.l.b16 %v3725
        %v4032 = vunpack.c.h.b16 %v3725
        %v4033 = vunpack.c.l.b16 %v3726
        %v4034 = vunpack.c.h.b16 %v3726
        %v4035 = vunpack.c.l.b16 %v3727
        %v4036 = vunpack.c.h.b16 %v3727
        %v4037 = vunpack.c.l.b16 %v3728
        %v4038 = vunpack.c.h.b16 %v3728
        %v4039 = vunpack.c.l.b16 %v3729
        %v4040 = vunpack.c.h.b16 %v3729
        %v4041 = vunpack.c.l.b16 %v3730
        %v4042 = vunpack.c.h.b16 %v3730
        %v4043 = vunpack.c.l.b16 %v3731
        %v4044 = vunpack.c.h.b16 %v3731
        %v4045 = vunpack.c.l.b16 %v3732
        %v4046 = vunpack.c.h.b16 %v3732
        %v4047 = vunpack.c.l.b16 %v3733
        %v4048 = vunpack.c.h.b16 %v3733
        %v4049 = vunpack.c.l.b16 %v3734
        %v4050 = vunpack.c.h.b16 %v3734
        %v4051 = vunpack.c.l.b16 %v3735
        %v4052 = vunpack.c.h.b16 %v3735
        %v4053 = vunpack.c.l.b16 %v3736
        %v4054 = vunpack.c.h.b16 %v3736
        %v4055 = vunpack.c.l.b16 %v3737
        %v4056 = vunpack.c.h.b16 %v3737
        %v4057 = vunpack.c.l.b16 %v3738
        %v4058 = vunpack.c.h.b16 %v3738
        %v4059 = vunpack.c.l.b16 %v3739
        %v4060 = vunpack.c.h.b16 %v3739
        %v4061 = vunpack.c.l.b16 %v3740
        %v4062 = vunpack.c.h.b16 %v3740
        %v4063 = vunpack.c.l.b16 %v3741
        %v4064 = vunpack.c.h.b16 %v3741
        %v4065 = vunpack.c.l.b16 %v3742
        %v4066 = vunpack.c.h.b16 %v3742
        %v4067 = vunpack.c.l.b16 %v3743
        %v4068 = vunpack.c.h.b16 %v3743
        %v4069 = vunpack.c.l.b16 %v3744
        %v4070 = vunpack.c.h.b16 %v3744
        %v4071 = vunpack.c.l.b16 %v3745
        %v4072 = vunpack.c.h.b16 %v3745
        %v4073 = vunpack.c.l.b16 %v3746
        %v4074 = vunpack.c.h.b16 %v3746
        %v4075 = vunpack.c.l.b16 %v3747
        %v4076 = vunpack.c.h.b16 %v3747
        %v4077 = vunpack.c.l.b16 %v3748
        %v4078 = vunpack.c.h.b16 %v3748
        %v4079 = vunpack.c.l.b16 %v3749
        %v4080 = vunpack.c.h.b16 %v3749
        %v4081 = vunpack.c.l.b16 %v3750
        %v4082 = vunpack.c.h.b16 %v3750
        %v4083 = vunpack.c.l.b16 %v3751
        %v4084 = vunpack.c.h.b16 %v3751
        %v4085 = vunpack.c.l.b16 %v3752
        %v4086 = vunpack.c.h.b16 %v3752
        %v4087 = vunpack.c.l.b16 %v3753
        %v4088 = vunpack.c.h.b16 %v3753
        %v4089 = vunpack.c.l.b16 %v3754
        %v4090 = vunpack.c.h.b16 %v3754
        %v4091 = vunpack.c.l.b16 %v3755
        %v4092 = vunpack.c.h.b16 %v3755
        %v4093 = vunpack.c.l.b16 %v3756
        %v4094 = vunpack.c.h.b16 %v3756
        %v4095 = vunpack.c.l.b16 %v3757
        %v4096 = vunpack.c.h.b16 %v3757
        %v4097 = vunpack.c.l.b16 %v3758
        %v4098 = vunpack.c.h.b16 %v3758
        %v4099 = vunpack.c.l.b16 %v3759
        %v4100 = vunpack.c.h.b16 %v3759
        %v4101 = vunpack.c.l.b16 %v3760
        %v4102 = vunpack.c.h.b16 %v3760
        %v4103 = vunpack.c.l.b16 %v3761
        %v4104 = vunpack.c.h.b16 %v3761
        %v4105 = vunpack.c.l.b16 %v3762
        %v4106 = vunpack.c.h.b16 %v3762
        %v4107 = vunpack.c.l.b16 %v3763
        %v4108 = vunpack.c.h.b16 %v3763
        %v4109 = vunpack.c.l.b16 %v3764
        %v4110 = vunpack.c.h.b16 %v3764
        %v4111 = vunpack.c.l.b16 %v3765
        %v4112 = vunpack.c.h.b16 %v3765
        %v4113 = vunpack.c.l.b16 %v3766
        %v4114 = vunpack.c.h.b16 %v3766
        %v4115 = vunpack.c.l.b16 %v3767
        %v4116 = vunpack.c.h.b16 %v3767
        %v4117 = vunpack.c.l.b16 %v3768
        %v4118 = vunpack.c.h.b16 %v3768
        %v4119 = vunpack.c.l.b16 %v3769
        %v4120 = vunpack.c.h.b16 %v3769
        %v4121 = vunpack.c.l.b16 %v3770
        %v4122 = vunpack.c.h.b16 %v3770
        %v4123 = vunpack.c.l.b16 %v3771
        %v4124 = vunpack.c.h.b16 %v3771
        %v4125 = vunpack.c.l.b16 %v3772
        %v4126 = vunpack.c.h.b16 %v3772
        %v4127 = vunpack.c.l.b16 %v3773
        %v4128 = vunpack.c.h.b16 %v3773
        %v4129 = vunpack.c.l.b16 %v3774
        %v4130 = vunpack.c.h.b16 %v3774
        %v4131 = vunpack.c.l.b16 %v3775
        %v4132 = vunpack.c.h.b16 %v3775
        %v4133 = vunpack.c.l.b16 %v3776
        %v4134 = vunpack.c.h.b16 %v3776
        %v4135 = vunpack.c.l.b16 %v3777
        %v4136 = vunpack.c.h.b16 %v3777
        %v4137 = vunpack.c.l.b16 %v3778
        %v4138 = vunpack.c.h.b16 %v3778
        %v4139 = vunpack.c.l.b16 %v3779
        %v4140 = vunpack.c.h.b16 %v3779
        %v4141 = vunpack.c.l.b16 %v3780
        %v4142 = vunpack.c.h.b16 %v3780
        %v4143 = vunpack.c.l.b16 %v3781
        %v4144 = vunpack.c.h.b16 %v3781
        %v4145 = vunpack.c.l.b16 %v3782
        %v4146 = vunpack.c.h.b16 %v3782
        %v4147 = vunpack.c.l.b16 %v3783
        %v4148 = vunpack.c.h.b16 %v3783
        %v4149 = vunpack.c.l.b16 %v3784
        %v4150 = vunpack.c.h.b16 %v3784
        %v4151 = vunpack.c.l.b16 %v3785
        %v4152 = vunpack.c.h.b16 %v3785
        %v4153 = vunpack.c.l.b16 %v3786
        %v4154 = vunpack.c.h.b16 %v3786
        %v4155 = vunpack.c.l.b16 %v3787
        %v4156 = vunpack.c.h.b16 %v3787
        %v4157 = vunpack.c.l.b16 %v3788
        %v4158 = vunpack.c.h.b16 %v3788
        %v4159 = vunpack.c.l.b16 %v3789
        %v4160 = vunpack.c.h.b16 %v3789
        %v4161 = vunpack.c.l.b16 %v3790
        %v4162 = vunpack.c.h.b16 %v3790
        %v4163 = vunpack.c.l.b16 %v3791
        %v4164 = vunpack.c.h.b16 %v3791
        %v4165 = vunpack.c.l.b16 %v3792
        %v4166 = vunpack.c.h.b16 %v3792
        %v4167 = vunpack.c.l.b16 %v3793
        %v4168 = vunpack.c.h.b16 %v3793
        %v4169 = vunpack.c.l.b16 %v3794
        %v4170 = vunpack.c.h.b16 %v3794
        %v4171 = vunpack.c.l.b16 %v3795
        %v4172 = vunpack.c.h.b16 %v3795
        %v4173 = vunpack.c.l.b16 %v3796
        %v4174 = vunpack.c.h.b16 %v3796
        %v4175 = vunpack.c.l.b16 %v3797
        %v4176 = vunpack.c.h.b16 %v3797
        %v4177 = vunpack.c.l.b16 %v3798
        %v4178 = vunpack.c.h.b16 %v3798
        %v4179 = vunpack.c.l.b16 %v3799
        %v4180 = vunpack.c.h.b16 %v3799
        %v4181 = vunpack.c.l.b16 %v3800
        %v4182 = vunpack.c.h.b16 %v3800
        %v4183 = vunpack.c.l.b16 %v3801
        %v4184 = vunpack.c.h.b16 %v3801
        %v4185 = vunpack.c.l.b16 %v3802
        %v4186 = vunpack.c.h.b16 %v3802
        %v4187 = vpack.c.b16 %v3939, %v3931
        %v4188 = vpack.c.b16 %v3940, %v3932
        %v4189 = vpack.c.b16 %v3941, %v3933
        %v4190 = vpack.c.b16 %v3942, %v3934
        %v4191 = vpack.c.b16 %v3943, %v3935
        %v4192 = vpack.c.b16 %v3944, %v3936
        %v4193 = vpack.c.b16 %v3945, %v3937
        %v4194 = vpack.c.b16 %v3946, %v3938
        %v4195 = vpack.c.b16 %v3955, %v3947
        %v4196 = vpack.c.b16 %v3956, %v3948
        %v4197 = vpack.c.b16 %v3957, %v3949
        %v4198 = vpack.c.b16 %v3958, %v3950
        %v4199 = vpack.c.b16 %v3959, %v3951
        %v4200 = vpack.c.b16 %v3960, %v3952
        %v4201 = vpack.c.b16 %v3961, %v3953
        %v4202 = vpack.c.b16 %v3962, %v3954
        %v4203 = vpack.c.b16 %v3971, %v3963
        %v4204 = vpack.c.b16 %v3972, %v3964
        %v4205 = vpack.c.b16 %v3973, %v3965
        %v4206 = vpack.c.b16 %v3974, %v3966
        %v4207 = vpack.c.b16 %v3975, %v3967
        %v4208 = vpack.c.b16 %v3976, %v3968
        %v4209 = vpack.c.b16 %v3977, %v3969
        %v4210 = vpack.c.b16 %v3978, %v3970
        %v4211 = vpack.c.b16 %v3987, %v3979
        %v4212 = vpack.c.b16 %v3988, %v3980
        %v4213 = vpack.c.b16 %v3989, %v3981
        %v4214 = vpack.c.b16 %v3990, %v3982
        %v4215 = vpack.c.b16 %v3991, %v3983
        %v4216 = vpack.c.b16 %v3992, %v3984
        %v4217 = vpack.c.b16 %v3993, %v3985
        %v4218 = vpack.c.b16 %v3994, %v3986
        %v4219 = vpack.c.b16 %v4003, %v3995
        %v4220 = vpack.c.b16 %v4004, %v3996
        %v4221 = vpack.c.b16 %v4005, %v3997
        %v4222 = vpack.c.b16 %v4006, %v3998
        %v4223 = vpack.c.b16 %v4007, %v3999
        %v4224 = vpack.c.b16 %v4008, %v4000
        %v4225 = vpack.c.b16 %v4009, %v4001
        %v4226 = vpack.c.b16 %v4010, %v4002
        %v4227 = vpack.c.b16 %v4019, %v4011
        %v4228 = vpack.c.b16 %v4020, %v4012
        %v4229 = vpack.c.b16 %v4021, %v4013
        %v4230 = vpack.c.b16 %v4022, %v4014
        %v4231 = vpack.c.b16 %v4023, %v4015
        %v4232 = vpack.c.b16 %v4024, %v4016
        %v4233 = vpack.c.b16 %v4025, %v4017
        %v4234 = vpack.c.b16 %v4026, %v4018
        %v4235 = vpack.c.b16 %v4035, %v4027
        %v4236 = vpack.c.b16 %v4036, %v4028
        %v4237 = vpack.c.b16 %v4037, %v4029
        %v4238 = vpack.c.b16 %v4038, %v4030
        %v4239 = vpack.c.b16 %v4039, %v4031
        %v4240 = vpack.c.b16 %v4040, %v4032
        %v4241 = vpack.c.b16 %v4041, %v4033
        %v4242 = vpack.c.b16 %v4042, %v4034
        %v4243 = vpack.c.b16 %v4051, %v4043
        %v4244 = vpack.c.b16 %v4052, %v4044
        %v4245 = vpack.c.b16 %v4053, %v4045
        %v4246 = vpack.c.b16 %v4054, %v4046
        %v4247 = vpack.c.b16 %v4055, %v4047
        %v4248 = vpack.c.b16 %v4056, %v4048
        %v4249 = vpack.c.b16 %v4057, %v4049
        %v4250 = vpack.c.b16 %v4058, %v4050
        %v4251 = vpack.c.b16 %v4067, %v4059
        %v4252 = vpack.c.b16 %v4068, %v4060
        %v4253 = vpack.c.b16 %v4069, %v4061
        %v4254 = vpack.c.b16 %v4070, %v4062
        %v4255 = vpack.c.b16 %v4071, %v4063
        %v4256 = vpack.c.b16 %v4072, %v4064
        %v4257 = vpack.c.b16 %v4073, %v4065
        %v4258 = vpack.c.b16 %v4074, %v4066
        %v4259 = vpack.c.b16 %v4083, %v4075
        %v4260 = vpack.c.b16 %v4084, %v4076
        %v4261 = vpack.c.b16 %v4085, %v4077
        %v4262 = vpack.c.b16 %v4086, %v4078
        %v4263 = vpack.c.b16 %v4087, %v4079
        %v4264 = vpack.c.b16 %v4088, %v4080
        %v4265 = vpack.c.b16 %v4089, %v4081
        %v4266 = vpack.c.b16 %v4090, %v4082
        %v4267 = vpack.c.b16 %v4099, %v4091
        %v4268 = vpack.c.b16 %v4100, %v4092
        %v4269 = vpack.c.b16 %v4101, %v4093
        %v4270 = vpack.c.b16 %v4102, %v4094
        %v4271 = vpack.c.b16 %v4103, %v4095
        %v4272 = vpack.c.b16 %v4104, %v4096
        %v4273 = vpack.c.b16 %v4105, %v4097
        %v4274 = vpack.c.b16 %v4106, %v4098
        %v4275 = vpack.c.b16 %v4115, %v4107
        %v4276 = vpack.c.b16 %v4116, %v4108
        %v4277 = vpack.c.b16 %v4117, %v4109
        %v4278 = vpack.c.b16 %v4118, %v4110
        %v4279 = vpack.c.b16 %v4119, %v4111
        %v4280 = vpack.c.b16 %v4120, %v4112
        %v4281 = vpack.c.b16 %v4121, %v4113
        %v4282 = vpack.c.b16 %v4122, %v4114
        %v4283 = vpack.c.b16 %v4131, %v4123
        %v4284 = vpack.c.b16 %v4132, %v4124
        %v4285 = vpack.c.b16 %v4133, %v4125
        %v4286 = vpack.c.b16 %v4134, %v4126
        %v4287 = vpack.c.b16 %v4135, %v4127
        %v4288 = vpack.c.b16 %v4136, %v4128
        %v4289 = vpack.c.b16 %v4137, %v4129
        %v4290 = vpack.c.b16 %v4138, %v4130
        %v4291 = vpack.c.b16 %v4147, %v4139
        %v4292 = vpack.c.b16 %v4148, %v4140
        %v4293 = vpack.c.b16 %v4149, %v4141
        %v4294 = vpack.c.b16 %v4150, %v4142
        %v4295 = vpack.c.b16 %v4151, %v4143
        %v4296 = vpack.c.b16 %v4152, %v4144
        %v4297 = vpack.c.b16 %v4153, %v4145
        %v4298 = vpack.c.b16 %v4154, %v4146
        %v4299 = vpack.c.b16 %v4163, %v4155
        %v4300 = vpack.c.b16 %v4164, %v4156
        %v4301 = vpack.c.b16 %v4165, %v4157
        %v4302 = vpack.c.b16 %v4166, %v4158
        %v4303 = vpack.c.b16 %v4167, %v4159
        %v4304 = vpack.c.b16 %v4168, %v4160
        %v4305 = vpack.c.b16 %v4169, %v4161
        %v4306 = vpack.c.b16 %v4170, %v4162
        %v4307 = vpack.c.b16 %v4179, %v4171
        %v4308 = vpack.c.b16 %v4180, %v4172
        %v4309 = vpack.c.b16 %v4181, %v4173
        %v4310 = vpack.c.b16 %v4182, %v4174
        %v4311 = vpack.c.b16 %v4183, %v4175
        %v4312 = vpack.c.b16 %v4184, %v4176
        %v4313 = vpack.c.b16 %v4185, %v4177
        %v4314 = vpack.c.b16 %v4186, %v4178
        %4443 = vmatprep.subr.bf16.mxu0 %v4188
        %4444 = vmatpush1.bf16.msra.mxu0 %v4187
        %4445 = vmatprep.subr.bf16.mxu0 %v4196
        %4446 = vmatpush1.bf16.msra.mxu0 %v4195
        %4447 = vmatprep.subr.bf16.mxu0 %v4204
        %4448 = vmatpush1.bf16.msra.mxu0 %v4203
        %4449 = vmatprep.subr.bf16.mxu0 %v4212
        %4450 = vmatpush1.bf16.msra.mxu0 %v4211
        %4451 = vmatprep.subr.bf16.mxu0 %v4220
        %4452 = vmatpush1.bf16.msra.mxu0 %v4219
        %4453 = vmatprep.subr.bf16.mxu0 %v4228
        %4454 = vmatpush1.bf16.msra.mxu0 %v4227
        %4455 = vmatprep.subr.bf16.mxu0 %v4236
        %4456 = vmatpush1.bf16.msra.mxu0 %v4235
        %4457 = vmatprep.subr.bf16.mxu0 %v4244
        %4458 = vmatpush1.bf16.msra.mxu0 %v4243
        %4459 = vmatprep.subr.bf16.mxu0 %v4252
        %4460 = vmatpush1.bf16.msra.mxu0 %v4251
        %4461 = vmatprep.subr.bf16.mxu0 %v4260
        %4462 = vmatpush1.bf16.msra.mxu0 %v4259
        %4463 = vmatprep.subr.bf16.mxu0 %v4268
        %4464 = vmatpush1.bf16.msra.mxu0 %v4267
        %4465 = vmatprep.subr.bf16.mxu0 %v4276
        %4466 = vmatpush1.bf16.msra.mxu0 %v4275
        %4467 = vmatprep.subr.bf16.mxu0 %v4284
        %4468 = vmatpush1.bf16.msra.mxu0 %v4283
        %4469 = vmatprep.subr.bf16.mxu0 %v4292
        %4470 = vmatpush1.bf16.msra.mxu0 %v4291
        %4471 = vmatprep.subr.bf16.mxu0 %v4300
        %4472 = vmatpush1.bf16.msra.mxu0 %v4299
        %4473 = vmatprep.subr.bf16.mxu0 %v4308
        %4474 = vmatpush1.bf16.msra.mxu0 %v4307
        %4475 = vmatprep.mubr.bf16.mxu0 %v3658
        %4476 = vmatmul.mubr.bf16.gmra.mrb[0].mxu0 %v3657
        %v4477 = vpop.f32.mrb[0].mxu0
        %v4478 = vadd.f32 0.0, %v4477
        %v4479 = vpop.f32.mrb[0].mxu0
        %v4480 = vadd.f32 0.0, %v4479
        %v4481 = vpop.f32.mrb[0].mxu0
        %v4482 = vadd.f32 0.0, %v4481
        %v4483 = vpop.f32.mrb[0].mxu0
        %v4484 = vadd.f32 0.0, %v4483
        %4485 = vmatprep.mubr.bf16.mxu0 %v3660
        %4486 = vmatmul.mubr.bf16.gmra.mrb[0].mxu0 %v3659
        %v4487 = vpop.f32.mrb[0].mxu0
        %v4488 = vadd.f32 0.0, %v4487
        %v4489 = vpop.f32.mrb[0].mxu0
        %v4490 = vadd.f32 0.0, %v4489
        %v4491 = vpop.f32.mrb[0].mxu0
        %v4492 = vadd.f32 0.0, %v4491
        %v4493 = vpop.f32.mrb[0].mxu0
        %v4494 = vadd.f32 0.0, %v4493
        %4495 = vmatprep.mubr.bf16.mxu0 %v3662
        %4496 = vmatmul.mubr.bf16.gmra.mrb[0].mxu0 %v3661
        %v4497 = vpop.f32.mrb[0].mxu0
        %v4498 = vadd.f32 0.0, %v4497
        %v4499 = vpop.f32.mrb[0].mxu0
        %v4500 = vadd.f32 0.0, %v4499
        %v4501 = vpop.f32.mrb[0].mxu0
        %v4502 = vadd.f32 0.0, %v4501
        %v4503 = vpop.f32.mrb[0].mxu0
        %v4504 = vadd.f32 0.0, %v4503
        %4505 = vmatprep.mubr.bf16.mxu0 %v3664
        %4506 = vmatmul.mubr.bf16.gmra.mrb[0].mxu0 %v3663
        %v4507 = vpop.f32.mrb[0].mxu0
        %v4508 = vadd.f32 0.0, %v4507
        %v4509 = vpop.f32.mrb[0].mxu0
        %v4510 = vadd.f32 0.0, %v4509
        %v4511 = vpop.f32.mrb[0].mxu0
        %v4512 = vadd.f32 0.0, %v4511
        %v4513 = vpop.f32.mrb[0].mxu0
        %v4514 = vadd.f32 0.0, %v4513
        %4515 = vmatprep.mubr.bf16.mxu0 %v3666
        %4516 = vmatmul.mubr.bf16.gmra.mrb[0].mxu0 %v3665
        %v4517 = vpop.f32.mrb[0].mxu0
        %v4518 = vadd.f32 0.0, %v4517
        %v4519 = vpop.f32.mrb[0].mxu0
        %v4520 = vadd.f32 0.0, %v4519
        %v4521 = vpop.f32.mrb[0].mxu0
        %v4522 = vadd.f32 0.0, %v4521
        %v4523 = vpop.f32.mrb[0].mxu0
        %v4524 = vadd.f32 0.0, %v4523
        %4525 = vmatprep.mubr.bf16.mxu0 %v3668
        %4526 = vmatmul.mubr.bf16.gmra.mrb[0].mxu0 %v3667
        %v4527 = vpop.f32.mrb[0].mxu0
        %v4528 = vadd.f32 0.0, %v4527
        %v4529 = vpop.f32.mrb[0].mxu0
        %v4530 = vadd.f32 0.0, %v4529
        %v4531 = vpop.f32.mrb[0].mxu0
        %v4532 = vadd.f32 0.0, %v4531
        %v4533 = vpop.f32.mrb[0].mxu0
        %v4534 = vadd.f32 0.0, %v4533
        %4535 = vmatprep.mubr.bf16.mxu0 %v3670
        %4536 = vmatmul.mubr.bf16.gmra.mrb[0].mxu0 %v3669
        %v4537 = vpop.f32.mrb[0].mxu0
        %v4538 = vadd.f32 0.0, %v4537
        %v4539 = vpop.f32.mrb[0].mxu0
        %v4540 = vadd.f32 0.0, %v4539
        %v4541 = vpop.f32.mrb[0].mxu0
        %v4542 = vadd.f32 0.0, %v4541
        %v4543 = vpop.f32.mrb[0].mxu0
        %v4544 = vadd.f32 0.0, %v4543
        %4545 = vmatprep.mubr.bf16.mxu0 %v3672
        %4546 = vmatmul.mubr.bf16.gmra.mrb[0].mxu0 %v3671
        %v4547 = vpop.f32.mrb[0].mxu0
        %v4548 = vadd.f32 0.0, %v4547
        %v4549 = vpop.f32.mrb[0].mxu0
        %v4550 = vadd.f32 0.0, %v4549
        %v4551 = vpop.f32.mrb[0].mxu0
        %v4552 = vadd.f32 0.0, %v4551
        %v4553 = vpop.f32.mrb[0].mxu0
        %v4554 = vadd.f32 0.0, %v4553
        %4555 = vmatprep.mubr.bf16.mxu0 %v3674
        %4556 = vmatmul.mubr.bf16.gmra.mrb[0].mxu0 %v3673
        %v4557 = vpop.f32.mrb[0].mxu0
        %v4558 = vadd.f32 0.0, %v4557
        %v4559 = vpop.f32.mrb[0].mxu0
        %v4560 = vadd.f32 0.0, %v4559
        %v4561 = vpop.f32.mrb[0].mxu0
        %v4562 = vpop.f32.mrb[0].mxu0
        %4563 = vdwg.mxu0
        %4564 = vmatprep.subr.bf16.mxu0 %v4190
        %4565 = vmatpush1.bf16.msra.mxu0 %v4189
        %4566 = vmatprep.subr.bf16.mxu0 %v4198
        %4567 = vmatpush1.bf16.msra.mxu0 %v4197
        %4568 = vmatprep.subr.bf16.mxu0 %v4206
        %4569 = vmatpush1.bf16.msra.mxu0 %v4205
        %4570 = vmatprep.subr.bf16.mxu0 %v4214
        %4571 = vmatpush1.bf16.msra.mxu0 %v4213
        %4572 = vmatprep.subr.bf16.mxu0 %v4222
        %4573 = vmatpush1.bf16.msra.mxu0 %v4221
        %4574 = vmatprep.subr.bf16.mxu0 %v4230
        %4575 = vmatpush1.bf16.msra.mxu0 %v4229
        %4576 = vmatprep.subr.bf16.mxu0 %v4238
        %4577 = vmatpush1.bf16.msra.mxu0 %v4237
        %4578 = vmatprep.subr.bf16.mxu0 %v4246
        %4579 = vmatpush1.bf16.msra.mxu0 %v4245
        %4580 = vmatprep.subr.bf16.mxu0 %v4254
        %4581 = vmatpush1.bf16.msra.mxu0 %v4253
        %4582 = vmatprep.subr.bf16.mxu0 %v4262
        %4583 = vmatpush1.bf16.msra.mxu0 %v4261
        %4584 = vmatprep.subr.bf16.mxu0 %v4270
        %4585 = vmatpush1.bf16.msra.mxu0 %v4269
        %4586 = vmatprep.subr.bf16.mxu0 %v4278
        %4587 = vmatpush1.bf16.msra.mxu0 %v4277
        %4588 = vmatprep.subr.bf16.mxu0 %v4286
        %4589 = vmatpush1.bf16.msra.mxu0 %v4285
        %4590 = vmatprep.subr.bf16.mxu0 %v4294
        %4591 = vmatpush1.bf16.msra.mxu0 %v4293
        %4592 = vmatprep.subr.bf16.mxu0 %v4302
        %4593 = vmatpush1.bf16.msra.mxu0 %v4301
        %4594 = vmatprep.subr.bf16.mxu0 %v4310
        %4595 = vmatpush1.bf16.msra.mxu0 %v4309
        %4596 = vmatprep.mubr.bf16.mxu0 %v3658
        %4597 = vmatmul.mubr.bf16.gmra.mrb[0].mxu0 %v3657
        %v4598 = vpop.f32.mrb[0].mxu0
        %v4599 = vadd.f32 0.0, %v4598
        %v4600 = vpop.f32.mrb[0].mxu0
        %v4601 = vadd.f32 0.0, %v4600
        %v4602 = vpop.f32.mrb[0].mxu0
        %v4603 = vadd.f32 0.0, %v4602
        %v4604 = vpop.f32.mrb[0].mxu0
        %v4605 = vadd.f32 0.0, %v4604
        %4606 = vmatprep.mubr.bf16.mxu0 %v3660
        %4607 = vmatmul.mubr.bf16.gmra.mrb[0].mxu0 %v3659
        %v4608 = vpop.f32.mrb[0].mxu0
        %v4609 = vadd.f32 0.0, %v4608
        %v4610 = vpop.f32.mrb[0].mxu0
        %v4611 = vadd.f32 0.0, %v4610
        %v4612 = vpop.f32.mrb[0].mxu0
        %v4613 = vadd.f32 0.0, %v4612
        %v4614 = vpop.f32.mrb[0].mxu0
        %v4615 = vadd.f32 0.0, %v4614
        %4616 = vmatprep.mubr.bf16.mxu0 %v3662
        %4617 = vmatmul.mubr.bf16.gmra.mrb[0].mxu0 %v3661
        %v4618 = vpop.f32.mrb[0].mxu0
        %v4619 = vadd.f32 0.0, %v4618
        %v4620 = vpop.f32.mrb[0].mxu0
        %v4621 = vadd.f32 0.0, %v4620
        %v4622 = vpop.f32.mrb[0].mxu0
        %v4623 = vadd.f32 0.0, %v4622
        %v4624 = vpop.f32.mrb[0].mxu0
        %v4625 = vadd.f32 0.0, %v4624
        %4626 = vmatprep.mubr.bf16.mxu0 %v3664
        %4627 = vmatmul.mubr.bf16.gmra.mrb[0].mxu0 %v3663
        %v4628 = vpop.f32.mrb[0].mxu0
        %v4629 = vadd.f32 0.0, %v4628
        %v4630 = vpop.f32.mrb[0].mxu0
        %v4631 = vadd.f32 0.0, %v4630
        %v4632 = vpop.f32.mrb[0].mxu0
        %v4633 = vadd.f32 0.0, %v4632
        %v4634 = vpop.f32.mrb[0].mxu0
        %v4635 = vadd.f32 0.0, %v4634
        %4636 = vmatprep.mubr.bf16.mxu0 %v3666
        %4637 = vmatmul.mubr.bf16.gmra.mrb[0].mxu0 %v3665
        %v4638 = vpop.f32.mrb[0].mxu0
        %v4639 = vadd.f32 0.0, %v4638
        %v4640 = vpop.f32.mrb[0].mxu0
        %v4641 = vadd.f32 0.0, %v4640
        %v4642 = vpop.f32.mrb[0].mxu0
        %v4643 = vadd.f32 0.0, %v4642
        %v4644 = vpop.f32.mrb[0].mxu0
        %v4645 = vadd.f32 0.0, %v4644
        %4646 = vmatprep.mubr.bf16.mxu0 %v3668
        %4647 = vmatmul.mubr.bf16.gmra.mrb[0].mxu0 %v3667
        %v4648 = vpop.f32.mrb[0].mxu0
        %v4649 = vadd.f32 0.0, %v4648
        %v4650 = vpop.f32.mrb[0].mxu0
        %v4651 = vadd.f32 0.0, %v4650
        %v4652 = vpop.f32.mrb[0].mxu0
        %v4653 = vadd.f32 0.0, %v4652
        %v4654 = vpop.f32.mrb[0].mxu0
        %v4655 = vadd.f32 0.0, %v4654
        %4656 = vmatprep.mubr.bf16.mxu0 %v3670
        %4657 = vmatmul.mubr.bf16.gmra.mrb[0].mxu0 %v3669
        %v4658 = vpop.f32.mrb[0].mxu0
        %v4659 = vadd.f32 0.0, %v4658
        %v4660 = vpop.f32.mrb[0].mxu0
        %v4661 = vadd.f32 0.0, %v4660
        %v4662 = vpop.f32.mrb[0].mxu0
        %v4663 = vadd.f32 0.0, %v4662
        %v4664 = vpop.f32.mrb[0].mxu0
        %v4665 = vadd.f32 0.0, %v4664
        %4666 = vmatprep.mubr.bf16.mxu0 %v3672
        %4667 = vmatmul.mubr.bf16.gmra.mrb[0].mxu0 %v3671
        %v4668 = vpop.f32.mrb[0].mxu0
        %v4669 = vadd.f32 0.0, %v4668
        %v4670 = vpop.f32.mrb[0].mxu0
        %v4671 = vadd.f32 0.0, %v4670
        %v4672 = vpop.f32.mrb[0].mxu0
        %v4673 = vadd.f32 0.0, %v4672
        %v4674 = vpop.f32.mrb[0].mxu0
        %v4675 = vadd.f32 0.0, %v4674
        %4676 = vmatprep.mubr.bf16.mxu0 %v3674
        %4677 = vmatmul.mubr.bf16.gmra.mrb[0].mxu0 %v3673
        %v4678 = vpop.f32.mrb[0].mxu0
        %v4679 = vadd.f32 0.0, %v4678
        %v4680 = vpop.f32.mrb[0].mxu0
        %v4681 = vadd.f32 0.0, %v4680
        %v4682 = vpop.f32.mrb[0].mxu0
        %v4683 = vpop.f32.mrb[0].mxu0
        %4684 = vdwg.mxu0
        %4685 = vmatprep.subr.bf16.mxu0 %v4192
        %4686 = vmatpush1.bf16.msra.mxu0 %v4191
        %4687 = vmatprep.subr.bf16.mxu0 %v4200
        %4688 = vmatpush1.bf16.msra.mxu0 %v4199
        %4689 = vmatprep.subr.bf16.mxu0 %v4208
        %4690 = vmatpush1.bf16.msra.mxu0 %v4207
        %4691 = vmatprep.subr.bf16.mxu0 %v4216
        %4692 = vmatpush1.bf16.msra.mxu0 %v4215
        %4693 = vmatprep.subr.bf16.mxu0 %v4224
        %4694 = vmatpush1.bf16.msra.mxu0 %v4223
        %4695 = vmatprep.subr.bf16.mxu0 %v4232
        %4696 = vmatpush1.bf16.msra.mxu0 %v4231
        %4697 = vmatprep.subr.bf16.mxu0 %v4240
        %4698 = vmatpush1.bf16.msra.mxu0 %v4239
        %4699 = vmatprep.subr.bf16.mxu0 %v4248
        %4700 = vmatpush1.bf16.msra.mxu0 %v4247
        %4701 = vmatprep.subr.bf16.mxu0 %v4256
        %4702 = vmatpush1.bf16.msra.mxu0 %v4255
        %4703 = vmatprep.subr.bf16.mxu0 %v4264
        %4704 = vmatpush1.bf16.msra.mxu0 %v4263
        %4705 = vmatprep.subr.bf16.mxu0 %v4272
        %4706 = vmatpush1.bf16.msra.mxu0 %v4271
        %4707 = vmatprep.subr.bf16.mxu0 %v4280
        %4708 = vmatpush1.bf16.msra.mxu0 %v4279
        %4709 = vmatprep.subr.bf16.mxu0 %v4288
        %4710 = vmatpush1.bf16.msra.mxu0 %v4287
        %4711 = vmatprep.subr.bf16.mxu0 %v4296
        %4712 = vmatpush1.bf16.msra.mxu0 %v4295
        %4713 = vmatprep.subr.bf16.mxu0 %v4304
        %4714 = vmatpush1.bf16.msra.mxu0 %v4303
        %4715 = vmatprep.subr.bf16.mxu0 %v4312
        %4716 = vmatpush1.bf16.msra.mxu0 %v4311
        %4717 = vmatprep.mubr.bf16.mxu0 %v3658
        %4718 = vmatmul.mubr.bf16.gmra.mrb[0].mxu0 %v3657
        %v4719 = vpop.f32.mrb[0].mxu0
        %v4720 = vadd.f32 0.0, %v4719
        %v4721 = vpop.f32.mrb[0].mxu0
        %v4722 = vadd.f32 0.0, %v4721
        %v4723 = vpop.f32.mrb[0].mxu0
        %v4724 = vadd.f32 0.0, %v4723
        %v4725 = vpop.f32.mrb[0].mxu0
        %v4726 = vadd.f32 0.0, %v4725
        %4727 = vmatprep.mubr.bf16.mxu0 %v3660
        %4728 = vmatmul.mubr.bf16.gmra.mrb[0].mxu0 %v3659
        %v4729 = vpop.f32.mrb[0].mxu0
        %v4730 = vadd.f32 0.0, %v4729
        %v4731 = vpop.f32.mrb[0].mxu0
        %v4732 = vadd.f32 0.0, %v4731
        %v4733 = vpop.f32.mrb[0].mxu0
        %v4734 = vadd.f32 0.0, %v4733
        %v4735 = vpop.f32.mrb[0].mxu0
        %v4736 = vadd.f32 0.0, %v4735
        %4737 = vmatprep.mubr.bf16.mxu0 %v3662
        %4738 = vmatmul.mubr.bf16.gmra.mrb[0].mxu0 %v3661
        %v4739 = vpop.f32.mrb[0].mxu0
        %v4740 = vadd.f32 0.0, %v4739
        %v4741 = vpop.f32.mrb[0].mxu0
        %v4742 = vadd.f32 0.0, %v4741
        %v4743 = vpop.f32.mrb[0].mxu0
        %v4744 = vadd.f32 0.0, %v4743
        %v4745 = vpop.f32.mrb[0].mxu0
        %v4746 = vadd.f32 0.0, %v4745
        %4747 = vmatprep.mubr.bf16.mxu0 %v3664
        %4748 = vmatmul.mubr.bf16.gmra.mrb[0].mxu0 %v3663
        %v4749 = vpop.f32.mrb[0].mxu0
        %v4750 = vadd.f32 0.0, %v4749
        %v4751 = vpop.f32.mrb[0].mxu0
        %v4752 = vadd.f32 0.0, %v4751
        %v4753 = vpop.f32.mrb[0].mxu0
        %v4754 = vadd.f32 0.0, %v4753
        %v4755 = vpop.f32.mrb[0].mxu0
        %v4756 = vadd.f32 0.0, %v4755
        %4757 = vmatprep.mubr.bf16.mxu0 %v3666
        %4758 = vmatmul.mubr.bf16.gmra.mrb[0].mxu0 %v3665
        %v4759 = vpop.f32.mrb[0].mxu0
        %v4760 = vadd.f32 0.0, %v4759
        %v4761 = vpop.f32.mrb[0].mxu0
        %v4762 = vadd.f32 0.0, %v4761
        %v4763 = vpop.f32.mrb[0].mxu0
        %v4764 = vadd.f32 0.0, %v4763
        %v4765 = vpop.f32.mrb[0].mxu0
        %v4766 = vadd.f32 0.0, %v4765
        %4767 = vmatprep.mubr.bf16.mxu0 %v3668
        %4768 = vmatmul.mubr.bf16.gmra.mrb[0].mxu0 %v3667
        %v4769 = vpop.f32.mrb[0].mxu0
        %v4770 = vadd.f32 0.0, %v4769
        %v4771 = vpop.f32.mrb[0].mxu0
        %v4772 = vadd.f32 0.0, %v4771
        %v4773 = vpop.f32.mrb[0].mxu0
        %v4774 = vadd.f32 0.0, %v4773
        %v4775 = vpop.f32.mrb[0].mxu0
        %v4776 = vadd.f32 0.0, %v4775
        %4777 = vmatprep.mubr.bf16.mxu0 %v3670
        %4778 = vmatmul.mubr.bf16.gmra.mrb[0].mxu0 %v3669
        %v4779 = vpop.f32.mrb[0].mxu0
        %v4780 = vadd.f32 0.0, %v4779
        %v4781 = vpop.f32.mrb[0].mxu0
        %v4782 = vadd.f32 0.0, %v4781
        %v4783 = vpop.f32.mrb[0].mxu0
        %v4784 = vadd.f32 0.0, %v4783
        %v4785 = vpop.f32.mrb[0].mxu0
        %v4786 = vadd.f32 0.0, %v4785
        %4787 = vmatprep.mubr.bf16.mxu0 %v3672
        %4788 = vmatmul.mubr.bf16.gmra.mrb[0].mxu0 %v3671
        %v4789 = vpop.f32.mrb[0].mxu0
        %v4790 = vadd.f32 0.0, %v4789
        %v4791 = vpop.f32.mrb[0].mxu0
        %v4792 = vadd.f32 0.0, %v4791
        %v4793 = vpop.f32.mrb[0].mxu0
        %v4794 = vadd.f32 0.0, %v4793
        %v4795 = vpop.f32.mrb[0].mxu0
        %v4796 = vadd.f32 0.0, %v4795
        %4797 = vmatprep.mubr.bf16.mxu0 %v3674
        %4798 = vmatmul.mubr.bf16.gmra.mrb[0].mxu0 %v3673
        %v4799 = vpop.f32.mrb[0].mxu0
        %v4800 = vadd.f32 0.0, %v4799
        %v4801 = vpop.f32.mrb[0].mxu0
        %v4802 = vadd.f32 0.0, %v4801
        %v4803 = vpop.f32.mrb[0].mxu0
        %v4804 = vpop.f32.mrb[0].mxu0
        %4805 = vdwg.mxu0
        %4806 = vmatprep.subr.bf16.mxu0 %v4194
        %4807 = vmatpush1.bf16.msra.mxu0 %v4193
        %4808 = vmatprep.subr.bf16.mxu0 %v4202
        %4809 = vmatpush1.bf16.msra.mxu0 %v4201
        %4810 = vmatprep.subr.bf16.mxu0 %v4210
        %4811 = vmatpush1.bf16.msra.mxu0 %v4209
        %4812 = vmatprep.subr.bf16.mxu0 %v4218
        %4813 = vmatpush1.bf16.msra.mxu0 %v4217
        %4814 = vmatprep.subr.bf16.mxu0 %v4226
        %4815 = vmatpush1.bf16.msra.mxu0 %v4225
        %4816 = vmatprep.subr.bf16.mxu0 %v4234
        %4817 = vmatpush1.bf16.msra.mxu0 %v4233
        %4818 = vmatprep.subr.bf16.mxu0 %v4242
        %4819 = vmatpush1.bf16.msra.mxu0 %v4241
        %4820 = vmatprep.subr.bf16.mxu0 %v4250
        %4821 = vmatpush1.bf16.msra.mxu0 %v4249
        %4822 = vmatprep.subr.bf16.mxu0 %v4258
        %4823 = vmatpush1.bf16.msra.mxu0 %v4257
        %4824 = vmatprep.subr.bf16.mxu0 %v4266
        %4825 = vmatpush1.bf16.msra.mxu0 %v4265
        %4826 = vmatprep.subr.bf16.mxu0 %v4274
        %4827 = vmatpush1.bf16.msra.mxu0 %v4273
        %4828 = vmatprep.subr.bf16.mxu0 %v4282
        %4829 = vmatpush1.bf16.msra.mxu0 %v4281
        %4830 = vmatprep.subr.bf16.mxu0 %v4290
        %4831 = vmatpush1.bf16.msra.mxu0 %v4289
        %4832 = vmatprep.subr.bf16.mxu0 %v4298
        %4833 = vmatpush1.bf16.msra.mxu0 %v4297
        %4834 = vmatprep.subr.bf16.mxu0 %v4306
        %4835 = vmatpush1.bf16.msra.mxu0 %v4305
        %4836 = vmatprep.subr.bf16.mxu0 %v4314
        %4837 = vmatpush1.bf16.msra.mxu0 %v4313
        %4838 = vmatprep.mubr.bf16.mxu0 %v3658
        %4839 = vmatmul.mubr.bf16.gmra.mrb[0].mxu0 %v3657
        %v4840 = vpop.f32.mrb[0].mxu0
        %v4841 = vadd.f32 0.0, %v4840
        %v4842 = vpop.f32.mrb[0].mxu0
        %v4843 = vadd.f32 0.0, %v4842
        %v4844 = vpop.f32.mrb[0].mxu0
        %v4845 = vadd.f32 0.0, %v4844
        %v4846 = vpop.f32.mrb[0].mxu0
        %v4847 = vadd.f32 0.0, %v4846
        %4848 = vmatprep.mubr.bf16.mxu0 %v3660
        %4849 = vmatmul.mubr.bf16.gmra.mrb[0].mxu0 %v3659
        %v4850 = vpop.f32.mrb[0].mxu0
        %v4851 = vadd.f32 0.0, %v4850
        %v4852 = vpop.f32.mrb[0].mxu0
        %v4853 = vadd.f32 0.0, %v4852
        %v4854 = vpop.f32.mrb[0].mxu0
        %v4855 = vadd.f32 0.0, %v4854
        %v4856 = vpop.f32.mrb[0].mxu0
        %v4857 = vadd.f32 0.0, %v4856
        %4858 = vmatprep.mubr.bf16.mxu0 %v3662
        %4859 = vmatmul.mubr.bf16.gmra.mrb[0].mxu0 %v3661
        %v4860 = vpop.f32.mrb[0].mxu0
        %v4861 = vadd.f32 0.0, %v4860
        %v4862 = vpop.f32.mrb[0].mxu0
        %v4863 = vadd.f32 0.0, %v4862
        %v4864 = vpop.f32.mrb[0].mxu0
        %v4865 = vadd.f32 0.0, %v4864
        %v4866 = vpop.f32.mrb[0].mxu0
        %v4867 = vadd.f32 0.0, %v4866
        %4868 = vmatprep.mubr.bf16.mxu0 %v3664
        %4869 = vmatmul.mubr.bf16.gmra.mrb[0].mxu0 %v3663
        %v4870 = vpop.f32.mrb[0].mxu0
        %v4871 = vadd.f32 0.0, %v4870
        %v4872 = vpop.f32.mrb[0].mxu0
        %v4873 = vadd.f32 0.0, %v4872
        %v4874 = vpop.f32.mrb[0].mxu0
        %v4875 = vadd.f32 0.0, %v4874
        %v4876 = vpop.f32.mrb[0].mxu0
        %v4877 = vadd.f32 0.0, %v4876
        %4878 = vmatprep.mubr.bf16.mxu0 %v3666
        %4879 = vmatmul.mubr.bf16.gmra.mrb[0].mxu0 %v3665
        %v4880 = vpop.f32.mrb[0].mxu0
        %v4881 = vadd.f32 0.0, %v4880
        %v4882 = vpop.f32.mrb[0].mxu0
        %v4883 = vadd.f32 0.0, %v4882
        %v4884 = vpop.f32.mrb[0].mxu0
        %v4885 = vadd.f32 0.0, %v4884
        %v4886 = vpop.f32.mrb[0].mxu0
        %v4887 = vadd.f32 0.0, %v4886
        %4888 = vmatprep.mubr.bf16.mxu0 %v3668
        %4889 = vmatmul.mubr.bf16.gmra.mrb[0].mxu0 %v3667
        %v4890 = vpop.f32.mrb[0].mxu0
        %v4891 = vadd.f32 0.0, %v4890
        %v4892 = vpop.f32.mrb[0].mxu0
        %v4893 = vadd.f32 0.0, %v4892
        %v4894 = vpop.f32.mrb[0].mxu0
        %v4895 = vadd.f32 0.0, %v4894
        %v4896 = vpop.f32.mrb[0].mxu0
        %v4897 = vadd.f32 0.0, %v4896
        %4898 = vmatprep.mubr.bf16.mxu0 %v3670
        %4899 = vmatmul.mubr.bf16.gmra.mrb[0].mxu0 %v3669
        %v4900 = vpop.f32.mrb[0].mxu0
        %v4901 = vadd.f32 0.0, %v4900
        %v4902 = vpop.f32.mrb[0].mxu0
        %v4903 = vadd.f32 0.0, %v4902
        %v4904 = vpop.f32.mrb[0].mxu0
        %v4905 = vadd.f32 0.0, %v4904
        %v4906 = vpop.f32.mrb[0].mxu0
        %v4907 = vadd.f32 0.0, %v4906
        %4908 = vmatprep.mubr.bf16.mxu0 %v3672
        %4909 = vmatmul.mubr.bf16.gmra.mrb[0].mxu0 %v3671
        %v4910 = vpop.f32.mrb[0].mxu0
        %v4911 = vadd.f32 0.0, %v4910
        %v4912 = vpop.f32.mrb[0].mxu0
        %v4913 = vadd.f32 0.0, %v4912
        %v4914 = vpop.f32.mrb[0].mxu0
        %v4915 = vadd.f32 0.0, %v4914
        %v4916 = vpop.f32.mrb[0].mxu0
        %v4917 = vadd.f32 0.0, %v4916
        %4918 = vmatprep.mubr.bf16.mxu0 %v3674
        %4919 = vmatmul.mubr.bf16.gmra.mrb[0].mxu0 %v3673
        %v4920 = vpop.f32.mrb[0].mxu0
        %v4921 = vadd.f32 0.0, %v4920
        %v4922 = vpop.f32.mrb[0].mxu0
        %v4923 = vadd.f32 0.0, %v4922
        %v4924 = vpop.f32.mrb[0].mxu0
        %v4925 = vpop.f32.mrb[0].mxu0
        %4926 = vdwg.mxu0
        %4927 = vst [vmem:[%s315] sm:$0xff] %v4478
        %4928 = vst [vmem:[%s315 + $0x8] sm:$0xff] %v4480
        %4929 = vst [vmem:[%s315 + $0x10] sm:$0xff] %v4599
        %4930 = vst [vmem:[%s315 + $0x18] sm:$0xff] %v4601
        %4931 = vst [vmem:[%s315 + $0x20] sm:$0xff] %v4720
        %4932 = vst [vmem:[%s315 + $0x28] sm:$0xff] %v4722
        %4933 = vst [vmem:[%s315 + $0x30] sm:$0xff] %v4841
        %4934 = vst [vmem:[%s315 + $0x38] sm:$0xff] %v4843
        %4935 = vst [vmem:[%s315 + $0x40] sm:$0xff] %v4482
        %4936 = vst [vmem:[%s315 + $0x48] sm:$0xff] %v4484
        %4937 = vst [vmem:[%s315 + $0x50] sm:$0xff] %v4603
        %4938 = vst [vmem:[%s315 + $0x58] sm:$0xff] %v4605
        %4939 = vst [vmem:[%s315 + $0x60] sm:$0xff] %v4724
        %4940 = vst [vmem:[%s315 + $0x68] sm:$0xff] %v4726
        %4941 = vst [vmem:[%s315 + $0x70] sm:$0xff] %v4845
        %4942 = vst [vmem:[%s315 + $0x78] sm:$0xff] %v4847
        %4943 = vst [vmem:[%s315 + $0x80] sm:$0xff] %v4488
        %4944 = vst [vmem:[%s315 + $0x88] sm:$0xff] %v4490
        %4945 = vst [vmem:[%s315 + $0x90] sm:$0xff] %v4609
        %4946 = vst [vmem:[%s315 + $0x98] sm:$0xff] %v4611
        %4947 = vst [vmem:[%s315 + $0xa0] sm:$0xff] %v4730
        %4948 = vst [vmem:[%s315 + $0xa8] sm:$0xff] %v4732
        %4949 = vst [vmem:[%s315 + $0xb0] sm:$0xff] %v4851
        %4950 = vst [vmem:[%s315 + $0xb8] sm:$0xff] %v4853
        %4951 = vst [vmem:[%s315 + $0xc0] sm:$0xff] %v4492
        %4952 = vst [vmem:[%s315 + $0xc8] sm:$0xff] %v4494
        %4953 = vst [vmem:[%s315 + $0xd0] sm:$0xff] %v4613
        %4954 = vst [vmem:[%s315 + $0xd8] sm:$0xff] %v4615
        %4955 = vst [vmem:[%s315 + $0xe0] sm:$0xff] %v4734
        %4956 = vst [vmem:[%s315 + $0xe8] sm:$0xff] %v4736
        %4957 = vst [vmem:[%s315 + $0xf0] sm:$0xff] %v4855
        %4958 = vst [vmem:[%s315 + $0xf8] sm:$0xff] %v4857
        %4959 = vst [vmem:[%s315 + $0x100] sm:$0xff] %v4498
        %4960 = vst [vmem:[%s315 + $0x108] sm:$0xff] %v4500
        %4961 = vst [vmem:[%s315 + $0x110] sm:$0xff] %v4619
        %4962 = vst [vmem:[%s315 + $0x118] sm:$0xff] %v4621
        %4963 = vst [vmem:[%s315 + $0x120] sm:$0xff] %v4740
        %4964 = vst [vmem:[%s315 + $0x128] sm:$0xff] %v4742
        %4965 = vst [vmem:[%s315 + $0x130] sm:$0xff] %v4861
        %4966 = vst [vmem:[%s315 + $0x138] sm:$0xff] %v4863
        %4967 = vst [vmem:[%s315 + $0x140] sm:$0xff] %v4502
        %4968 = vst [vmem:[%s315 + $0x148] sm:$0xff] %v4504
        %4969 = vst [vmem:[%s315 + $0x150] sm:$0xff] %v4623
        %4970 = vst [vmem:[%s315 + $0x158] sm:$0xff] %v4625
        %4971 = vst [vmem:[%s315 + $0x160] sm:$0xff] %v4744
        %4972 = vst [vmem:[%s315 + $0x168] sm:$0xff] %v4746
        %4973 = vst [vmem:[%s315 + $0x170] sm:$0xff] %v4865
        %4974 = vst [vmem:[%s315 + $0x178] sm:$0xff] %v4867
        %4975 = vst [vmem:[%s315 + $0x180] sm:$0xff] %v4508
        %4976 = vst [vmem:[%s315 + $0x188] sm:$0xff] %v4510
        %4977 = vst [vmem:[%s315 + $0x190] sm:$0xff] %v4629
        %4978 = vst [vmem:[%s315 + $0x198] sm:$0xff] %v4631
        %4979 = vst [vmem:[%s315 + $0x1a0] sm:$0xff] %v4750
        %4980 = vst [vmem:[%s315 + $0x1a8] sm:$0xff] %v4752
        %4981 = vst [vmem:[%s315 + $0x1b0] sm:$0xff] %v4871
        %4982 = vst [vmem:[%s315 + $0x1b8] sm:$0xff] %v4873
        %4983 = vst [vmem:[%s315 + $0x1c0] sm:$0xff] %v4512
        %4984 = vst [vmem:[%s315 + $0x1c8] sm:$0xff] %v4514
        %4985 = vst [vmem:[%s315 + $0x1d0] sm:$0xff] %v4633
        %4986 = vst [vmem:[%s315 + $0x1d8] sm:$0xff] %v4635
        %4987 = vst [vmem:[%s315 + $0x1e0] sm:$0xff] %v4754
        %4988 = vst [vmem:[%s315 + $0x1e8] sm:$0xff] %v4756
        %4989 = vst [vmem:[%s315 + $0x1f0] sm:$0xff] %v4875
        %4990 = vst [vmem:[%s315 + $0x1f8] sm:$0xff] %v4877
        %4991 = vst [vmem:[%s315 + $0x200] sm:$0xff] %v4518
        %4992 = vst [vmem:[%s315 + $0x208] sm:$0xff] %v4520
        %4993 = vst [vmem:[%s315 + $0x210] sm:$0xff] %v4639
        %4994 = vst [vmem:[%s315 + $0x218] sm:$0xff] %v4641
        %4995 = vst [vmem:[%s315 + $0x220] sm:$0xff] %v4760
        %4996 = vst [vmem:[%s315 + $0x228] sm:$0xff] %v4762
        %4997 = vst [vmem:[%s315 + $0x230] sm:$0xff] %v4881
        %4998 = vst [vmem:[%s315 + $0x238] sm:$0xff] %v4883
        %4999 = vst [vmem:[%s315 + $0x240] sm:$0xff] %v4522
        %5000 = vst [vmem:[%s315 + $0x248] sm:$0xff] %v4524
        %5001 = vst [vmem:[%s315 + $0x250] sm:$0xff] %v4643
        %5002 = vst [vmem:[%s315 + $0x258] sm:$0xff] %v4645
        %5003 = vst [vmem:[%s315 + $0x260] sm:$0xff] %v4764
        %5004 = vst [vmem:[%s315 + $0x268] sm:$0xff] %v4766
        %5005 = vst [vmem:[%s315 + $0x270] sm:$0xff] %v4885
        %5006 = vst [vmem:[%s315 + $0x278] sm:$0xff] %v4887
        %5007 = vst [vmem:[%s315 + $0x280] sm:$0xff] %v4528
        %5008 = vst [vmem:[%s315 + $0x288] sm:$0xff] %v4530
        %5009 = vst [vmem:[%s315 + $0x290] sm:$0xff] %v4649
        %5010 = vst [vmem:[%s315 + $0x298] sm:$0xff] %v4651
        %5011 = vst [vmem:[%s315 + $0x2a0] sm:$0xff] %v4770
        %5012 = vst [vmem:[%s315 + $0x2a8] sm:$0xff] %v4772
        %5013 = vst [vmem:[%s315 + $0x2b0] sm:$0xff] %v4891
        %5014 = vst [vmem:[%s315 + $0x2b8] sm:$0xff] %v4893
        %5015 = vst [vmem:[%s315 + $0x2c0] sm:$0xff] %v4532
        %5016 = vst [vmem:[%s315 + $0x2c8] sm:$0xff] %v4534
        %5017 = vst [vmem:[%s315 + $0x2d0] sm:$0xff] %v4653
        %5018 = vst [vmem:[%s315 + $0x2d8] sm:$0xff] %v4655
        %5019 = vst [vmem:[%s315 + $0x2e0] sm:$0xff] %v4774
        %5020 = vst [vmem:[%s315 + $0x2e8] sm:$0xff] %v4776
        %5021 = vst [vmem:[%s315 + $0x2f0] sm:$0xff] %v4895
        %5022 = vst [vmem:[%s315 + $0x2f8] sm:$0xff] %v4897
        %5023 = vst [vmem:[%s315 + $0x300] sm:$0xff] %v4538
        %5024 = vst [vmem:[%s315 + $0x308] sm:$0xff] %v4540
        %5025 = vst [vmem:[%s315 + $0x310] sm:$0xff] %v4659
        %5026 = vst [vmem:[%s315 + $0x318] sm:$0xff] %v4661
        %5027 = vst [vmem:[%s315 + $0x320] sm:$0xff] %v4780
        %5028 = vst [vmem:[%s315 + $0x328] sm:$0xff] %v4782
        %5029 = vst [vmem:[%s315 + $0x330] sm:$0xff] %v4901
        %5030 = vst [vmem:[%s315 + $0x338] sm:$0xff] %v4903
        %5031 = vst [vmem:[%s315 + $0x340] sm:$0xff] %v4542
        %5032 = vst [vmem:[%s315 + $0x348] sm:$0xff] %v4544
        %5033 = vst [vmem:[%s315 + $0x350] sm:$0xff] %v4663
        %5034 = vst [vmem:[%s315 + $0x358] sm:$0xff] %v4665
        %5035 = vst [vmem:[%s315 + $0x360] sm:$0xff] %v4784
        %5036 = vst [vmem:[%s315 + $0x368] sm:$0xff] %v4786
        %5037 = vst [vmem:[%s315 + $0x370] sm:$0xff] %v4905
        %5038 = vst [vmem:[%s315 + $0x378] sm:$0xff] %v4907
        %5039 = vst [vmem:[%s315 + $0x380] sm:$0xff] %v4548
        %5040 = vst [vmem:[%s315 + $0x388] sm:$0xff] %v4550
        %5041 = vst [vmem:[%s315 + $0x390] sm:$0xff] %v4669
        %5042 = vst [vmem:[%s315 + $0x398] sm:$0xff] %v4671
        %5043 = vst [vmem:[%s315 + $0x3a0] sm:$0xff] %v4790
        %5044 = vst [vmem:[%s315 + $0x3a8] sm:$0xff] %v4792
        %5045 = vst [vmem:[%s315 + $0x3b0] sm:$0xff] %v4911
        %5046 = vst [vmem:[%s315 + $0x3b8] sm:$0xff] %v4913
        %5047 = vst [vmem:[%s315 + $0x3c0] sm:$0xff] %v4552
        %5048 = vst [vmem:[%s315 + $0x3c8] sm:$0xff] %v4554
        %5049 = vst [vmem:[%s315 + $0x3d0] sm:$0xff] %v4673
        %5050 = vst [vmem:[%s315 + $0x3d8] sm:$0xff] %v4675
        %5051 = vst [vmem:[%s315 + $0x3e0] sm:$0xff] %v4794
        %5052 = vst [vmem:[%s315 + $0x3e8] sm:$0xff] %v4796
        %5053 = vst [vmem:[%s315 + $0x3f0] sm:$0xff] %v4915
        %5054 = vst [vmem:[%s315 + $0x3f8] sm:$0xff] %v4917
        %5055 = vst [vmem:[%s315 + $0x400] sm:$0x1f] %v4558
        %5056 = vst [vmem:[%s315 + $0x408] sm:$0x1f] %v4560
        %5057 = vst [vmem:[%s315 + $0x410] sm:$0x1f] %v4679
        %5058 = vst [vmem:[%s315 + $0x418] sm:$0x1f] %v4681
        %5059 = vst [vmem:[%s315 + $0x420] sm:$0x1f] %v4800
        %5060 = vst [vmem:[%s315 + $0x428] sm:$0x1f] %v4802
        %5061 = vst [vmem:[%s315 + $0x430] sm:$0x1f] %v4921
        %5062 = vst [vmem:[%s315 + $0x438] sm:$0x1f] %v4923
        %p5063 = scmp.lt.s32.totalorder %s22, 1
        %s5064 = scalar_select %p5063, %s22, 1
        %s5065 = smul.addr %s5064, 136
        %s5066 = smul.addr %s5065, 8
        %s5067 = scalar_lea.vmem %s6, %s5066
        // Predicated region
        $region61: #{tpu_custom_call.1} parent=43 // pred_check
          %p5068 = pneg %p171
        $region62: #{tpu_custom_call.1} parent=43 // pred_check_branch
          %5070 = sbr.rel (%p5068) target = $region64
        $region63: #{tpu_custom_call.1} parent=43 // pred_region
          _
        $region64: #{tpu_custom_call.1} parent=43 // pred_fallthru
          _
      $region44: #{tpu_custom_call.1} parent=5 // pred_fallthru
        _
      %p5071 = scmp.le.s32.totalorder 2, %s17
      // Predicated region
      $region65: #{tpu_custom_call.1} parent=5 // pred_check
        %p5072 = pneg %p5071
      $region66: #{tpu_custom_call.1} parent=5 // pred_check_branch
        %5074 = sbr.rel (%p5072) target = $region68
      $region67: #{tpu_custom_call.1} parent=5 // pred_region
        %s5075 = ssub.s32 %s17, 2
        // Predicated region
        $region69: #{tpu_custom_call.1} parent=67 // pred_check
          %p5076 = pneg %p177
        $region70: #{tpu_custom_call.1} parent=67 // pred_check_branch
          %5078 = sbr.rel (%p5076) target = $region72
        $region71: #{tpu_custom_call.1} parent=67 // pred_region
          %p5079 = scmp.lt.s32.totalorder %s23, 1
          %s5080 = scalar_select %p5079, %s23, 1
          %s5081 = smul.addr %s5080, 136
          %s5082 = smul.addr %s5081, 8
          %s5083 = scalar_lea.vmem %s6, %s5082
        $region72: #{tpu_custom_call.1} parent=67 // pred_fallthru
          _
      $region68: #{tpu_custom_call.1} parent=5 // pred_fallthru
        _
    $region6: #{tpu_custom_call.1} parent=1 // loop_footer
      %s21 = sadd.s32 1, %s17
    $region7: #{tpu_custom_call.1} parent=1 // loop_footer_branch
      %16 = sbr.rel target = $region3
    $region8: #{tpu_custom_call.1} parent=1 // loop_exit
      _
    %5084 = vsyncpa [#allocation3], 1
    %s5085 = scalar_lea.sflag [#allocation3], 1
    %5086 = vsyncpa %s5085, 1
    %5087 = vsyncpa [#allocation5], 1
    %5088 = vsyncpa [#allocation8], 1

</llo_original>
